<compile_context>
chip_gen: v7x
topology: tpu7x:2x2x1
jax: 0.10.0
libtpu: 0.0.40
codegen_flags: <defaults>
</compile_context>

<pallas_src>
import functools

import jax
import jax.numpy as jnp
from jax.experimental import pallas as pl
from jax.experimental.pallas import tpu as pltpu

NCH = 10                      # conv out_channels
KS = (3, 6, 9)                # kernel sizes of conv1/conv2/conv3
PADS = (1, 3, 4)              # paddings of conv1/conv2/conv3
KMAX = 9                      # taps packed / zero-padded to this
XPAD = KMAX - 1               # zero padding added to the input on each side
OFFS = tuple(XPAD - p for p in PADS)   # tap-0 offset into the padded input
BN_EPS = 1e-5
FC_HID = 64


def _sliding_window_max(y, window):
    """out[:, i] = max(y[:, i:i+window]) for i in [0, n - window] (doubling tree)."""
    n = y.shape[-1]
    out_len = n - window + 1
    pows = {1: y}
    w = 1
    while 2 * w <= window:
        prev = pows[w]
        m = prev.shape[-1]
        pows[2 * w] = jnp.maximum(prev[:, :m - w], prev[:, w:])
        w *= 2
    out, off, rem = None, 0, window
    while rem > 0:
        p = 1
        while 2 * p <= rem:
            p *= 2
        piece = pows[p][:, off:off + out_len]
        out = piece if out is None else jnp.maximum(out, piece)
        off += p
        rem -= p
    return out


def t6cnn_fused_kernel(x_ref, w_ref, cb_ref, w1_ref, b1_ref, w2_ref, b2_ref,
                       o_ref, xrep_s, pooled_s, flat_s, *, pool, L):
    """Fused forward: 3x(Conv1d -> BN(eval) -> ReLU -> MaxPool) -> Flatten -> MLP.

    x_ref   : (B, L)                  input
    w_ref   : (3*KMAX, NCH*B, 1)      conv taps * BN scale, channel rows repeated B times
    cb_ref  : (3, NCH*B, 1)           folded BN shift (includes conv bias)
    w1_ref  : (3*NCH*P, FC_HID) bf16  fc1 weight, rows permuted to (c, j, p) order
    b1_ref  : (1, FC_HID)
    w2_ref  : (FC_HID, 2)
    b2_ref  : (1, 2)
    o_ref   : (B, 2)
    xrep_s  : VMEM (NCH*B, L+2*XPAD)  zero-padded input replicated per channel block
    pooled_s: VMEM (NCH*B, 3*P)       pooled features, lanes ordered (j, p)
    flat_s  : VMEM (B, 3*NCH*P)       lane-dense MLP input, lanes ordered (c, j, p)
    """
    B = o_ref.shape[0]
    R = NCH * B
    P = L // pool
    Lc = P * pool                      # MaxPool1d floor-truncates the tail

    # -- Stage 0: zero-padded input, replicated once per channel block so every
    #    later op is a plain 2-D (R, lanes) vector op.  Only edges are zeroed.
    xrep_s[:, :XPAD] = jnp.zeros((R, XPAD), jnp.float32)
    xrep_s[:, XPAD + L:] = jnp.zeros((R, XPAD), jnp.float32)
    xv4 = x_ref[...]
    for c in range(NCH):
        xrep_s[c * B:(c + 1) * B, XPAD:XPAD + L] = xv4
    xv = xrep_s[...]                   # (R, L + 2*XPAD), stays resident in vregs

    # -- Stage 1: conv branches (BN scale pre-folded into taps) -> +shift ->
    #    ReLU -> sliding-window max -> one 1-lane pick per pooling window.
    for j in range(3):
        off = OFFS[j]
        acc = w_ref[j * KMAX] * xv[:, off:off + Lc]             # tap 0 (no zeros init)
        for t in range(1, KS[j]):                               # real taps only
            acc = acc + w_ref[j * KMAX + t] * xv[:, off + t:off + t + Lc]
        y = jnp.maximum(acc + cb_ref[j], 0.0)                   # BN shift + ReLU
        m = _sliding_window_max(y, pool)                        # (R, Lc - pool + 1)
        for p in range(P):
            pooled_s[:, j * P + p:j * P + p + 1] = m[:, p * pool:p * pool + 1]

    # -- Stage 2: flatten channel blocks onto lanes -> ONE fc1 MXU matmul
    #    (bf16 inputs, f32 accumulation) -> ReLU -> fc2.  Dropout = identity.
    for c in range(NCH):
        flat_s[:, c * 3 * P:(c + 1) * 3 * P] = pooled_s[c * B:(c + 1) * B, :]
    feat = flat_s[...].astype(jnp.bfloat16)
    h = jnp.dot(feat, w1_ref[...], preferred_element_type=jnp.float32)
    h = jnp.maximum(h + b1_ref[...], 0.0)
    o_ref[...] = jnp.dot(h, w2_ref[...],
                         preferred_element_type=jnp.float32) + b2_ref[...]


def t6cnn_single_forward(x, params, pool):
    B, L = x.shape
    P = L // pool
    R = NCH * B
    Lp = L + 2 * XPAD
    # TODO(synk): for serving, stack several requests and add a "parallel"
    # batch-tile grid axis (uses v7x's 2nd TensorCore); a single B=4 call is
    # launch-overhead dominated so it stays grid-less here.
    return pl.pallas_call(
        functools.partial(t6cnn_fused_kernel, pool=pool, L=L),
        out_shape=jax.ShapeDtypeStruct((B, 2), jnp.float32),
        scratch_shapes=[
            pltpu.VMEM((R, Lp), jnp.float32),            # padded, replicated input
            pltpu.VMEM((R, 3 * P), jnp.float32),         # pooled features (j, p)
            pltpu.VMEM((B, 3 * NCH * P), jnp.float32),   # lane-dense MLP input
        ],
    )(x, params["w_pack"], params["cshift"], params["fc1_wp"],
      params["fc1_b"], params["fc2_w"], params["fc2_b"])


def make_params(key, in_dim, pool, batch):
    """Deterministic synthetic parameters (shapes from T6CNN_single.__init__).

    kernel_params are pre-packed for the fused kernel: BN(eval) scale folded
    into the conv taps, per-channel rows repeated `batch` times (the kernel's
    merged (NCH*B) sublane axis), fc1 rows permuted to (c, j, p) order + bf16.
    """
    P = in_dim // pool
    fc_in = 3 * NCH * P

    keys = iter(jax.random.split(key, 3 * 6 + 4))
    conv_w, conv_b, bn_g, bn_b, bn_m, bn_v = [], [], [], [], [], []
    for j in range(3):
        conv_w.append(0.3 * jax.random.normal(next(keys), (NCH, KS[j]), jnp.float32))
        conv_b.append(0.1 * jax.random.normal(next(keys), (NCH,), jnp.float32))
        bn_g.append(0.5 + jax.random.uniform(next(keys), (NCH,), jnp.float32))
        bn_b.append(0.1 * jax.random.normal(next(keys), (NCH,), jnp.float32))
        bn_m.append(0.1 * jax.random.normal(next(keys), (NCH,), jnp.float32))
        bn_v.append(0.5 + jax.random.uniform(next(keys), (NCH,), jnp.float32))
    fc1_w = jax.random.normal(next(keys), (fc_in, FC_HID), jnp.float32) / jnp.sqrt(1.0 * fc_in)
    fc1_b = 0.1 * jax.random.normal(next(keys), (FC_HID,), jnp.float32)
    fc2_w = jax.random.normal(next(keys), (FC_HID, 2), jnp.float32) / 8.0
    fc2_b = 0.1 * jax.random.normal(next(keys), (2,), jnp.float32)

    # Fold BN(eval): scale into the conv taps, shift (with conv bias) separately.
    w_pack = jnp.zeros((3, KMAX, NCH), jnp.float32)
    cb_rows = []
    for j in range(3):
        s = bn_g[j] / jnp.sqrt(bn_v[j] + BN_EPS)                       # (NCH,)
        w_pack = w_pack.at[j, :KS[j], :].set((conv_w[j] * s[:, None]).T)
        cb_rows.append(s * (conv_b[j] - bn_m[j]) + bn_b[j])

    # Repeat each channel row `batch` times -> merged (c, b) sublane axis.
    w_pack_rb = jnp.repeat(w_pack.reshape(3 * KMAX, NCH), batch, axis=1)[:, :, None]
    cshift_rb = jnp.repeat(jnp.stack(cb_rows), batch, axis=1)[:, :, None]

    # fc1 rows permuted from torch order (j, c, p) to kernel order (c, j, p).
    fc1_wp = (fc1_w.reshape(3, NCH, P, FC_HID)
                   .transpose(1, 0, 2, 3)
                   .reshape(fc_in, FC_HID)
                   .astype(jnp.bfloat16))

    kernel_params = dict(
        w_pack=w_pack_rb,            # (3*KMAX, NCH*B, 1) f32
        cshift=cshift_rb,            # (3, NCH*B, 1) f32
        fc1_wp=fc1_wp,               # (fc_in, 64) bf16
        fc1_b=fc1_b[None, :],
        fc2_w=fc2_w,
        fc2_b=fc2_b[None, :],
    )
    raw = dict(conv_w=conv_w, conv_b=conv_b, bn_gamma=bn_g, bn_beta=bn_b,
               bn_mean=bn_m, bn_var=bn_v, fc1_w=fc1_w, fc1_b=fc1_b,
               fc2_w=fc2_w, fc2_b=fc2_b)
    return kernel_params, raw


def reference_forward(x, raw, pool):
    """Pure-JAX reference mirroring the PyTorch forward (eval mode, all f32)."""
    B, L = x.shape
    P = L // pool
    branches = []
    for j in range(3):
        w = raw["conv_w"][j]                                # (NCH, K)
        y = jax.lax.conv_general_dilated(
            x[:, None, :], w[:, None, :], (1,), [(PADS[j], PADS[j])],
            dimension_numbers=("NCH", "OIH", "NCH"))        # (B, NCH, Lout)
        s = raw["bn_gamma"][j] / jnp.sqrt(raw["bn_var"][j] + BN_EPS)
        sh = s * (raw["conv_b"][j] - raw["bn_mean"][j]) + raw["bn_beta"][j]
        y = s[None, :, None] * y + sh[None, :, None]
        y = jnp.maximum(y, 0.0)
        y = y[:, :, :P * pool].reshape(B, NCH, P, pool).max(axis=-1)
        branches.append(y)
    feat = jnp.concatenate(branches, axis=1).reshape(B, 3 * NCH * P)
    h = jnp.maximum(feat @ raw["fc1_w"] + raw["fc1_b"], 0.0)
    return h @ raw["fc2_w"] + raw["fc2_b"]


if __name__ == "__main__":
    # TODO(synk): only the in_dim <= 800 (pool=10) configuration is exercised;
    # the in_dim > 800 branch only changes pool/P (the sliding-max helper and
    # the floor-truncation handle it) but is not validated here.
    B, IN_DIM = 4, 160
    pool = 10 if IN_DIM <= 800 else 100

    key = jax.random.PRNGKey(0)
    kx, kp = jax.random.split(key)
    x = jax.random.normal(kx, (B, IN_DIM), jnp.float32)

    kernel_params, raw_params = make_params(kp, IN_DIM, pool, B)

    out = t6cnn_single_forward(x, kernel_params, pool)
    out = jax.block_until_ready(out)
    assert out.shape == (B, 2)

    ref = reference_forward(x, raw_params, pool)
    # fc1 weights/activations pass through bf16 in the kernel (f32 accumulate),
    # so allow bf16-level tolerance against the all-f32 reference.
    if not bool(jnp.allclose(out, ref, rtol=2e-2, atol=2e-2)):
        raise AssertionError(f"mismatch: kernel={out}, ref={ref}")

    print("KERNEL_OK")
</pallas_src>

<mosaic_0001>
module attributes {stable_mosaic.version = 11 : i64} {
  func.func @t6cnn_fused_kernel(%arg0: memref<4x160xf32, #tpu.memory_space<vmem>>, %arg1: memref<27x40x1xf32, #tpu.memory_space<vmem>>, %arg2: memref<3x40x1xf32, #tpu.memory_space<vmem>>, %arg3: memref<480x64xbf16, #tpu.memory_space<vmem>>, %arg4: memref<1x64xf32, #tpu.memory_space<vmem>>, %arg5: memref<64x2xf32, #tpu.memory_space<vmem>>, %arg6: memref<1x2xf32, #tpu.memory_space<vmem>>, %arg7: memref<4x2xf32, #tpu.memory_space<vmem>>, %arg8: memref<40x176xf32, #tpu.memory_space<vmem>>, %arg9: memref<40x48xf32, #tpu.memory_space<vmem>>, %arg10: memref<4x480xf32, #tpu.memory_space<vmem>>) attributes {dimension_semantics = [], scalar_prefetch = 0 : i64, scratch_operands = 3 : i64, tpu.core_type = #tpu.core_type<tc>} {
    %cst = arith.constant 0.000000e+00 : f32
    %0 = vector.broadcast %cst : f32 to vector<40x8xf32>
    %c0 = arith.constant 0 : index
    %c0_0 = arith.constant 0 : index
    %1 = vector.load %arg8[%c0, %c0_0] : memref<40x176xf32, #tpu.memory_space<vmem>>, vector<40x8xf32>
    tpu.vector_store %arg8[%c0, %c0_0], %0 {strides = array<i32>} : memref<40x176xf32, #tpu.memory_space<vmem>>, vector<40x8xf32>,
    %cst_1 = arith.constant 0.000000e+00 : f32
    %2 = vector.broadcast %cst_1 : f32 to vector<40x8xf32>
    %c0_2 = arith.constant 0 : index
    %c168 = arith.constant 168 : index
    %3 = vector.load %arg8[%c0_2, %c168] : memref<40x176xf32, #tpu.memory_space<vmem>>, vector<40x8xf32>
    tpu.vector_store %arg8[%c0_2, %c168], %2 {strides = array<i32>} : memref<40x176xf32, #tpu.memory_space<vmem>>, vector<40x8xf32>,
    %c0_3 = arith.constant 0 : index
    %c0_4 = arith.constant 0 : index
    %4 = vector.load %arg0[%c0_3, %c0_4] : memref<4x160xf32, #tpu.memory_space<vmem>>, vector<4x160xf32>
    %c0_5 = arith.constant 0 : index
    %c8 = arith.constant 8 : index
    %5 = vector.load %arg8[%c0_5, %c8] : memref<40x176xf32, #tpu.memory_space<vmem>>, vector<4x160xf32>
    tpu.vector_store %arg8[%c0_5, %c8], %4 {strides = array<i32>} : memref<40x176xf32, #tpu.memory_space<vmem>>, vector<4x160xf32>,
    %c4 = arith.constant 4 : index
    %c8_6 = arith.constant 8 : index
    %6 = vector.load %arg8[%c4, %c8_6] : memref<40x176xf32, #tpu.memory_space<vmem>>, vector<4x160xf32>
    tpu.vector_store %arg8[%c4, %c8_6], %4 {strides = array<i32>} : memref<40x176xf32, #tpu.memory_space<vmem>>, vector<4x160xf32>,
    %c8_7 = arith.constant 8 : index
    %c8_8 = arith.constant 8 : index
    %7 = vector.load %arg8[%c8_7, %c8_8] : memref<40x176xf32, #tpu.memory_space<vmem>>, vector<4x160xf32>
    tpu.vector_store %arg8[%c8_7, %c8_8], %4 {strides = array<i32>} : memref<40x176xf32, #tpu.memory_space<vmem>>, vector<4x160xf32>,
    %c12 = arith.constant 12 : index
    %c8_9 = arith.constant 8 : index
    %8 = vector.load %arg8[%c12, %c8_9] : memref<40x176xf32, #tpu.memory_space<vmem>>, vector<4x160xf32>
    tpu.vector_store %arg8[%c12, %c8_9], %4 {strides = array<i32>} : memref<40x176xf32, #tpu.memory_space<vmem>>, vector<4x160xf32>,
    %c16 = arith.constant 16 : index
    %c8_10 = arith.constant 8 : index
    %9 = vector.load %arg8[%c16, %c8_10] : memref<40x176xf32, #tpu.memory_space<vmem>>, vector<4x160xf32>
    tpu.vector_store %arg8[%c16, %c8_10], %4 {strides = array<i32>} : memref<40x176xf32, #tpu.memory_space<vmem>>, vector<4x160xf32>,
    %c20 = arith.constant 20 : index
    %c8_11 = arith.constant 8 : index
    %10 = vector.load %arg8[%c20, %c8_11] : memref<40x176xf32, #tpu.memory_space<vmem>>, vector<4x160xf32>
    tpu.vector_store %arg8[%c20, %c8_11], %4 {strides = array<i32>} : memref<40x176xf32, #tpu.memory_space<vmem>>, vector<4x160xf32>,
    %c24 = arith.constant 24 : index
    %c8_12 = arith.constant 8 : index
    %11 = vector.load %arg8[%c24, %c8_12] : memref<40x176xf32, #tpu.memory_space<vmem>>, vector<4x160xf32>
    tpu.vector_store %arg8[%c24, %c8_12], %4 {strides = array<i32>} : memref<40x176xf32, #tpu.memory_space<vmem>>, vector<4x160xf32>,
    %c28 = arith.constant 28 : index
    %c8_13 = arith.constant 8 : index
    %12 = vector.load %arg8[%c28, %c8_13] : memref<40x176xf32, #tpu.memory_space<vmem>>, vector<4x160xf32>
    tpu.vector_store %arg8[%c28, %c8_13], %4 {strides = array<i32>} : memref<40x176xf32, #tpu.memory_space<vmem>>, vector<4x160xf32>,
    %c32 = arith.constant 32 : index
    %c8_14 = arith.constant 8 : index
    %13 = vector.load %arg8[%c32, %c8_14] : memref<40x176xf32, #tpu.memory_space<vmem>>, vector<4x160xf32>
    tpu.vector_store %arg8[%c32, %c8_14], %4 {strides = array<i32>} : memref<40x176xf32, #tpu.memory_space<vmem>>, vector<4x160xf32>,
    %c36 = arith.constant 36 : index
    %c8_15 = arith.constant 8 : index
    %14 = vector.load %arg8[%c36, %c8_15] : memref<40x176xf32, #tpu.memory_space<vmem>>, vector<4x160xf32>
    tpu.vector_store %arg8[%c36, %c8_15], %4 {strides = array<i32>} : memref<40x176xf32, #tpu.memory_space<vmem>>, vector<4x160xf32>,
    %c0_16 = arith.constant 0 : index
    %c0_17 = arith.constant 0 : index
    %15 = vector.load %arg8[%c0_16, %c0_17] : memref<40x176xf32, #tpu.memory_space<vmem>>, vector<40x176xf32>
    %c0_18 = arith.constant 0 : index
    %c0_19 = arith.constant 0 : index
    %c0_20 = arith.constant 0 : index
    %16 = vector.load %arg1[%c0_18, %c0_19, %c0_20] : memref<27x40x1xf32, #tpu.memory_space<vmem>>, vector<1x40x1xf32>
    %17 = vector.shape_cast %16 : vector<1x40x1xf32> to vector<40x1xf32>
    %18 = vector.extract_strided_slice %15 {offsets = [0, 7], sizes = [40, 160], strides = [1, 1]} : vector<40x176xf32> to vector<40x160xf32>
    %19 = vector.broadcast %17 : vector<40x1xf32> to vector<40x160xf32>
    %20 = arith.mulf %19, %18 : vector<40x160xf32>
    %c1 = arith.constant 1 : index
    %c0_21 = arith.constant 0 : index
    %c0_22 = arith.constant 0 : index
    %21 = vector.load %arg1[%c1, %c0_21, %c0_22] : memref<27x40x1xf32, #tpu.memory_space<vmem>>, vector<1x40x1xf32>
    %22 = vector.shape_cast %21 : vector<1x40x1xf32> to vector<40x1xf32>
    %23 = vector.extract_strided_slice %15 {offsets = [0, 8], sizes = [40, 160], strides = [1, 1]} : vector<40x176xf32> to vector<40x160xf32>
    %24 = vector.broadcast %22 : vector<40x1xf32> to vector<40x160xf32>
    %25 = arith.mulf %24, %23 : vector<40x160xf32>
    %26 = arith.addf %20, %25 : vector<40x160xf32>
    %c2 = arith.constant 2 : index
    %c0_23 = arith.constant 0 : index
    %c0_24 = arith.constant 0 : index
    %27 = vector.load %arg1[%c2, %c0_23, %c0_24] : memref<27x40x1xf32, #tpu.memory_space<vmem>>, vector<1x40x1xf32>
    %28 = vector.shape_cast %27 : vector<1x40x1xf32> to vector<40x1xf32>
    %29 = vector.extract_strided_slice %15 {offsets = [0, 9], sizes = [40, 160], strides = [1, 1]} : vector<40x176xf32> to vector<40x160xf32>
    %30 = vector.broadcast %28 : vector<40x1xf32> to vector<40x160xf32>
    %31 = arith.mulf %30, %29 : vector<40x160xf32>
    %32 = arith.addf %26, %31 : vector<40x160xf32>
    %c0_25 = arith.constant 0 : index
    %c0_26 = arith.constant 0 : index
    %c0_27 = arith.constant 0 : index
    %33 = vector.load %arg2[%c0_25, %c0_26, %c0_27] : memref<3x40x1xf32, #tpu.memory_space<vmem>>, vector<1x40x1xf32>
    %34 = vector.shape_cast %33 : vector<1x40x1xf32> to vector<40x1xf32>
    %35 = vector.broadcast %34 : vector<40x1xf32> to vector<40x160xf32>
    %36 = arith.addf %32, %35 : vector<40x160xf32>
    %cst_28 = arith.constant 0.000000e+00 : f32
    %37 = vector.broadcast %cst_28 : f32 to vector<40x160xf32>
    %38 = arith.maximumf %36, %37 : vector<40x160xf32>
    %39 = vector.extract_strided_slice %38 {offsets = [0, 0], sizes = [40, 159], strides = [1, 1]} : vector<40x160xf32> to vector<40x159xf32>
    %40 = vector.extract_strided_slice %38 {offsets = [0, 1], sizes = [40, 159], strides = [1, 1]} : vector<40x160xf32> to vector<40x159xf32>
    %41 = arith.maximumf %39, %40 : vector<40x159xf32>
    %42 = vector.extract_strided_slice %41 {offsets = [0, 0], sizes = [40, 157], strides = [1, 1]} : vector<40x159xf32> to vector<40x157xf32>
    %43 = vector.extract_strided_slice %41 {offsets = [0, 2], sizes = [40, 157], strides = [1, 1]} : vector<40x159xf32> to vector<40x157xf32>
    %44 = arith.maximumf %42, %43 : vector<40x157xf32>
    %45 = vector.extract_strided_slice %44 {offsets = [0, 0], sizes = [40, 153], strides = [1, 1]} : vector<40x157xf32> to vector<40x153xf32>
    %46 = vector.extract_strided_slice %44 {offsets = [0, 4], sizes = [40, 153], strides = [1, 1]} : vector<40x157xf32> to vector<40x153xf32>
    %47 = arith.maximumf %45, %46 : vector<40x153xf32>
    %48 = vector.extract_strided_slice %47 {offsets = [0, 0], sizes = [40, 151], strides = [1, 1]} : vector<40x153xf32> to vector<40x151xf32>
    %49 = vector.extract_strided_slice %41 {offsets = [0, 8], sizes = [40, 151], strides = [1, 1]} : vector<40x159xf32> to vector<40x151xf32>
    %50 = arith.maximumf %48, %49 : vector<40x151xf32>
    %51 = vector.extract_strided_slice %50 {offsets = [0, 0], sizes = [40, 1], strides = [1, 1]} : vector<40x151xf32> to vector<40x1xf32>
    %c0_29 = arith.constant 0 : index
    %c0_30 = arith.constant 0 : index
    %52 = vector.load %arg9[%c0_29, %c0_30] : memref<40x48xf32, #tpu.memory_space<vmem>>, vector<40x1xf32>
    tpu.vector_store %arg9[%c0_29, %c0_30], %51 {strides = array<i32>} : memref<40x48xf32, #tpu.memory_space<vmem>>, vector<40x1xf32>,
    %53 = vector.extract_strided_slice %50 {offsets = [0, 10], sizes = [40, 1], strides = [1, 1]} : vector<40x151xf32> to vector<40x1xf32>
    %c0_31 = arith.constant 0 : index
    %c1_32 = arith.constant 1 : index
    %54 = vector.load %arg9[%c0_31, %c1_32] : memref<40x48xf32, #tpu.memory_space<vmem>>, vector<40x1xf32>
    tpu.vector_store %arg9[%c0_31, %c1_32], %53 {strides = array<i32>} : memref<40x48xf32, #tpu.memory_space<vmem>>, vector<40x1xf32>,
    %55 = vector.extract_strided_slice %50 {offsets = [0, 20], sizes = [40, 1], strides = [1, 1]} : vector<40x151xf32> to vector<40x1xf32>
    %c0_33 = arith.constant 0 : index
    %c2_34 = arith.constant 2 : index
    %56 = vector.load %arg9[%c0_33, %c2_34] : memref<40x48xf32, #tpu.memory_space<vmem>>, vector<40x1xf32>
    tpu.vector_store %arg9[%c0_33, %c2_34], %55 {strides = array<i32>} : memref<40x48xf32, #tpu.memory_space<vmem>>, vector<40x1xf32>,
    %57 = vector.extract_strided_slice %50 {offsets = [0, 30], sizes = [40, 1], strides = [1, 1]} : vector<40x151xf32> to vector<40x1xf32>
    %c0_35 = arith.constant 0 : index
    %c3 = arith.constant 3 : index
    %58 = vector.load %arg9[%c0_35, %c3] : memref<40x48xf32, #tpu.memory_space<vmem>>, vector<40x1xf32>
    tpu.vector_store %arg9[%c0_35, %c3], %57 {strides = array<i32>} : memref<40x48xf32, #tpu.memory_space<vmem>>, vector<40x1xf32>,
    %59 = vector.extract_strided_slice %50 {offsets = [0, 40], sizes = [40, 1], strides = [1, 1]} : vector<40x151xf32> to vector<40x1xf32>
    %c0_36 = arith.constant 0 : index
    %c4_37 = arith.constant 4 : index
    %60 = vector.load %arg9[%c0_36, %c4_37] : memref<40x48xf32, #tpu.memory_space<vmem>>, vector<40x1xf32>
    tpu.vector_store %arg9[%c0_36, %c4_37], %59 {strides = array<i32>} : memref<40x48xf32, #tpu.memory_space<vmem>>, vector<40x1xf32>,
    %61 = vector.extract_strided_slice %50 {offsets = [0, 50], sizes = [40, 1], strides = [1, 1]} : vector<40x151xf32> to vector<40x1xf32>
    %c0_38 = arith.constant 0 : index
    %c5 = arith.constant 5 : index
    %62 = vector.load %arg9[%c0_38, %c5] : memref<40x48xf32, #tpu.memory_space<vmem>>, vector<40x1xf32>
    tpu.vector_store %arg9[%c0_38, %c5], %61 {strides = array<i32>} : memref<40x48xf32, #tpu.memory_space<vmem>>, vector<40x1xf32>,
    %63 = vector.extract_strided_slice %50 {offsets = [0, 60], sizes = [40, 1], strides = [1, 1]} : vector<40x151xf32> to vector<40x1xf32>
    %c0_39 = arith.constant 0 : index
    %c6 = arith.constant 6 : index
    %64 = vector.load %arg9[%c0_39, %c6] : memref<40x48xf32, #tpu.memory_space<vmem>>, vector<40x1xf32>
    tpu.vector_store %arg9[%c0_39, %c6], %63 {strides = array<i32>} : memref<40x48xf32, #tpu.memory_space<vmem>>, vector<40x1xf32>,
    %65 = vector.extract_strided_slice %50 {offsets = [0, 70], sizes = [40, 1], strides = [1, 1]} : vector<40x151xf32> to vector<40x1xf32>
    %c0_40 = arith.constant 0 : index
    %c7 = arith.constant 7 : index
    %66 = vector.load %arg9[%c0_40, %c7] : memref<40x48xf32, #tpu.memory_space<vmem>>, vector<40x1xf32>
    tpu.vector_store %arg9[%c0_40, %c7], %65 {strides = array<i32>} : memref<40x48xf32, #tpu.memory_space<vmem>>, vector<40x1xf32>,
    %67 = vector.extract_strided_slice %50 {offsets = [0, 80], sizes = [40, 1], strides = [1, 1]} : vector<40x151xf32> to vector<40x1xf32>
    %c0_41 = arith.constant 0 : index
    %c8_42 = arith.constant 8 : index
    %68 = vector.load %arg9[%c0_41, %c8_42] : memref<40x48xf32, #tpu.memory_space<vmem>>, vector<40x1xf32>
    tpu.vector_store %arg9[%c0_41, %c8_42], %67 {strides = array<i32>} : memref<40x48xf32, #tpu.memory_space<vmem>>, vector<40x1xf32>,
    %69 = vector.extract_strided_slice %50 {offsets = [0, 90], sizes = [40, 1], strides = [1, 1]} : vector<40x151xf32> to vector<40x1xf32>
    %c0_43 = arith.constant 0 : index
    %c9 = arith.constant 9 : index
    %70 = vector.load %arg9[%c0_43, %c9] : memref<40x48xf32, #tpu.memory_space<vmem>>, vector<40x1xf32>
    tpu.vector_store %arg9[%c0_43, %c9], %69 {strides = array<i32>} : memref<40x48xf32, #tpu.memory_space<vmem>>, vector<40x1xf32>,
    %71 = vector.extract_strided_slice %50 {offsets = [0, 100], sizes = [40, 1], strides = [1, 1]} : vector<40x151xf32> to vector<40x1xf32>
    %c0_44 = arith.constant 0 : index
    %c10 = arith.constant 10 : index
    %72 = vector.load %arg9[%c0_44, %c10] : memref<40x48xf32, #tpu.memory_space<vmem>>, vector<40x1xf32>
    tpu.vector_store %arg9[%c0_44, %c10], %71 {strides = array<i32>} : memref<40x48xf32, #tpu.memory_space<vmem>>, vector<40x1xf32>,
    %73 = vector.extract_strided_slice %50 {offsets = [0, 110], sizes = [40, 1], strides = [1, 1]} : vector<40x151xf32> to vector<40x1xf32>
    %c0_45 = arith.constant 0 : index
    %c11 = arith.constant 11 : index
    %74 = vector.load %arg9[%c0_45, %c11] : memref<40x48xf32, #tpu.memory_space<vmem>>, vector<40x1xf32>
    tpu.vector_store %arg9[%c0_45, %c11], %73 {strides = array<i32>} : memref<40x48xf32, #tpu.memory_space<vmem>>, vector<40x1xf32>,
    %75 = vector.extract_strided_slice %50 {offsets = [0, 120], sizes = [40, 1], strides = [1, 1]} : vector<40x151xf32> to vector<40x1xf32>
    %c0_46 = arith.constant 0 : index
    %c12_47 = arith.constant 12 : index
    %76 = vector.load %arg9[%c0_46, %c12_47] : memref<40x48xf32, #tpu.memory_space<vmem>>, vector<40x1xf32>
    tpu.vector_store %arg9[%c0_46, %c12_47], %75 {strides = array<i32>} : memref<40x48xf32, #tpu.memory_space<vmem>>, vector<40x1xf32>,
    %77 = vector.extract_strided_slice %50 {offsets = [0, 130], sizes = [40, 1], strides = [1, 1]} : vector<40x151xf32> to vector<40x1xf32>
    %c0_48 = arith.constant 0 : index
    %c13 = arith.constant 13 : index
    %78 = vector.load %arg9[%c0_48, %c13] : memref<40x48xf32, #tpu.memory_space<vmem>>, vector<40x1xf32>
    tpu.vector_store %arg9[%c0_48, %c13], %77 {strides = array<i32>} : memref<40x48xf32, #tpu.memory_space<vmem>>, vector<40x1xf32>,
    %79 = vector.extract_strided_slice %50 {offsets = [0, 140], sizes = [40, 1], strides = [1, 1]} : vector<40x151xf32> to vector<40x1xf32>
    %c0_49 = arith.constant 0 : index
    %c14 = arith.constant 14 : index
    %80 = vector.load %arg9[%c0_49, %c14] : memref<40x48xf32, #tpu.memory_space<vmem>>, vector<40x1xf32>
    tpu.vector_store %arg9[%c0_49, %c14], %79 {strides = array<i32>} : memref<40x48xf32, #tpu.memory_space<vmem>>, vector<40x1xf32>,
    %81 = vector.extract_strided_slice %50 {offsets = [0, 150], sizes = [40, 1], strides = [1, 1]} : vector<40x151xf32> to vector<40x1xf32>
    %c0_50 = arith.constant 0 : index
    %c15 = arith.constant 15 : index
    %82 = vector.load %arg9[%c0_50, %c15] : memref<40x48xf32, #tpu.memory_space<vmem>>, vector<40x1xf32>
    tpu.vector_store %arg9[%c0_50, %c15], %81 {strides = array<i32>} : memref<40x48xf32, #tpu.memory_space<vmem>>, vector<40x1xf32>,
    %c9_51 = arith.constant 9 : index
    %c0_52 = arith.constant 0 : index
    %c0_53 = arith.constant 0 : index
    %83 = vector.load %arg1[%c9_51, %c0_52, %c0_53] : memref<27x40x1xf32, #tpu.memory_space<vmem>>, vector<1x40x1xf32>
    %84 = vector.shape_cast %83 : vector<1x40x1xf32> to vector<40x1xf32>
    %85 = vector.extract_strided_slice %15 {offsets = [0, 5], sizes = [40, 160], strides = [1, 1]} : vector<40x176xf32> to vector<40x160xf32>
    %86 = vector.broadcast %84 : vector<40x1xf32> to vector<40x160xf32>
    %87 = arith.mulf %86, %85 : vector<40x160xf32>
    %c10_54 = arith.constant 10 : index
    %c0_55 = arith.constant 0 : index
    %c0_56 = arith.constant 0 : index
    %88 = vector.load %arg1[%c10_54, %c0_55, %c0_56] : memref<27x40x1xf32, #tpu.memory_space<vmem>>, vector<1x40x1xf32>
    %89 = vector.shape_cast %88 : vector<1x40x1xf32> to vector<40x1xf32>
    %90 = vector.extract_strided_slice %15 {offsets = [0, 6], sizes = [40, 160], strides = [1, 1]} : vector<40x176xf32> to vector<40x160xf32>
    %91 = vector.broadcast %89 : vector<40x1xf32> to vector<40x160xf32>
    %92 = arith.mulf %91, %90 : vector<40x160xf32>
    %93 = arith.addf %87, %92 : vector<40x160xf32>
    %c11_57 = arith.constant 11 : index
    %c0_58 = arith.constant 0 : index
    %c0_59 = arith.constant 0 : index
    %94 = vector.load %arg1[%c11_57, %c0_58, %c0_59] : memref<27x40x1xf32, #tpu.memory_space<vmem>>, vector<1x40x1xf32>
    %95 = vector.shape_cast %94 : vector<1x40x1xf32> to vector<40x1xf32>
    %96 = vector.extract_strided_slice %15 {offsets = [0, 7], sizes = [40, 160], strides = [1, 1]} : vector<40x176xf32> to vector<40x160xf32>
    %97 = vector.broadcast %95 : vector<40x1xf32> to vector<40x160xf32>
    %98 = arith.mulf %97, %96 : vector<40x160xf32>
    %99 = arith.addf %93, %98 : vector<40x160xf32>
    %c12_60 = arith.constant 12 : index
    %c0_61 = arith.constant 0 : index
    %c0_62 = arith.constant 0 : index
    %100 = vector.load %arg1[%c12_60, %c0_61, %c0_62] : memref<27x40x1xf32, #tpu.memory_space<vmem>>, vector<1x40x1xf32>
    %101 = vector.shape_cast %100 : vector<1x40x1xf32> to vector<40x1xf32>
    %102 = vector.extract_strided_slice %15 {offsets = [0, 8], sizes = [40, 160], strides = [1, 1]} : vector<40x176xf32> to vector<40x160xf32>
    %103 = vector.broadcast %101 : vector<40x1xf32> to vector<40x160xf32>
    %104 = arith.mulf %103, %102 : vector<40x160xf32>
    %105 = arith.addf %99, %104 : vector<40x160xf32>
    %c13_63 = arith.constant 13 : index
    %c0_64 = arith.constant 0 : index
    %c0_65 = arith.constant 0 : index
    %106 = vector.load %arg1[%c13_63, %c0_64, %c0_65] : memref<27x40x1xf32, #tpu.memory_space<vmem>>, vector<1x40x1xf32>
    %107 = vector.shape_cast %106 : vector<1x40x1xf32> to vector<40x1xf32>
    %108 = vector.extract_strided_slice %15 {offsets = [0, 9], sizes = [40, 160], strides = [1, 1]} : vector<40x176xf32> to vector<40x160xf32>
    %109 = vector.broadcast %107 : vector<40x1xf32> to vector<40x160xf32>
    %110 = arith.mulf %109, %108 : vector<40x160xf32>
    %111 = arith.addf %105, %110 : vector<40x160xf32>
    %c14_66 = arith.constant 14 : index
    %c0_67 = arith.constant 0 : index
    %c0_68 = arith.constant 0 : index
    %112 = vector.load %arg1[%c14_66, %c0_67, %c0_68] : memref<27x40x1xf32, #tpu.memory_space<vmem>>, vector<1x40x1xf32>
    %113 = vector.shape_cast %112 : vector<1x40x1xf32> to vector<40x1xf32>
    %114 = vector.extract_strided_slice %15 {offsets = [0, 10], sizes = [40, 160], strides = [1, 1]} : vector<40x176xf32> to vector<40x160xf32>
    %115 = vector.broadcast %113 : vector<40x1xf32> to vector<40x160xf32>
    %116 = arith.mulf %115, %114 : vector<40x160xf32>
    %117 = arith.addf %111, %116 : vector<40x160xf32>
    %c1_69 = arith.constant 1 : index
    %c0_70 = arith.constant 0 : index
    %c0_71 = arith.constant 0 : index
    %118 = vector.load %arg2[%c1_69, %c0_70, %c0_71] : memref<3x40x1xf32, #tpu.memory_space<vmem>>, vector<1x40x1xf32>
    %119 = vector.shape_cast %118 : vector<1x40x1xf32> to vector<40x1xf32>
    %120 = vector.broadcast %119 : vector<40x1xf32> to vector<40x160xf32>
    %121 = arith.addf %117, %120 : vector<40x160xf32>
    %cst_72 = arith.constant 0.000000e+00 : f32
    %122 = vector.broadcast %cst_72 : f32 to vector<40x160xf32>
    %123 = arith.maximumf %121, %122 : vector<40x160xf32>
    %124 = vector.extract_strided_slice %123 {offsets = [0, 0], sizes = [40, 159], strides = [1, 1]} : vector<40x160xf32> to vector<40x159xf32>
    %125 = vector.extract_strided_slice %123 {offsets = [0, 1], sizes = [40, 159], strides = [1, 1]} : vector<40x160xf32> to vector<40x159xf32>
    %126 = arith.maximumf %124, %125 : vector<40x159xf32>
    %127 = vector.extract_strided_slice %126 {offsets = [0, 0], sizes = [40, 157], strides = [1, 1]} : vector<40x159xf32> to vector<40x157xf32>
    %128 = vector.extract_strided_slice %126 {offsets = [0, 2], sizes = [40, 157], strides = [1, 1]} : vector<40x159xf32> to vector<40x157xf32>
    %129 = arith.maximumf %127, %128 : vector<40x157xf32>
    %130 = vector.extract_strided_slice %129 {offsets = [0, 0], sizes = [40, 153], strides = [1, 1]} : vector<40x157xf32> to vector<40x153xf32>
    %131 = vector.extract_strided_slice %129 {offsets = [0, 4], sizes = [40, 153], strides = [1, 1]} : vector<40x157xf32> to vector<40x153xf32>
    %132 = arith.maximumf %130, %131 : vector<40x153xf32>
    %133 = vector.extract_strided_slice %132 {offsets = [0, 0], sizes = [40, 151], strides = [1, 1]} : vector<40x153xf32> to vector<40x151xf32>
    %134 = vector.extract_strided_slice %126 {offsets = [0, 8], sizes = [40, 151], strides = [1, 1]} : vector<40x159xf32> to vector<40x151xf32>
    %135 = arith.maximumf %133, %134 : vector<40x151xf32>
    %136 = vector.extract_strided_slice %135 {offsets = [0, 0], sizes = [40, 1], strides = [1, 1]} : vector<40x151xf32> to vector<40x1xf32>
    %c0_73 = arith.constant 0 : index
    %c16_74 = arith.constant 16 : index
    %137 = vector.load %arg9[%c0_73, %c16_74] : memref<40x48xf32, #tpu.memory_space<vmem>>, vector<40x1xf32>
    tpu.vector_store %arg9[%c0_73, %c16_74], %136 {strides = array<i32>} : memref<40x48xf32, #tpu.memory_space<vmem>>, vector<40x1xf32>,
    %138 = vector.extract_strided_slice %135 {offsets = [0, 10], sizes = [40, 1], strides = [1, 1]} : vector<40x151xf32> to vector<40x1xf32>
    %c0_75 = arith.constant 0 : index
    %c17 = arith.constant 17 : index
    %139 = vector.load %arg9[%c0_75, %c17] : memref<40x48xf32, #tpu.memory_space<vmem>>, vector<40x1xf32>
    tpu.vector_store %arg9[%c0_75, %c17], %138 {strides = array<i32>} : memref<40x48xf32, #tpu.memory_space<vmem>>, vector<40x1xf32>,
    %140 = vector.extract_strided_slice %135 {offsets = [0, 20], sizes = [40, 1], strides = [1, 1]} : vector<40x151xf32> to vector<40x1xf32>
    %c0_76 = arith.constant 0 : index
    %c18 = arith.constant 18 : index
    %141 = vector.load %arg9[%c0_76, %c18] : memref<40x48xf32, #tpu.memory_space<vmem>>, vector<40x1xf32>
    tpu.vector_store %arg9[%c0_76, %c18], %140 {strides = array<i32>} : memref<40x48xf32, #tpu.memory_space<vmem>>, vector<40x1xf32>,
    %142 = vector.extract_strided_slice %135 {offsets = [0, 30], sizes = [40, 1], strides = [1, 1]} : vector<40x151xf32> to vector<40x1xf32>
    %c0_77 = arith.constant 0 : index
    %c19 = arith.constant 19 : index
    %143 = vector.load %arg9[%c0_77, %c19] : memref<40x48xf32, #tpu.memory_space<vmem>>, vector<40x1xf32>
    tpu.vector_store %arg9[%c0_77, %c19], %142 {strides = array<i32>} : memref<40x48xf32, #tpu.memory_space<vmem>>, vector<40x1xf32>,
    %144 = vector.extract_strided_slice %135 {offsets = [0, 40], sizes = [40, 1], strides = [1, 1]} : vector<40x151xf32> to vector<40x1xf32>
    %c0_78 = arith.constant 0 : index
    %c20_79 = arith.constant 20 : index
    %145 = vector.load %arg9[%c0_78, %c20_79] : memref<40x48xf32, #tpu.memory_space<vmem>>, vector<40x1xf32>
    tpu.vector_store %arg9[%c0_78, %c20_79], %144 {strides = array<i32>} : memref<40x48xf32, #tpu.memory_space<vmem>>, vector<40x1xf32>,
    %146 = vector.extract_strided_slice %135 {offsets = [0, 50], sizes = [40, 1], strides = [1, 1]} : vector<40x151xf32> to vector<40x1xf32>
    %c0_80 = arith.constant 0 : index
    %c21 = arith.constant 21 : index
    %147 = vector.load %arg9[%c0_80, %c21] : memref<40x48xf32, #tpu.memory_space<vmem>>, vector<40x1xf32>
    tpu.vector_store %arg9[%c0_80, %c21], %146 {strides = array<i32>} : memref<40x48xf32, #tpu.memory_space<vmem>>, vector<40x1xf32>,
    %148 = vector.extract_strided_slice %135 {offsets = [0, 60], sizes = [40, 1], strides = [1, 1]} : vector<40x151xf32> to vector<40x1xf32>
    %c0_81 = arith.constant 0 : index
    %c22 = arith.constant 22 : index
    %149 = vector.load %arg9[%c0_81, %c22] : memref<40x48xf32, #tpu.memory_space<vmem>>, vector<40x1xf32>
    tpu.vector_store %arg9[%c0_81, %c22], %148 {strides = array<i32>} : memref<40x48xf32, #tpu.memory_space<vmem>>, vector<40x1xf32>,
    %150 = vector.extract_strided_slice %135 {offsets = [0, 70], sizes = [40, 1], strides = [1, 1]} : vector<40x151xf32> to vector<40x1xf32>
    %c0_82 = arith.constant 0 : index
    %c23 = arith.constant 23 : index
    %151 = vector.load %arg9[%c0_82, %c23] : memref<40x48xf32, #tpu.memory_space<vmem>>, vector<40x1xf32>
    tpu.vector_store %arg9[%c0_82, %c23], %150 {strides = array<i32>} : memref<40x48xf32, #tpu.memory_space<vmem>>, vector<40x1xf32>,
    %152 = vector.extract_strided_slice %135 {offsets = [0, 80], sizes = [40, 1], strides = [1, 1]} : vector<40x151xf32> to vector<40x1xf32>
    %c0_83 = arith.constant 0 : index
    %c24_84 = arith.constant 24 : index
    %153 = vector.load %arg9[%c0_83, %c24_84] : memref<40x48xf32, #tpu.memory_space<vmem>>, vector<40x1xf32>
    tpu.vector_store %arg9[%c0_83, %c24_84], %152 {strides = array<i32>} : memref<40x48xf32, #tpu.memory_space<vmem>>, vector<40x1xf32>,
    %154 = vector.extract_strided_slice %135 {offsets = [0, 90], sizes = [40, 1], strides = [1, 1]} : vector<40x151xf32> to vector<40x1xf32>
    %c0_85 = arith.constant 0 : index
    %c25 = arith.constant 25 : index
    %155 = vector.load %arg9[%c0_85, %c25] : memref<40x48xf32, #tpu.memory_space<vmem>>, vector<40x1xf32>
    tpu.vector_store %arg9[%c0_85, %c25], %154 {strides = array<i32>} : memref<40x48xf32, #tpu.memory_space<vmem>>, vector<40x1xf32>,
    %156 = vector.extract_strided_slice %135 {offsets = [0, 100], sizes = [40, 1], strides = [1, 1]} : vector<40x151xf32> to vector<40x1xf32>
    %c0_86 = arith.constant 0 : index
    %c26 = arith.constant 26 : index
    %157 = vector.load %arg9[%c0_86, %c26] : memref<40x48xf32, #tpu.memory_space<vmem>>, vector<40x1xf32>
    tpu.vector_store %arg9[%c0_86, %c26], %156 {strides = array<i32>} : memref<40x48xf32, #tpu.memory_space<vmem>>, vector<40x1xf32>,
    %158 = vector.extract_strided_slice %135 {offsets = [0, 110], sizes = [40, 1], strides = [1, 1]} : vector<40x151xf32> to vector<40x1xf32>
    %c0_87 = arith.constant 0 : index
    %c27 = arith.constant 27 : index
    %159 = vector.load %arg9[%c0_87, %c27] : memref<40x48xf32, #tpu.memory_space<vmem>>, vector<40x1xf32>
    tpu.vector_store %arg9[%c0_87, %c27], %158 {strides = array<i32>} : memref<40x48xf32, #tpu.memory_space<vmem>>, vector<40x1xf32>,
    %160 = vector.extract_strided_slice %135 {offsets = [0, 120], sizes = [40, 1], strides = [1, 1]} : vector<40x151xf32> to vector<40x1xf32>
    %c0_88 = arith.constant 0 : index
    %c28_89 = arith.constant 28 : index
    %161 = vector.load %arg9[%c0_88, %c28_89] : memref<40x48xf32, #tpu.memory_space<vmem>>, vector<40x1xf32>
    tpu.vector_store %arg9[%c0_88, %c28_89], %160 {strides = array<i32>} : memref<40x48xf32, #tpu.memory_space<vmem>>, vector<40x1xf32>,
    %162 = vector.extract_strided_slice %135 {offsets = [0, 130], sizes = [40, 1], strides = [1, 1]} : vector<40x151xf32> to vector<40x1xf32>
    %c0_90 = arith.constant 0 : index
    %c29 = arith.constant 29 : index
    %163 = vector.load %arg9[%c0_90, %c29] : memref<40x48xf32, #tpu.memory_space<vmem>>, vector<40x1xf32>
    tpu.vector_store %arg9[%c0_90, %c29], %162 {strides = array<i32>} : memref<40x48xf32, #tpu.memory_space<vmem>>, vector<40x1xf32>,
    %164 = vector.extract_strided_slice %135 {offsets = [0, 140], sizes = [40, 1], strides = [1, 1]} : vector<40x151xf32> to vector<40x1xf32>
    %c0_91 = arith.constant 0 : index
    %c30 = arith.constant 30 : index
    %165 = vector.load %arg9[%c0_91, %c30] : memref<40x48xf32, #tpu.memory_space<vmem>>, vector<40x1xf32>
    tpu.vector_store %arg9[%c0_91, %c30], %164 {strides = array<i32>} : memref<40x48xf32, #tpu.memory_space<vmem>>, vector<40x1xf32>,
    %166 = vector.extract_strided_slice %135 {offsets = [0, 150], sizes = [40, 1], strides = [1, 1]} : vector<40x151xf32> to vector<40x1xf32>
    %c0_92 = arith.constant 0 : index
    %c31 = arith.constant 31 : index
    %167 = vector.load %arg9[%c0_92, %c31] : memref<40x48xf32, #tpu.memory_space<vmem>>, vector<40x1xf32>
    tpu.vector_store %arg9[%c0_92, %c31], %166 {strides = array<i32>} : memref<40x48xf32, #tpu.memory_space<vmem>>, vector<40x1xf32>,
    %c18_93 = arith.constant 18 : index
    %c0_94 = arith.constant 0 : index
    %c0_95 = arith.constant 0 : index
    %168 = vector.load %arg1[%c18_93, %c0_94, %c0_95] : memref<27x40x1xf32, #tpu.memory_space<vmem>>, vector<1x40x1xf32>
    %169 = vector.shape_cast %168 : vector<1x40x1xf32> to vector<40x1xf32>
    %170 = vector.extract_strided_slice %15 {offsets = [0, 4], sizes = [40, 160], strides = [1, 1]} : vector<40x176xf32> to vector<40x160xf32>
    %171 = vector.broadcast %169 : vector<40x1xf32> to vector<40x160xf32>
    %172 = arith.mulf %171, %170 : vector<40x160xf32>
    %c19_96 = arith.constant 19 : index
    %c0_97 = arith.constant 0 : index
    %c0_98 = arith.constant 0 : index
    %173 = vector.load %arg1[%c19_96, %c0_97, %c0_98] : memref<27x40x1xf32, #tpu.memory_space<vmem>>, vector<1x40x1xf32>
    %174 = vector.shape_cast %173 : vector<1x40x1xf32> to vector<40x1xf32>
    %175 = vector.extract_strided_slice %15 {offsets = [0, 5], sizes = [40, 160], strides = [1, 1]} : vector<40x176xf32> to vector<40x160xf32>
    %176 = vector.broadcast %174 : vector<40x1xf32> to vector<40x160xf32>
    %177 = arith.mulf %176, %175 : vector<40x160xf32>
    %178 = arith.addf %172, %177 : vector<40x160xf32>
    %c20_99 = arith.constant 20 : index
    %c0_100 = arith.constant 0 : index
    %c0_101 = arith.constant 0 : index
    %179 = vector.load %arg1[%c20_99, %c0_100, %c0_101] : memref<27x40x1xf32, #tpu.memory_space<vmem>>, vector<1x40x1xf32>
    %180 = vector.shape_cast %179 : vector<1x40x1xf32> to vector<40x1xf32>
    %181 = vector.extract_strided_slice %15 {offsets = [0, 6], sizes = [40, 160], strides = [1, 1]} : vector<40x176xf32> to vector<40x160xf32>
    %182 = vector.broadcast %180 : vector<40x1xf32> to vector<40x160xf32>
    %183 = arith.mulf %182, %181 : vector<40x160xf32>
    %184 = arith.addf %178, %183 : vector<40x160xf32>
    %c21_102 = arith.constant 21 : index
    %c0_103 = arith.constant 0 : index
    %c0_104 = arith.constant 0 : index
    %185 = vector.load %arg1[%c21_102, %c0_103, %c0_104] : memref<27x40x1xf32, #tpu.memory_space<vmem>>, vector<1x40x1xf32>
    %186 = vector.shape_cast %185 : vector<1x40x1xf32> to vector<40x1xf32>
    %187 = vector.extract_strided_slice %15 {offsets = [0, 7], sizes = [40, 160], strides = [1, 1]} : vector<40x176xf32> to vector<40x160xf32>
    %188 = vector.broadcast %186 : vector<40x1xf32> to vector<40x160xf32>
    %189 = arith.mulf %188, %187 : vector<40x160xf32>
    %190 = arith.addf %184, %189 : vector<40x160xf32>
    %c22_105 = arith.constant 22 : index
    %c0_106 = arith.constant 0 : index
    %c0_107 = arith.constant 0 : index
    %191 = vector.load %arg1[%c22_105, %c0_106, %c0_107] : memref<27x40x1xf32, #tpu.memory_space<vmem>>, vector<1x40x1xf32>
    %192 = vector.shape_cast %191 : vector<1x40x1xf32> to vector<40x1xf32>
    %193 = vector.extract_strided_slice %15 {offsets = [0, 8], sizes = [40, 160], strides = [1, 1]} : vector<40x176xf32> to vector<40x160xf32>
    %194 = vector.broadcast %192 : vector<40x1xf32> to vector<40x160xf32>
    %195 = arith.mulf %194, %193 : vector<40x160xf32>
    %196 = arith.addf %190, %195 : vector<40x160xf32>
    %c23_108 = arith.constant 23 : index
    %c0_109 = arith.constant 0 : index
    %c0_110 = arith.constant 0 : index
    %197 = vector.load %arg1[%c23_108, %c0_109, %c0_110] : memref<27x40x1xf32, #tpu.memory_space<vmem>>, vector<1x40x1xf32>
    %198 = vector.shape_cast %197 : vector<1x40x1xf32> to vector<40x1xf32>
    %199 = vector.extract_strided_slice %15 {offsets = [0, 9], sizes = [40, 160], strides = [1, 1]} : vector<40x176xf32> to vector<40x160xf32>
    %200 = vector.broadcast %198 : vector<40x1xf32> to vector<40x160xf32>
    %201 = arith.mulf %200, %199 : vector<40x160xf32>
    %202 = arith.addf %196, %201 : vector<40x160xf32>
    %c24_111 = arith.constant 24 : index
    %c0_112 = arith.constant 0 : index
    %c0_113 = arith.constant 0 : index
    %203 = vector.load %arg1[%c24_111, %c0_112, %c0_113] : memref<27x40x1xf32, #tpu.memory_space<vmem>>, vector<1x40x1xf32>
    %204 = vector.shape_cast %203 : vector<1x40x1xf32> to vector<40x1xf32>
    %205 = vector.extract_strided_slice %15 {offsets = [0, 10], sizes = [40, 160], strides = [1, 1]} : vector<40x176xf32> to vector<40x160xf32>
    %206 = vector.broadcast %204 : vector<40x1xf32> to vector<40x160xf32>
    %207 = arith.mulf %206, %205 : vector<40x160xf32>
    %208 = arith.addf %202, %207 : vector<40x160xf32>
    %c25_114 = arith.constant 25 : index
    %c0_115 = arith.constant 0 : index
    %c0_116 = arith.constant 0 : index
    %209 = vector.load %arg1[%c25_114, %c0_115, %c0_116] : memref<27x40x1xf32, #tpu.memory_space<vmem>>, vector<1x40x1xf32>
    %210 = vector.shape_cast %209 : vector<1x40x1xf32> to vector<40x1xf32>
    %211 = vector.extract_strided_slice %15 {offsets = [0, 11], sizes = [40, 160], strides = [1, 1]} : vector<40x176xf32> to vector<40x160xf32>
    %212 = vector.broadcast %210 : vector<40x1xf32> to vector<40x160xf32>
    %213 = arith.mulf %212, %211 : vector<40x160xf32>
    %214 = arith.addf %208, %213 : vector<40x160xf32>
    %c26_117 = arith.constant 26 : index
    %c0_118 = arith.constant 0 : index
    %c0_119 = arith.constant 0 : index
    %215 = vector.load %arg1[%c26_117, %c0_118, %c0_119] : memref<27x40x1xf32, #tpu.memory_space<vmem>>, vector<1x40x1xf32>
    %216 = vector.shape_cast %215 : vector<1x40x1xf32> to vector<40x1xf32>
    %217 = vector.extract_strided_slice %15 {offsets = [0, 12], sizes = [40, 160], strides = [1, 1]} : vector<40x176xf32> to vector<40x160xf32>
    %218 = vector.broadcast %216 : vector<40x1xf32> to vector<40x160xf32>
    %219 = arith.mulf %218, %217 : vector<40x160xf32>
    %220 = arith.addf %214, %219 : vector<40x160xf32>
    %c2_120 = arith.constant 2 : index
    %c0_121 = arith.constant 0 : index
    %c0_122 = arith.constant 0 : index
    %221 = vector.load %arg2[%c2_120, %c0_121, %c0_122] : memref<3x40x1xf32, #tpu.memory_space<vmem>>, vector<1x40x1xf32>
    %222 = vector.shape_cast %221 : vector<1x40x1xf32> to vector<40x1xf32>
    %223 = vector.broadcast %222 : vector<40x1xf32> to vector<40x160xf32>
    %224 = arith.addf %220, %223 : vector<40x160xf32>
    %cst_123 = arith.constant 0.000000e+00 : f32
    %225 = vector.broadcast %cst_123 : f32 to vector<40x160xf32>
    %226 = arith.maximumf %224, %225 : vector<40x160xf32>
    %227 = vector.extract_strided_slice %226 {offsets = [0, 0], sizes = [40, 159], strides = [1, 1]} : vector<40x160xf32> to vector<40x159xf32>
    %228 = vector.extract_strided_slice %226 {offsets = [0, 1], sizes = [40, 159], strides = [1, 1]} : vector<40x160xf32> to vector<40x159xf32>
    %229 = arith.maximumf %227, %228 : vector<40x159xf32>
    %230 = vector.extract_strided_slice %229 {offsets = [0, 0], sizes = [40, 157], strides = [1, 1]} : vector<40x159xf32> to vector<40x157xf32>
    %231 = vector.extract_strided_slice %229 {offsets = [0, 2], sizes = [40, 157], strides = [1, 1]} : vector<40x159xf32> to vector<40x157xf32>
    %232 = arith.maximumf %230, %231 : vector<40x157xf32>
    %233 = vector.extract_strided_slice %232 {offsets = [0, 0], sizes = [40, 153], strides = [1, 1]} : vector<40x157xf32> to vector<40x153xf32>
    %234 = vector.extract_strided_slice %232 {offsets = [0, 4], sizes = [40, 153], strides = [1, 1]} : vector<40x157xf32> to vector<40x153xf32>
    %235 = arith.maximumf %233, %234 : vector<40x153xf32>
    %236 = vector.extract_strided_slice %235 {offsets = [0, 0], sizes = [40, 151], strides = [1, 1]} : vector<40x153xf32> to vector<40x151xf32>
    %237 = vector.extract_strided_slice %229 {offsets = [0, 8], sizes = [40, 151], strides = [1, 1]} : vector<40x159xf32> to vector<40x151xf32>
    %238 = arith.maximumf %236, %237 : vector<40x151xf32>
    %239 = vector.extract_strided_slice %238 {offsets = [0, 0], sizes = [40, 1], strides = [1, 1]} : vector<40x151xf32> to vector<40x1xf32>
    %c0_124 = arith.constant 0 : index
    %c32_125 = arith.constant 32 : index
    %240 = vector.load %arg9[%c0_124, %c32_125] : memref<40x48xf32, #tpu.memory_space<vmem>>, vector<40x1xf32>
    tpu.vector_store %arg9[%c0_124, %c32_125], %239 {strides = array<i32>} : memref<40x48xf32, #tpu.memory_space<vmem>>, vector<40x1xf32>,
    %241 = vector.extract_strided_slice %238 {offsets = [0, 10], sizes = [40, 1], strides = [1, 1]} : vector<40x151xf32> to vector<40x1xf32>
    %c0_126 = arith.constant 0 : index
    %c33 = arith.constant 33 : index
    %242 = vector.load %arg9[%c0_126, %c33] : memref<40x48xf32, #tpu.memory_space<vmem>>, vector<40x1xf32>
    tpu.vector_store %arg9[%c0_126, %c33], %241 {strides = array<i32>} : memref<40x48xf32, #tpu.memory_space<vmem>>, vector<40x1xf32>,
    %243 = vector.extract_strided_slice %238 {offsets = [0, 20], sizes = [40, 1], strides = [1, 1]} : vector<40x151xf32> to vector<40x1xf32>
    %c0_127 = arith.constant 0 : index
    %c34 = arith.constant 34 : index
    %244 = vector.load %arg9[%c0_127, %c34] : memref<40x48xf32, #tpu.memory_space<vmem>>, vector<40x1xf32>
    tpu.vector_store %arg9[%c0_127, %c34], %243 {strides = array<i32>} : memref<40x48xf32, #tpu.memory_space<vmem>>, vector<40x1xf32>,
    %245 = vector.extract_strided_slice %238 {offsets = [0, 30], sizes = [40, 1], strides = [1, 1]} : vector<40x151xf32> to vector<40x1xf32>
    %c0_128 = arith.constant 0 : index
    %c35 = arith.constant 35 : index
    %246 = vector.load %arg9[%c0_128, %c35] : memref<40x48xf32, #tpu.memory_space<vmem>>, vector<40x1xf32>
    tpu.vector_store %arg9[%c0_128, %c35], %245 {strides = array<i32>} : memref<40x48xf32, #tpu.memory_space<vmem>>, vector<40x1xf32>,
    %247 = vector.extract_strided_slice %238 {offsets = [0, 40], sizes = [40, 1], strides = [1, 1]} : vector<40x151xf32> to vector<40x1xf32>
    %c0_129 = arith.constant 0 : index
    %c36_130 = arith.constant 36 : index
    %248 = vector.load %arg9[%c0_129, %c36_130] : memref<40x48xf32, #tpu.memory_space<vmem>>, vector<40x1xf32>
    tpu.vector_store %arg9[%c0_129, %c36_130], %247 {strides = array<i32>} : memref<40x48xf32, #tpu.memory_space<vmem>>, vector<40x1xf32>,
    %249 = vector.extract_strided_slice %238 {offsets = [0, 50], sizes = [40, 1], strides = [1, 1]} : vector<40x151xf32> to vector<40x1xf32>
    %c0_131 = arith.constant 0 : index
    %c37 = arith.constant 37 : index
    %250 = vector.load %arg9[%c0_131, %c37] : memref<40x48xf32, #tpu.memory_space<vmem>>, vector<40x1xf32>
    tpu.vector_store %arg9[%c0_131, %c37], %249 {strides = array<i32>} : memref<40x48xf32, #tpu.memory_space<vmem>>, vector<40x1xf32>,
    %251 = vector.extract_strided_slice %238 {offsets = [0, 60], sizes = [40, 1], strides = [1, 1]} : vector<40x151xf32> to vector<40x1xf32>
    %c0_132 = arith.constant 0 : index
    %c38 = arith.constant 38 : index
    %252 = vector.load %arg9[%c0_132, %c38] : memref<40x48xf32, #tpu.memory_space<vmem>>, vector<40x1xf32>
    tpu.vector_store %arg9[%c0_132, %c38], %251 {strides = array<i32>} : memref<40x48xf32, #tpu.memory_space<vmem>>, vector<40x1xf32>,
    %253 = vector.extract_strided_slice %238 {offsets = [0, 70], sizes = [40, 1], strides = [1, 1]} : vector<40x151xf32> to vector<40x1xf32>
    %c0_133 = arith.constant 0 : index
    %c39 = arith.constant 39 : index
    %254 = vector.load %arg9[%c0_133, %c39] : memref<40x48xf32, #tpu.memory_space<vmem>>, vector<40x1xf32>
    tpu.vector_store %arg9[%c0_133, %c39], %253 {strides = array<i32>} : memref<40x48xf32, #tpu.memory_space<vmem>>, vector<40x1xf32>,
    %255 = vector.extract_strided_slice %238 {offsets = [0, 80], sizes = [40, 1], strides = [1, 1]} : vector<40x151xf32> to vector<40x1xf32>
    %c0_134 = arith.constant 0 : index
    %c40 = arith.constant 40 : index
    %256 = vector.load %arg9[%c0_134, %c40] : memref<40x48xf32, #tpu.memory_space<vmem>>, vector<40x1xf32>
    tpu.vector_store %arg9[%c0_134, %c40], %255 {strides = array<i32>} : memref<40x48xf32, #tpu.memory_space<vmem>>, vector<40x1xf32>,
    %257 = vector.extract_strided_slice %238 {offsets = [0, 90], sizes = [40, 1], strides = [1, 1]} : vector<40x151xf32> to vector<40x1xf32>
    %c0_135 = arith.constant 0 : index
    %c41 = arith.constant 41 : index
    %258 = vector.load %arg9[%c0_135, %c41] : memref<40x48xf32, #tpu.memory_space<vmem>>, vector<40x1xf32>
    tpu.vector_store %arg9[%c0_135, %c41], %257 {strides = array<i32>} : memref<40x48xf32, #tpu.memory_space<vmem>>, vector<40x1xf32>,
    %259 = vector.extract_strided_slice %238 {offsets = [0, 100], sizes = [40, 1], strides = [1, 1]} : vector<40x151xf32> to vector<40x1xf32>
    %c0_136 = arith.constant 0 : index
    %c42 = arith.constant 42 : index
    %260 = vector.load %arg9[%c0_136, %c42] : memref<40x48xf32, #tpu.memory_space<vmem>>, vector<40x1xf32>
    tpu.vector_store %arg9[%c0_136, %c42], %259 {strides = array<i32>} : memref<40x48xf32, #tpu.memory_space<vmem>>, vector<40x1xf32>,
    %261 = vector.extract_strided_slice %238 {offsets = [0, 110], sizes = [40, 1], strides = [1, 1]} : vector<40x151xf32> to vector<40x1xf32>
    %c0_137 = arith.constant 0 : index
    %c43 = arith.constant 43 : index
    %262 = vector.load %arg9[%c0_137, %c43] : memref<40x48xf32, #tpu.memory_space<vmem>>, vector<40x1xf32>
    tpu.vector_store %arg9[%c0_137, %c43], %261 {strides = array<i32>} : memref<40x48xf32, #tpu.memory_space<vmem>>, vector<40x1xf32>,
    %263 = vector.extract_strided_slice %238 {offsets = [0, 120], sizes = [40, 1], strides = [1, 1]} : vector<40x151xf32> to vector<40x1xf32>
    %c0_138 = arith.constant 0 : index
    %c44 = arith.constant 44 : index
    %264 = vector.load %arg9[%c0_138, %c44] : memref<40x48xf32, #tpu.memory_space<vmem>>, vector<40x1xf32>
    tpu.vector_store %arg9[%c0_138, %c44], %263 {strides = array<i32>} : memref<40x48xf32, #tpu.memory_space<vmem>>, vector<40x1xf32>,
    %265 = vector.extract_strided_slice %238 {offsets = [0, 130], sizes = [40, 1], strides = [1, 1]} : vector<40x151xf32> to vector<40x1xf32>
    %c0_139 = arith.constant 0 : index
    %c45 = arith.constant 45 : index
    %266 = vector.load %arg9[%c0_139, %c45] : memref<40x48xf32, #tpu.memory_space<vmem>>, vector<40x1xf32>
    tpu.vector_store %arg9[%c0_139, %c45], %265 {strides = array<i32>} : memref<40x48xf32, #tpu.memory_space<vmem>>, vector<40x1xf32>,
    %267 = vector.extract_strided_slice %238 {offsets = [0, 140], sizes = [40, 1], strides = [1, 1]} : vector<40x151xf32> to vector<40x1xf32>
    %c0_140 = arith.constant 0 : index
    %c46 = arith.constant 46 : index
    %268 = vector.load %arg9[%c0_140, %c46] : memref<40x48xf32, #tpu.memory_space<vmem>>, vector<40x1xf32>
    tpu.vector_store %arg9[%c0_140, %c46], %267 {strides = array<i32>} : memref<40x48xf32, #tpu.memory_space<vmem>>, vector<40x1xf32>,
    %269 = vector.extract_strided_slice %238 {offsets = [0, 150], sizes = [40, 1], strides = [1, 1]} : vector<40x151xf32> to vector<40x1xf32>
    %c0_141 = arith.constant 0 : index
    %c47 = arith.constant 47 : index
    %270 = vector.load %arg9[%c0_141, %c47] : memref<40x48xf32, #tpu.memory_space<vmem>>, vector<40x1xf32>
    tpu.vector_store %arg9[%c0_141, %c47], %269 {strides = array<i32>} : memref<40x48xf32, #tpu.memory_space<vmem>>, vector<40x1xf32>,
    %c0_142 = arith.constant 0 : index
    %c0_143 = arith.constant 0 : index
    %271 = vector.load %arg9[%c0_142, %c0_143] : memref<40x48xf32, #tpu.memory_space<vmem>>, vector<4x48xf32>
    %c0_144 = arith.constant 0 : index
    %c0_145 = arith.constant 0 : index
    %272 = vector.load %arg10[%c0_144, %c0_145] : memref<4x480xf32, #tpu.memory_space<vmem>>, vector<4x48xf32>
    tpu.vector_store %arg10[%c0_144, %c0_145], %271 {strides = array<i32>} : memref<4x480xf32, #tpu.memory_space<vmem>>, vector<4x48xf32>,
    %c4_146 = arith.constant 4 : index
    %c0_147 = arith.constant 0 : index
    %273 = vector.load %arg9[%c4_146, %c0_147] : memref<40x48xf32, #tpu.memory_space<vmem>>, vector<4x48xf32>
    %c0_148 = arith.constant 0 : index
    %c48 = arith.constant 48 : index
    %274 = vector.load %arg10[%c0_148, %c48] : memref<4x480xf32, #tpu.memory_space<vmem>>, vector<4x48xf32>
    tpu.vector_store %arg10[%c0_148, %c48], %273 {strides = array<i32>} : memref<4x480xf32, #tpu.memory_space<vmem>>, vector<4x48xf32>,
    %c8_149 = arith.constant 8 : index
    %c0_150 = arith.constant 0 : index
    %275 = vector.load %arg9[%c8_149, %c0_150] : memref<40x48xf32, #tpu.memory_space<vmem>>, vector<4x48xf32>
    %c0_151 = arith.constant 0 : index
    %c96 = arith.constant 96 : index
    %276 = vector.load %arg10[%c0_151, %c96] : memref<4x480xf32, #tpu.memory_space<vmem>>, vector<4x48xf32>
    tpu.vector_store %arg10[%c0_151, %c96], %275 {strides = array<i32>} : memref<4x480xf32, #tpu.memory_space<vmem>>, vector<4x48xf32>,
    %c12_152 = arith.constant 12 : index
    %c0_153 = arith.constant 0 : index
    %277 = vector.load %arg9[%c12_152, %c0_153] : memref<40x48xf32, #tpu.memory_space<vmem>>, vector<4x48xf32>
    %c0_154 = arith.constant 0 : index
    %c144 = arith.constant 144 : index
    %278 = vector.load %arg10[%c0_154, %c144] : memref<4x480xf32, #tpu.memory_space<vmem>>, vector<4x48xf32>
    tpu.vector_store %arg10[%c0_154, %c144], %277 {strides = array<i32>} : memref<4x480xf32, #tpu.memory_space<vmem>>, vector<4x48xf32>,
    %c16_155 = arith.constant 16 : index
    %c0_156 = arith.constant 0 : index
    %279 = vector.load %arg9[%c16_155, %c0_156] : memref<40x48xf32, #tpu.memory_space<vmem>>, vector<4x48xf32>
    %c0_157 = arith.constant 0 : index
    %c192 = arith.constant 192 : index
    %280 = vector.load %arg10[%c0_157, %c192] : memref<4x480xf32, #tpu.memory_space<vmem>>, vector<4x48xf32>
    tpu.vector_store %arg10[%c0_157, %c192], %279 {strides = array<i32>} : memref<4x480xf32, #tpu.memory_space<vmem>>, vector<4x48xf32>,
    %c20_158 = arith.constant 20 : index
    %c0_159 = arith.constant 0 : index
    %281 = vector.load %arg9[%c20_158, %c0_159] : memref<40x48xf32, #tpu.memory_space<vmem>>, vector<4x48xf32>
    %c0_160 = arith.constant 0 : index
    %c240 = arith.constant 240 : index
    %282 = vector.load %arg10[%c0_160, %c240] : memref<4x480xf32, #tpu.memory_space<vmem>>, vector<4x48xf32>
    tpu.vector_store %arg10[%c0_160, %c240], %281 {strides = array<i32>} : memref<4x480xf32, #tpu.memory_space<vmem>>, vector<4x48xf32>,
    %c24_161 = arith.constant 24 : index
    %c0_162 = arith.constant 0 : index
    %283 = vector.load %arg9[%c24_161, %c0_162] : memref<40x48xf32, #tpu.memory_space<vmem>>, vector<4x48xf32>
    %c0_163 = arith.constant 0 : index
    %c288 = arith.constant 288 : index
    %284 = vector.load %arg10[%c0_163, %c288] : memref<4x480xf32, #tpu.memory_space<vmem>>, vector<4x48xf32>
    tpu.vector_store %arg10[%c0_163, %c288], %283 {strides = array<i32>} : memref<4x480xf32, #tpu.memory_space<vmem>>, vector<4x48xf32>,
    %c28_164 = arith.constant 28 : index
    %c0_165 = arith.constant 0 : index
    %285 = vector.load %arg9[%c28_164, %c0_165] : memref<40x48xf32, #tpu.memory_space<vmem>>, vector<4x48xf32>
    %c0_166 = arith.constant 0 : index
    %c336 = arith.constant 336 : index
    %286 = vector.load %arg10[%c0_166, %c336] : memref<4x480xf32, #tpu.memory_space<vmem>>, vector<4x48xf32>
    tpu.vector_store %arg10[%c0_166, %c336], %285 {strides = array<i32>} : memref<4x480xf32, #tpu.memory_space<vmem>>, vector<4x48xf32>,
    %c32_167 = arith.constant 32 : index
    %c0_168 = arith.constant 0 : index
    %287 = vector.load %arg9[%c32_167, %c0_168] : memref<40x48xf32, #tpu.memory_space<vmem>>, vector<4x48xf32>
    %c0_169 = arith.constant 0 : index
    %c384 = arith.constant 384 : index
    %288 = vector.load %arg10[%c0_169, %c384] : memref<4x480xf32, #tpu.memory_space<vmem>>, vector<4x48xf32>
    tpu.vector_store %arg10[%c0_169, %c384], %287 {strides = array<i32>} : memref<4x480xf32, #tpu.memory_space<vmem>>, vector<4x48xf32>,
    %c36_170 = arith.constant 36 : index
    %c0_171 = arith.constant 0 : index
    %289 = vector.load %arg9[%c36_170, %c0_171] : memref<40x48xf32, #tpu.memory_space<vmem>>, vector<4x48xf32>
    %c0_172 = arith.constant 0 : index
    %c432 = arith.constant 432 : index
    %290 = vector.load %arg10[%c0_172, %c432] : memref<4x480xf32, #tpu.memory_space<vmem>>, vector<4x48xf32>
    tpu.vector_store %arg10[%c0_172, %c432], %289 {strides = array<i32>} : memref<4x480xf32, #tpu.memory_space<vmem>>, vector<4x48xf32>,
    %c0_173 = arith.constant 0 : index
    %c0_174 = arith.constant 0 : index
    %291 = vector.load %arg10[%c0_173, %c0_174] : memref<4x480xf32, #tpu.memory_space<vmem>>, vector<4x480xf32>
    %292 = arith.truncf %291 : vector<4x480xf32> to vector<4x480xbf16>
    %c0_175 = arith.constant 0 : index
    %c0_176 = arith.constant 0 : index
    %293 = vector.load %arg3[%c0_175, %c0_176] : memref<480x64xbf16, #tpu.memory_space<vmem>>, vector<480x64xbf16>
    %cst_177 = arith.constant dense<0.000000e+00> : vector<4x64xf32>
    %294 = tpu.matmul %292, %293, %cst_177 {dimension_numbers = #tpu.dot_dimension_numbers<[1], [0], [0], [1], [0, 0, 1, 1], [], []>} : vector<4x480xbf16>, vector<480x64xbf16>, vector<4x64xf32> -> vector<4x64xf32>
    %c0_178 = arith.constant 0 : index
    %c0_179 = arith.constant 0 : index
    %295 = vector.load %arg4[%c0_178, %c0_179] : memref<1x64xf32, #tpu.memory_space<vmem>>, vector<1x64xf32>
    %296 = vector.broadcast %295 : vector<1x64xf32> to vector<4x64xf32>
    %297 = arith.addf %294, %296 : vector<4x64xf32>
    %cst_180 = arith.constant 0.000000e+00 : f32
    %298 = vector.broadcast %cst_180 : f32 to vector<4x64xf32>
    %299 = arith.maximumf %297, %298 : vector<4x64xf32>
    %c0_181 = arith.constant 0 : index
    %c0_182 = arith.constant 0 : index
    %300 = vector.load %arg5[%c0_181, %c0_182] : memref<64x2xf32, #tpu.memory_space<vmem>>, vector<64x2xf32>
    %cst_183 = arith.constant dense<0.000000e+00> : vector<4x2xf32>
    %301 = tpu.matmul %299, %300, %cst_183 {dimension_numbers = #tpu.dot_dimension_numbers<[1], [0], [0], [1], [0, 0, 1, 1], [], []>} : vector<4x64xf32>, vector<64x2xf32>, vector<4x2xf32> -> vector<4x2xf32>
    %c0_184 = arith.constant 0 : index
    %c0_185 = arith.constant 0 : index
    %302 = vector.load %arg6[%c0_184, %c0_185] : memref<1x2xf32, #tpu.memory_space<vmem>>, vector<1x2xf32>
    %303 = vector.broadcast %302 : vector<1x2xf32> to vector<4x2xf32>
    %304 = arith.addf %301, %303 : vector<4x2xf32>
    %c0_186 = arith.constant 0 : index
    %c0_187 = arith.constant 0 : index
    %305 = vector.load %arg7[%c0_186, %c0_187] : memref<4x2xf32, #tpu.memory_space<vmem>>, vector<4x2xf32>
    tpu.vector_store %arg7[%c0_186, %c0_187], %304 {strides = array<i32>} : memref<4x2xf32, #tpu.memory_space<vmem>>, vector<4x2xf32>,
    return
  }
}

</mosaic_0001>

<llo_original>
// kernel: tpu_custom_call.1
$region0: #{tpu_custom_call.1}
  #allocation0 [shape = 'u32[]', space=smem, size = 0x4, offset = 0x4, fixed_abs, tag = 'smem constant byte address 0x4 - core index']
  #allocation1 [shape = 'u32[144,128]{1,0:T(1,128)}', space=vmem, size = 0x12000, scoped, tag = 'internal scratch']
  #allocation2 [shape = 'f32[40,176]{1,0:T(8,128)}', space=vmem, size = 0xa000, scoped, tag = 'scratch operand']
  #allocation3 [shape = 'f32[40,48]{1,0:T(8,128)}', space=vmem, size = 0x5000, scoped, tag = 'scratch operand']
  #allocation4 [shape = 'f32[4,480]{1,0:T(4,128)}', space=vmem, size = 0x2000, scoped, tag = 'scratch operand']
  %s0 = inlined_call_operand.vmem [shape: f32[4,160], index: 0, kind: input, shape index: {}]
  %s1 = inlined_call_operand.vmem [shape: f32[27,40,1], index: 1, kind: input, shape index: {}]
  %s2 = inlined_call_operand.vmem [shape: f32[3,40,1], index: 2, kind: input, shape index: {}]
  %s3 = inlined_call_operand.vmem [shape: bf16[480,64], index: 3, kind: input, shape index: {}]
  %s4 = inlined_call_operand.vmem [shape: f32[1,64], index: 4, kind: input, shape index: {}]
  %s5 = inlined_call_operand.vmem [shape: f32[64,2], index: 5, kind: input, shape index: {}]
  %s6 = inlined_call_operand.vmem [shape: f32[1,2], index: 6, kind: input, shape index: {}]
  %s7 = inlined_call_operand.vmem [shape: f32[4,2], index: 7, kind: output, shape index: {}]
  %s8 = sld [smem:[#allocation0]]
  $region38: #{tpu_custom_call.1} parent=0
    _
  %s10 = ssub.s32 1, %s8
  %s11 = scalar_select 0, %s10, %s8
  // Predicated region
  $region2: #{tpu_custom_call.1} parent=0 // pred_check
    _
  $region3: #{tpu_custom_call.1} parent=0 // pred_check_branch
    %13 = sbr.rel (0) target = $region5
  $region4: #{tpu_custom_call.1} parent=0 // pred_region
    _
  $region5: #{tpu_custom_call.1} parent=0 // pred_fallthru
    _
  // Predicated region
  $region6: #{tpu_custom_call.1} parent=0 // pred_check
    _
  $region7: #{tpu_custom_call.1} parent=0 // pred_check_branch
    %15 = sbr.rel (0) target = $region9
  $region8: #{tpu_custom_call.1} parent=0 // pred_region
    _
  $region9: #{tpu_custom_call.1} parent=0 // pred_fallthru
    _
  // Predicated region
  $region10: #{tpu_custom_call.1} parent=0 // pred_check
    _
  $region11: #{tpu_custom_call.1} parent=0 // pred_check_branch
    %17 = sbr.rel (0) target = $region13
  $region12: #{tpu_custom_call.1} parent=0 // pred_region
    _
  $region13: #{tpu_custom_call.1} parent=0 // pred_fallthru
    _
  // Predicated region
  $region14: #{tpu_custom_call.1} parent=0 // pred_check
    _
  $region15: #{tpu_custom_call.1} parent=0 // pred_check_branch
    %19 = sbr.rel (0) target = $region17
  $region16: #{tpu_custom_call.1} parent=0 // pred_region
    _
  $region17: #{tpu_custom_call.1} parent=0 // pred_fallthru
    _
  // Predicated region
  $region18: #{tpu_custom_call.1} parent=0 // pred_check
    _
  $region19: #{tpu_custom_call.1} parent=0 // pred_check_branch
    %21 = sbr.rel (0) target = $region21
  $region20: #{tpu_custom_call.1} parent=0 // pred_region
    _
  $region21: #{tpu_custom_call.1} parent=0 // pred_fallthru
    _
  // Predicated region
  $region22: #{tpu_custom_call.1} parent=0 // pred_check
    _
  $region23: #{tpu_custom_call.1} parent=0 // pred_check_branch
    %23 = sbr.rel (0) target = $region25
  $region24: #{tpu_custom_call.1} parent=0 // pred_region
    _
  $region25: #{tpu_custom_call.1} parent=0 // pred_fallthru
    _
  // Predicated region
  $region26: #{tpu_custom_call.1} parent=0 // pred_check
    _
  $region27: #{tpu_custom_call.1} parent=0 // pred_check_branch
    %25 = sbr.rel (0) target = $region29
  $region28: #{tpu_custom_call.1} parent=0 // pred_region
    _
  $region29: #{tpu_custom_call.1} parent=0 // pred_fallthru
    _
  %vm27 = vcmask 64512
  %28 = vst.msk [vmem:[#allocation2] sm:$0xff] %vm27, 0.0
  %29 = vst.msk [vmem:[#allocation2 + $0x10] sm:$0xff] %vm27, 0.0
  %30 = vst.msk [vmem:[#allocation2 + $0x20] sm:$0xff] %vm27, 0.0
  %31 = vst.msk [vmem:[#allocation2 + $0x30] sm:$0xff] %vm27, 0.0
  %32 = vst.msk [vmem:[#allocation2 + $0x40] sm:$0xff] %vm27, 0.0
  %vm33 = vcmask 392512
  %34 = vst.msk [vmem:[#allocation2 + $0x8] sm:$0xff] %vm33, 0.0
  %35 = vst.msk [vmem:[#allocation2 + $0x18] sm:$0xff] %vm33, 0.0
  %36 = vst.msk [vmem:[#allocation2 + $0x28] sm:$0xff] %vm33, 0.0
  %37 = vst.msk [vmem:[#allocation2 + $0x38] sm:$0xff] %vm33, 0.0
  %38 = vst.msk [vmem:[#allocation2 + $0x48] sm:$0xff] %vm33, 0.0
  %v39 = vld [vmem:[%s0] sm:$0xff]
  %v41 = vcombine.high %v39, %v39
  %42 = vrot.lane.b32.xlu0 %v39, 8
  %v43 = vpop.permute.xlu0 %42
  %44 = vrot.lane.b32.xlu0 %v41, 8
  %v45 = vpop.permute.xlu0 %44
  %v46 = vsel %vm27, %v43, %v45
  %vm49 = vcmask 1043520
  %50 = vst.msk [vmem:[#allocation2] sm:$0xf] %vm49, %v43
  %vm51 = vcmask 322560
  %52 = vst.msk [vmem:[#allocation2 + $0x8] sm:$0xf] %vm51, %v46
  %v53 = vcombine.low %v39, %v39
  %54 = vrot.lane.b32.xlu0 %v53, 8
  %v55 = vpop.permute.xlu0 %54
  %v56 = vsel %vm27, %v55, %v43
  %vm59 = vcmask 1047620
  %60 = vst.msk [vmem:[#allocation2] sm:$0xf0] %vm59, %v55
  %vm61 = vcmask 326660
  %62 = vst.msk [vmem:[#allocation2 + $0x8] sm:$0xf0] %vm61, %v56
  %63 = vst.msk [vmem:[#allocation2 + $0x10] sm:$0xf] %vm49, %v43
  %64 = vst.msk [vmem:[#allocation2 + $0x18] sm:$0xf] %vm51, %v46
  %65 = vst.msk [vmem:[#allocation2 + $0x10] sm:$0xf0] %vm59, %v55
  %66 = vst.msk [vmem:[#allocation2 + $0x18] sm:$0xf0] %vm61, %v56
  %67 = vst.msk [vmem:[#allocation2 + $0x20] sm:$0xf] %vm49, %v43
  %68 = vst.msk [vmem:[#allocation2 + $0x28] sm:$0xf] %vm51, %v46
  %69 = vst.msk [vmem:[#allocation2 + $0x20] sm:$0xf0] %vm59, %v55
  %70 = vst.msk [vmem:[#allocation2 + $0x28] sm:$0xf0] %vm61, %v56
  %71 = vst.msk [vmem:[#allocation2 + $0x30] sm:$0xf] %vm49, %v43
  %72 = vst.msk [vmem:[#allocation2 + $0x38] sm:$0xf] %vm51, %v46
  %73 = vst.msk [vmem:[#allocation2 + $0x30] sm:$0xf0] %vm59, %v55
  %74 = vst.msk [vmem:[#allocation2 + $0x38] sm:$0xf0] %vm61, %v56
  %75 = vst.msk [vmem:[#allocation2 + $0x40] sm:$0xf] %vm49, %v43
  %76 = vst.msk [vmem:[#allocation2 + $0x48] sm:$0xf] %vm51, %v46
  %77 = vst.msk [vmem:[#allocation2 + $0x40] sm:$0xf0] %vm59, %v55
  %78 = vst.msk [vmem:[#allocation2 + $0x48] sm:$0xf0] %vm61, %v56
  %v79 = vld [vmem:[#allocation2] sm:$0xff]
  %v80 = vld [vmem:[#allocation2 + $0x8] sm:$0xff]
  %v81 = vld [vmem:[#allocation2 + $0x10] sm:$0xff]
  %v82 = vld [vmem:[#allocation2 + $0x18] sm:$0xff]
  %v83 = vld [vmem:[#allocation2 + $0x20] sm:$0xff]
  %v84 = vld [vmem:[#allocation2 + $0x28] sm:$0xff]
  %v85 = vld [vmem:[#allocation2 + $0x30] sm:$0xff]
  %v86 = vld [vmem:[#allocation2 + $0x38] sm:$0xff]
  %v87 = vld [vmem:[#allocation2 + $0x40] sm:$0xff]
  %v88 = vld [vmem:[#allocation2 + $0x48] sm:$0xff]
  %v89 = vld [vmem:[%s1] sm:$0xff]
  %v90 = vld [vmem:[%s1 + $0x8] sm:$0xff]
  %v91 = vld [vmem:[%s1 + $0x10] sm:$0xff]
  %v92 = vld [vmem:[%s1 + $0x18] sm:$0xff]
  %v93 = vld [vmem:[%s1 + $0x20] sm:$0xff]
  %95 = vset.pattern.permute.xlu0 0
  %96 = vperm.xlu0 %95, %v89
  %v97 = vpop.permute.xlu0 %96
  %100 = vset.pattern.permute.xlu0 0
  %101 = vperm.xlu0 %100, %v90
  %v102 = vpop.permute.xlu0 %101
  %105 = vset.pattern.permute.xlu0 0
  %106 = vperm.xlu0 %105, %v91
  %v107 = vpop.permute.xlu0 %106
  %110 = vset.pattern.permute.xlu0 0
  %111 = vperm.xlu0 %110, %v92
  %v112 = vpop.permute.xlu0 %111
  %115 = vset.pattern.permute.xlu0 0
  %116 = vperm.xlu0 %115, %v93
  %v117 = vpop.permute.xlu0 %116
  %v119 = vmul.f32 %v97, %v79
  %v120 = vmul.f32 %v97, %v80
  %v121 = vmul.f32 %v102, %v81
  %v122 = vmul.f32 %v102, %v82
  %v123 = vmul.f32 %v107, %v83
  %v124 = vmul.f32 %v107, %v84
  %v125 = vmul.f32 %v112, %v85
  %v126 = vmul.f32 %v112, %v86
  %v127 = vmul.f32 %v117, %v87
  %v128 = vmul.f32 %v117, %v88
  %s129 = scalar_lea.vmem %s1, 40
  %v130 = vld [vmem:[%s129] sm:$0xff]
  %v131 = vld [vmem:[%s129 + $0x8] sm:$0xff]
  %v132 = vld [vmem:[%s129 + $0x10] sm:$0xff]
  %v133 = vld [vmem:[%s129 + $0x18] sm:$0xff]
  %v134 = vld [vmem:[%s129 + $0x20] sm:$0xff]
  %136 = vset.pattern.permute.xlu0 0
  %137 = vperm.xlu0 %136, %v130
  %v138 = vpop.permute.xlu0 %137
  %141 = vset.pattern.permute.xlu0 0
  %142 = vperm.xlu0 %141, %v131
  %v143 = vpop.permute.xlu0 %142
  %146 = vset.pattern.permute.xlu0 0
  %147 = vperm.xlu0 %146, %v132
  %v148 = vpop.permute.xlu0 %147
  %151 = vset.pattern.permute.xlu0 0
  %152 = vperm.xlu0 %151, %v133
  %v153 = vpop.permute.xlu0 %152
  %156 = vset.pattern.permute.xlu0 0
  %157 = vperm.xlu0 %156, %v134
  %v158 = vpop.permute.xlu0 %157
  %v160 = vmul.f32 %v138, %v79
  %v161 = vmul.f32 %v138, %v80
  %v162 = vmul.f32 %v143, %v81
  %v163 = vmul.f32 %v143, %v82
  %v164 = vmul.f32 %v148, %v83
  %v165 = vmul.f32 %v148, %v84
  %v166 = vmul.f32 %v153, %v85
  %v167 = vmul.f32 %v153, %v86
  %v168 = vmul.f32 %v158, %v87
  %v169 = vmul.f32 %v158, %v88
  %180 = vrot.lane.b32.xlu0 %v160, 127
  %v181 = vpop.permute.xlu0 %180
  %182 = vrot.lane.b32.xlu0 %v161, 127
  %v183 = vpop.permute.xlu0 %182
  %184 = vrot.lane.b32.xlu0 %v162, 127
  %v185 = vpop.permute.xlu0 %184
  %186 = vrot.lane.b32.xlu0 %v163, 127
  %v187 = vpop.permute.xlu0 %186
  %188 = vrot.lane.b32.xlu0 %v164, 127
  %v189 = vpop.permute.xlu0 %188
  %190 = vrot.lane.b32.xlu0 %v165, 127
  %v191 = vpop.permute.xlu0 %190
  %192 = vrot.lane.b32.xlu0 %v166, 127
  %v193 = vpop.permute.xlu0 %192
  %194 = vrot.lane.b32.xlu0 %v167, 127
  %v195 = vpop.permute.xlu0 %194
  %196 = vrot.lane.b32.xlu0 %v168, 127
  %v197 = vpop.permute.xlu0 %196
  %198 = vrot.lane.b32.xlu0 %v169, 127
  %v199 = vpop.permute.xlu0 %198
  %vm200 = vcmask 1039360
  %v201 = vsel %vm200, %v181, %v183
  %v202 = vsel %vm200, %v185, %v187
  %v203 = vsel %vm200, %v189, %v191
  %v204 = vsel %vm200, %v193, %v195
  %v205 = vsel %vm200, %v197, %v199
  %v216 = vadd.f32 %v119, %v201
  %v217 = vadd.f32 %v120, %v183
  %v218 = vadd.f32 %v121, %v202
  %v219 = vadd.f32 %v122, %v187
  %v220 = vadd.f32 %v123, %v203
  %v221 = vadd.f32 %v124, %v191
  %v222 = vadd.f32 %v125, %v204
  %v223 = vadd.f32 %v126, %v195
  %v224 = vadd.f32 %v127, %v205
  %v225 = vadd.f32 %v128, %v199
  %s226 = scalar_lea.vmem %s1, 80
  %v227 = vld [vmem:[%s226] sm:$0xff]
  %v228 = vld [vmem:[%s226 + $0x8] sm:$0xff]
  %v229 = vld [vmem:[%s226 + $0x10] sm:$0xff]
  %v230 = vld [vmem:[%s226 + $0x18] sm:$0xff]
  %v231 = vld [vmem:[%s226 + $0x20] sm:$0xff]
  %233 = vset.pattern.permute.xlu0 0
  %234 = vperm.xlu0 %233, %v227
  %v235 = vpop.permute.xlu0 %234
  %238 = vset.pattern.permute.xlu0 0
  %239 = vperm.xlu0 %238, %v228
  %v240 = vpop.permute.xlu0 %239
  %243 = vset.pattern.permute.xlu0 0
  %244 = vperm.xlu0 %243, %v229
  %v245 = vpop.permute.xlu0 %244
  %248 = vset.pattern.permute.xlu0 0
  %249 = vperm.xlu0 %248, %v230
  %v250 = vpop.permute.xlu0 %249
  %253 = vset.pattern.permute.xlu0 0
  %254 = vperm.xlu0 %253, %v231
  %v255 = vpop.permute.xlu0 %254
  %v257 = vmul.f32 %v235, %v79
  %v258 = vmul.f32 %v235, %v80
  %v259 = vmul.f32 %v240, %v81
  %v260 = vmul.f32 %v240, %v82
  %v261 = vmul.f32 %v245, %v83
  %v262 = vmul.f32 %v245, %v84
  %v263 = vmul.f32 %v250, %v85
  %v264 = vmul.f32 %v250, %v86
  %v265 = vmul.f32 %v255, %v87
  %v266 = vmul.f32 %v255, %v88
  %277 = vrot.lane.b32.xlu0 %v257, 126
  %v278 = vpop.permute.xlu0 %277
  %279 = vrot.lane.b32.xlu0 %v258, 126
  %v280 = vpop.permute.xlu0 %279
  %281 = vrot.lane.b32.xlu0 %v259, 126
  %v282 = vpop.permute.xlu0 %281
  %283 = vrot.lane.b32.xlu0 %v260, 126
  %v284 = vpop.permute.xlu0 %283
  %285 = vrot.lane.b32.xlu0 %v261, 126
  %v286 = vpop.permute.xlu0 %285
  %287 = vrot.lane.b32.xlu0 %v262, 126
  %v288 = vpop.permute.xlu0 %287
  %289 = vrot.lane.b32.xlu0 %v263, 126
  %v290 = vpop.permute.xlu0 %289
  %291 = vrot.lane.b32.xlu0 %v264, 126
  %v292 = vpop.permute.xlu0 %291
  %293 = vrot.lane.b32.xlu0 %v265, 126
  %v294 = vpop.permute.xlu0 %293
  %295 = vrot.lane.b32.xlu0 %v266, 126
  %v296 = vpop.permute.xlu0 %295
  %vm297 = vcmask 1031168
  %v298 = vsel %vm297, %v278, %v280
  %v299 = vsel %vm297, %v282, %v284
  %v300 = vsel %vm297, %v286, %v288
  %v301 = vsel %vm297, %v290, %v292
  %v302 = vsel %vm297, %v294, %v296
  %v313 = vadd.f32 %v216, %v298
  %v314 = vadd.f32 %v217, %v280
  %v315 = vadd.f32 %v218, %v299
  %v316 = vadd.f32 %v219, %v284
  %v317 = vadd.f32 %v220, %v300
  %v318 = vadd.f32 %v221, %v288
  %v319 = vadd.f32 %v222, %v301
  %v320 = vadd.f32 %v223, %v292
  %v321 = vadd.f32 %v224, %v302
  %v322 = vadd.f32 %v225, %v296
  %v323 = vld [vmem:[%s2] sm:$0xff]
  %v324 = vld [vmem:[%s2 + $0x8] sm:$0xff]
  %v325 = vld [vmem:[%s2 + $0x10] sm:$0xff]
  %v326 = vld [vmem:[%s2 + $0x18] sm:$0xff]
  %v327 = vld [vmem:[%s2 + $0x20] sm:$0xff]
  %329 = vset.pattern.permute.xlu0 0
  %330 = vperm.xlu0 %329, %v323
  %v331 = vpop.permute.xlu0 %330
  %334 = vset.pattern.permute.xlu0 0
  %335 = vperm.xlu0 %334, %v324
  %v336 = vpop.permute.xlu0 %335
  %339 = vset.pattern.permute.xlu0 0
  %340 = vperm.xlu0 %339, %v325
  %v341 = vpop.permute.xlu0 %340
  %344 = vset.pattern.permute.xlu0 0
  %345 = vperm.xlu0 %344, %v326
  %v346 = vpop.permute.xlu0 %345
  %349 = vset.pattern.permute.xlu0 0
  %350 = vperm.xlu0 %349, %v327
  %v351 = vpop.permute.xlu0 %350
  %v353 = vadd.f32 %v313, %v331
  %v354 = vadd.f32 %v314, %v331
  %v355 = vadd.f32 %v315, %v336
  %v356 = vadd.f32 %v316, %v336
  %v357 = vadd.f32 %v317, %v341
  %v358 = vadd.f32 %v318, %v341
  %v359 = vadd.f32 %v319, %v346
  %v360 = vadd.f32 %v320, %v346
  %v361 = vadd.f32 %v321, %v351
  %v362 = vadd.f32 %v322, %v351
  %v363 = vmax.f32 %v353, 0.0
  %v364 = vmax.f32 %v354, 0.0
  %v365 = vmax.f32 %v355, 0.0
  %v366 = vmax.f32 %v356, 0.0
  %v367 = vmax.f32 %v357, 0.0
  %v368 = vmax.f32 %v358, 0.0
  %v369 = vmax.f32 %v359, 0.0
  %v370 = vmax.f32 %v360, 0.0
  %v371 = vmax.f32 %v361, 0.0
  %v372 = vmax.f32 %v362, 0.0
  %383 = vrot.lane.b32.xlu0 %v363, 127
  %v384 = vpop.permute.xlu0 %383
  %385 = vrot.lane.b32.xlu0 %v364, 127
  %v386 = vpop.permute.xlu0 %385
  %387 = vrot.lane.b32.xlu0 %v365, 127
  %v388 = vpop.permute.xlu0 %387
  %389 = vrot.lane.b32.xlu0 %v366, 127
  %v390 = vpop.permute.xlu0 %389
  %391 = vrot.lane.b32.xlu0 %v367, 127
  %v392 = vpop.permute.xlu0 %391
  %393 = vrot.lane.b32.xlu0 %v368, 127
  %v394 = vpop.permute.xlu0 %393
  %395 = vrot.lane.b32.xlu0 %v369, 127
  %v396 = vpop.permute.xlu0 %395
  %397 = vrot.lane.b32.xlu0 %v370, 127
  %v398 = vpop.permute.xlu0 %397
  %399 = vrot.lane.b32.xlu0 %v371, 127
  %v400 = vpop.permute.xlu0 %399
  %401 = vrot.lane.b32.xlu0 %v372, 127
  %v402 = vpop.permute.xlu0 %401
  %v403 = vsel %vm200, %v384, %v386
  %v404 = vsel %vm200, %v388, %v390
  %v405 = vsel %vm200, %v392, %v394
  %v406 = vsel %vm200, %v396, %v398
  %v407 = vsel %vm200, %v400, %v402
  %v418 = vmax.f32 %v363, %v403
  %v419 = vmax.f32 %v364, %v386
  %v420 = vmax.f32 %v365, %v404
  %v421 = vmax.f32 %v366, %v390
  %v422 = vmax.f32 %v367, %v405
  %v423 = vmax.f32 %v368, %v394
  %v424 = vmax.f32 %v369, %v406
  %v425 = vmax.f32 %v370, %v398
  %v426 = vmax.f32 %v371, %v407
  %v427 = vmax.f32 %v372, %v402
  %438 = vrot.lane.b32.xlu0 %v418, 126
  %v439 = vpop.permute.xlu0 %438
  %440 = vrot.lane.b32.xlu0 %v419, 126
  %v441 = vpop.permute.xlu0 %440
  %442 = vrot.lane.b32.xlu0 %v420, 126
  %v443 = vpop.permute.xlu0 %442
  %444 = vrot.lane.b32.xlu0 %v421, 126
  %v445 = vpop.permute.xlu0 %444
  %446 = vrot.lane.b32.xlu0 %v422, 126
  %v447 = vpop.permute.xlu0 %446
  %448 = vrot.lane.b32.xlu0 %v423, 126
  %v449 = vpop.permute.xlu0 %448
  %450 = vrot.lane.b32.xlu0 %v424, 126
  %v451 = vpop.permute.xlu0 %450
  %452 = vrot.lane.b32.xlu0 %v425, 126
  %v453 = vpop.permute.xlu0 %452
  %454 = vrot.lane.b32.xlu0 %v426, 126
  %v455 = vpop.permute.xlu0 %454
  %456 = vrot.lane.b32.xlu0 %v427, 126
  %v457 = vpop.permute.xlu0 %456
  %v458 = vsel %vm297, %v439, %v441
  %v459 = vsel %vm297, %v443, %v445
  %v460 = vsel %vm297, %v447, %v449
  %v461 = vsel %vm297, %v451, %v453
  %v462 = vsel %vm297, %v455, %v457
  %v473 = vmax.f32 %v418, %v458
  %v474 = vmax.f32 %v419, %v441
  %v475 = vmax.f32 %v420, %v459
  %v476 = vmax.f32 %v421, %v445
  %v477 = vmax.f32 %v422, %v460
  %v478 = vmax.f32 %v423, %v449
  %v479 = vmax.f32 %v424, %v461
  %v480 = vmax.f32 %v425, %v453
  %v481 = vmax.f32 %v426, %v462
  %v482 = vmax.f32 %v427, %v457
  %493 = vrot.lane.b32.xlu0 %v473, 124
  %v494 = vpop.permute.xlu0 %493
  %495 = vrot.lane.b32.xlu0 %v474, 124
  %v496 = vpop.permute.xlu0 %495
  %497 = vrot.lane.b32.xlu0 %v475, 124
  %v498 = vpop.permute.xlu0 %497
  %499 = vrot.lane.b32.xlu0 %v476, 124
  %v500 = vpop.permute.xlu0 %499
  %501 = vrot.lane.b32.xlu0 %v477, 124
  %v502 = vpop.permute.xlu0 %501
  %503 = vrot.lane.b32.xlu0 %v478, 124
  %v504 = vpop.permute.xlu0 %503
  %505 = vrot.lane.b32.xlu0 %v479, 124
  %v506 = vpop.permute.xlu0 %505
  %507 = vrot.lane.b32.xlu0 %v480, 124
  %v508 = vpop.permute.xlu0 %507
  %509 = vrot.lane.b32.xlu0 %v481, 124
  %v510 = vpop.permute.xlu0 %509
  %511 = vrot.lane.b32.xlu0 %v482, 124
  %v512 = vpop.permute.xlu0 %511
  %vm513 = vcmask 1014784
  %v514 = vsel %vm513, %v494, %v496
  %v515 = vsel %vm513, %v498, %v500
  %v516 = vsel %vm513, %v502, %v504
  %v517 = vsel %vm513, %v506, %v508
  %v518 = vsel %vm513, %v510, %v512
  %v529 = vmax.f32 %v473, %v514
  %v530 = vmax.f32 %v474, %v496
  %v531 = vmax.f32 %v475, %v515
  %v532 = vmax.f32 %v476, %v500
  %v533 = vmax.f32 %v477, %v516
  %v534 = vmax.f32 %v478, %v504
  %v535 = vmax.f32 %v479, %v517
  %v536 = vmax.f32 %v480, %v508
  %v537 = vmax.f32 %v481, %v518
  %v538 = vmax.f32 %v482, %v512
  %539 = vrot.lane.b32.xlu0 %v418, 120
  %v540 = vpop.permute.xlu0 %539
  %541 = vrot.lane.b32.xlu0 %v419, 120
  %v542 = vpop.permute.xlu0 %541
  %543 = vrot.lane.b32.xlu0 %v420, 120
  %v544 = vpop.permute.xlu0 %543
  %545 = vrot.lane.b32.xlu0 %v421, 120
  %v546 = vpop.permute.xlu0 %545
  %547 = vrot.lane.b32.xlu0 %v422, 120
  %v548 = vpop.permute.xlu0 %547
  %549 = vrot.lane.b32.xlu0 %v423, 120
  %v550 = vpop.permute.xlu0 %549
  %551 = vrot.lane.b32.xlu0 %v424, 120
  %v552 = vpop.permute.xlu0 %551
  %553 = vrot.lane.b32.xlu0 %v425, 120
  %v554 = vpop.permute.xlu0 %553
  %555 = vrot.lane.b32.xlu0 %v426, 120
  %v556 = vpop.permute.xlu0 %555
  %557 = vrot.lane.b32.xlu0 %v427, 120
  %v558 = vpop.permute.xlu0 %557
  %vm559 = vcmask 982016
  %v560 = vsel %vm559, %v540, %v542
  %v561 = vsel %vm559, %v544, %v546
  %v562 = vsel %vm559, %v548, %v550
  %v563 = vsel %vm559, %v552, %v554
  %v564 = vsel %vm559, %v556, %v558
  %v575 = vmax.f32 %v529, %v560
  %v576 = vmax.f32 %v530, %v542
  %v577 = vmax.f32 %v531, %v561
  %v578 = vmax.f32 %v532, %v546
  %v579 = vmax.f32 %v533, %v562
  %v580 = vmax.f32 %v534, %v550
  %v581 = vmax.f32 %v535, %v563
  %v582 = vmax.f32 %v536, %v554
  %v583 = vmax.f32 %v537, %v564
  %v584 = vmax.f32 %v538, %v558
  %590 = vrot.lane.b32.xlu0 %v575, 121
  %v591 = vpop.permute.xlu0 %590
  %592 = vrot.lane.b32.xlu0 %v577, 121
  %v593 = vpop.permute.xlu0 %592
  %594 = vrot.lane.b32.xlu0 %v579, 121
  %v595 = vpop.permute.xlu0 %594
  %596 = vrot.lane.b32.xlu0 %v581, 121
  %v597 = vpop.permute.xlu0 %596
  %598 = vrot.lane.b32.xlu0 %v583, 121
  %v599 = vpop.permute.xlu0 %598
  %vm605 = vcmask 7168
  %606 = vst.msk [vmem:[#allocation3] sm:$0xff] %vm605, %v591
  %607 = vst.msk [vmem:[#allocation3 + $0x8] sm:$0xff] %vm605, %v593
  %608 = vst.msk [vmem:[#allocation3 + $0x10] sm:$0xff] %vm605, %v595
  %609 = vst.msk [vmem:[#allocation3 + $0x18] sm:$0xff] %vm605, %v597
  %610 = vst.msk [vmem:[#allocation3 + $0x20] sm:$0xff] %vm605, %v599
  %611 = vrot.lane.b32.xlu0 %v575, 112
  %v612 = vpop.permute.xlu0 %611
  %613 = vrot.lane.b32.xlu0 %v577, 112
  %v614 = vpop.permute.xlu0 %613
  %615 = vrot.lane.b32.xlu0 %v579, 112
  %v616 = vpop.permute.xlu0 %615
  %617 = vrot.lane.b32.xlu0 %v581, 112
  %v618 = vpop.permute.xlu0 %617
  %619 = vrot.lane.b32.xlu0 %v583, 112
  %v620 = vpop.permute.xlu0 %619
  %vm626 = vcmask 15368
  %627 = vst.msk [vmem:[#allocation3] sm:$0xff] %vm626, %v612
  %628 = vst.msk [vmem:[#allocation3 + $0x8] sm:$0xff] %vm626, %v614
  %629 = vst.msk [vmem:[#allocation3 + $0x10] sm:$0xff] %vm626, %v616
  %630 = vst.msk [vmem:[#allocation3 + $0x18] sm:$0xff] %vm626, %v618
  %631 = vst.msk [vmem:[#allocation3 + $0x20] sm:$0xff] %vm626, %v620
  %632 = vrot.lane.b32.xlu0 %v575, 103
  %v633 = vpop.permute.xlu0 %632
  %634 = vrot.lane.b32.xlu0 %v577, 103
  %v635 = vpop.permute.xlu0 %634
  %636 = vrot.lane.b32.xlu0 %v579, 103
  %v637 = vpop.permute.xlu0 %636
  %638 = vrot.lane.b32.xlu0 %v581, 103
  %v639 = vpop.permute.xlu0 %638
  %640 = vrot.lane.b32.xlu0 %v583, 103
  %v641 = vpop.permute.xlu0 %640
  %vm647 = vcmask 23568
  %648 = vst.msk [vmem:[#allocation3] sm:$0xff] %vm647, %v633
  %649 = vst.msk [vmem:[#allocation3 + $0x8] sm:$0xff] %vm647, %v635
  %650 = vst.msk [vmem:[#allocation3 + $0x10] sm:$0xff] %vm647, %v637
  %651 = vst.msk [vmem:[#allocation3 + $0x18] sm:$0xff] %vm647, %v639
  %652 = vst.msk [vmem:[#allocation3 + $0x20] sm:$0xff] %vm647, %v641
  %653 = vrot.lane.b32.xlu0 %v575, 94
  %v654 = vpop.permute.xlu0 %653
  %655 = vrot.lane.b32.xlu0 %v577, 94
  %v656 = vpop.permute.xlu0 %655
  %657 = vrot.lane.b32.xlu0 %v579, 94
  %v658 = vpop.permute.xlu0 %657
  %659 = vrot.lane.b32.xlu0 %v581, 94
  %v660 = vpop.permute.xlu0 %659
  %661 = vrot.lane.b32.xlu0 %v583, 94
  %v662 = vpop.permute.xlu0 %661
  %vm668 = vcmask 31768
  %669 = vst.msk [vmem:[#allocation3] sm:$0xff] %vm668, %v654
  %670 = vst.msk [vmem:[#allocation3 + $0x8] sm:$0xff] %vm668, %v656
  %671 = vst.msk [vmem:[#allocation3 + $0x10] sm:$0xff] %vm668, %v658
  %672 = vst.msk [vmem:[#allocation3 + $0x18] sm:$0xff] %vm668, %v660
  %673 = vst.msk [vmem:[#allocation3 + $0x20] sm:$0xff] %vm668, %v662
  %674 = vrot.lane.b32.xlu0 %v575, 85
  %v675 = vpop.permute.xlu0 %674
  %676 = vrot.lane.b32.xlu0 %v577, 85
  %v677 = vpop.permute.xlu0 %676
  %678 = vrot.lane.b32.xlu0 %v579, 85
  %v679 = vpop.permute.xlu0 %678
  %680 = vrot.lane.b32.xlu0 %v581, 85
  %v681 = vpop.permute.xlu0 %680
  %682 = vrot.lane.b32.xlu0 %v583, 85
  %v683 = vpop.permute.xlu0 %682
  %vm689 = vcmask 39968
  %690 = vst.msk [vmem:[#allocation3] sm:$0xff] %vm689, %v675
  %691 = vst.msk [vmem:[#allocation3 + $0x8] sm:$0xff] %vm689, %v677
  %692 = vst.msk [vmem:[#allocation3 + $0x10] sm:$0xff] %vm689, %v679
  %693 = vst.msk [vmem:[#allocation3 + $0x18] sm:$0xff] %vm689, %v681
  %694 = vst.msk [vmem:[#allocation3 + $0x20] sm:$0xff] %vm689, %v683
  %695 = vrot.lane.b32.xlu0 %v575, 76
  %v696 = vpop.permute.xlu0 %695
  %697 = vrot.lane.b32.xlu0 %v577, 76
  %v698 = vpop.permute.xlu0 %697
  %699 = vrot.lane.b32.xlu0 %v579, 76
  %v700 = vpop.permute.xlu0 %699
  %701 = vrot.lane.b32.xlu0 %v581, 76
  %v702 = vpop.permute.xlu0 %701
  %703 = vrot.lane.b32.xlu0 %v583, 76
  %v704 = vpop.permute.xlu0 %703
  %vm710 = vcmask 48168
  %711 = vst.msk [vmem:[#allocation3] sm:$0xff] %vm710, %v696
  %712 = vst.msk [vmem:[#allocation3 + $0x8] sm:$0xff] %vm710, %v698
  %713 = vst.msk [vmem:[#allocation3 + $0x10] sm:$0xff] %vm710, %v700
  %714 = vst.msk [vmem:[#allocation3 + $0x18] sm:$0xff] %vm710, %v702
  %715 = vst.msk [vmem:[#allocation3 + $0x20] sm:$0xff] %vm710, %v704
  %716 = vrot.lane.b32.xlu0 %v575, 67
  %v717 = vpop.permute.xlu0 %716
  %718 = vrot.lane.b32.xlu0 %v577, 67
  %v719 = vpop.permute.xlu0 %718
  %720 = vrot.lane.b32.xlu0 %v579, 67
  %v721 = vpop.permute.xlu0 %720
  %722 = vrot.lane.b32.xlu0 %v581, 67
  %v723 = vpop.permute.xlu0 %722
  %724 = vrot.lane.b32.xlu0 %v583, 67
  %v725 = vpop.permute.xlu0 %724
  %vm731 = vcmask 56368
  %732 = vst.msk [vmem:[#allocation3] sm:$0xff] %vm731, %v717
  %733 = vst.msk [vmem:[#allocation3 + $0x8] sm:$0xff] %vm731, %v719
  %734 = vst.msk [vmem:[#allocation3 + $0x10] sm:$0xff] %vm731, %v721
  %735 = vst.msk [vmem:[#allocation3 + $0x18] sm:$0xff] %vm731, %v723
  %736 = vst.msk [vmem:[#allocation3 + $0x20] sm:$0xff] %vm731, %v725
  %737 = vrot.lane.b32.xlu0 %v575, 58
  %v738 = vpop.permute.xlu0 %737
  %739 = vrot.lane.b32.xlu0 %v577, 58
  %v740 = vpop.permute.xlu0 %739
  %741 = vrot.lane.b32.xlu0 %v579, 58
  %v742 = vpop.permute.xlu0 %741
  %743 = vrot.lane.b32.xlu0 %v581, 58
  %v744 = vpop.permute.xlu0 %743
  %745 = vrot.lane.b32.xlu0 %v583, 58
  %v746 = vpop.permute.xlu0 %745
  %vm752 = vcmask 64568
  %753 = vst.msk [vmem:[#allocation3] sm:$0xff] %vm752, %v738
  %754 = vst.msk [vmem:[#allocation3 + $0x8] sm:$0xff] %vm752, %v740
  %755 = vst.msk [vmem:[#allocation3 + $0x10] sm:$0xff] %vm752, %v742
  %756 = vst.msk [vmem:[#allocation3 + $0x18] sm:$0xff] %vm752, %v744
  %757 = vst.msk [vmem:[#allocation3 + $0x20] sm:$0xff] %vm752, %v746
  %758 = vrot.lane.b32.xlu0 %v575, 49
  %v759 = vpop.permute.xlu0 %758
  %760 = vrot.lane.b32.xlu0 %v577, 49
  %v761 = vpop.permute.xlu0 %760
  %762 = vrot.lane.b32.xlu0 %v579, 49
  %v763 = vpop.permute.xlu0 %762
  %764 = vrot.lane.b32.xlu0 %v581, 49
  %v765 = vpop.permute.xlu0 %764
  %766 = vrot.lane.b32.xlu0 %v583, 49
  %v767 = vpop.permute.xlu0 %766
  %vm773 = vcmask 72768
  %774 = vst.msk [vmem:[#allocation3] sm:$0xff] %vm773, %v759
  %775 = vst.msk [vmem:[#allocation3 + $0x8] sm:$0xff] %vm773, %v761
  %776 = vst.msk [vmem:[#allocation3 + $0x10] sm:$0xff] %vm773, %v763
  %777 = vst.msk [vmem:[#allocation3 + $0x18] sm:$0xff] %vm773, %v765
  %778 = vst.msk [vmem:[#allocation3 + $0x20] sm:$0xff] %vm773, %v767
  %779 = vrot.lane.b32.xlu0 %v575, 40
  %v780 = vpop.permute.xlu0 %779
  %781 = vrot.lane.b32.xlu0 %v577, 40
  %v782 = vpop.permute.xlu0 %781
  %783 = vrot.lane.b32.xlu0 %v579, 40
  %v784 = vpop.permute.xlu0 %783
  %785 = vrot.lane.b32.xlu0 %v581, 40
  %v786 = vpop.permute.xlu0 %785
  %787 = vrot.lane.b32.xlu0 %v583, 40
  %v788 = vpop.permute.xlu0 %787
  %vm794 = vcmask 80968
  %795 = vst.msk [vmem:[#allocation3] sm:$0xff] %vm794, %v780
  %796 = vst.msk [vmem:[#allocation3 + $0x8] sm:$0xff] %vm794, %v782
  %797 = vst.msk [vmem:[#allocation3 + $0x10] sm:$0xff] %vm794, %v784
  %798 = vst.msk [vmem:[#allocation3 + $0x18] sm:$0xff] %vm794, %v786
  %799 = vst.msk [vmem:[#allocation3 + $0x20] sm:$0xff] %vm794, %v788
  %800 = vrot.lane.b32.xlu0 %v575, 31
  %v801 = vpop.permute.xlu0 %800
  %802 = vrot.lane.b32.xlu0 %v577, 31
  %v803 = vpop.permute.xlu0 %802
  %804 = vrot.lane.b32.xlu0 %v579, 31
  %v805 = vpop.permute.xlu0 %804
  %806 = vrot.lane.b32.xlu0 %v581, 31
  %v807 = vpop.permute.xlu0 %806
  %808 = vrot.lane.b32.xlu0 %v583, 31
  %v809 = vpop.permute.xlu0 %808
  %vm815 = vcmask 89168
  %816 = vst.msk [vmem:[#allocation3] sm:$0xff] %vm815, %v801
  %817 = vst.msk [vmem:[#allocation3 + $0x8] sm:$0xff] %vm815, %v803
  %818 = vst.msk [vmem:[#allocation3 + $0x10] sm:$0xff] %vm815, %v805
  %819 = vst.msk [vmem:[#allocation3 + $0x18] sm:$0xff] %vm815, %v807
  %820 = vst.msk [vmem:[#allocation3 + $0x20] sm:$0xff] %vm815, %v809
  %821 = vrot.lane.b32.xlu0 %v575, 22
  %v822 = vpop.permute.xlu0 %821
  %823 = vrot.lane.b32.xlu0 %v577, 22
  %v824 = vpop.permute.xlu0 %823
  %825 = vrot.lane.b32.xlu0 %v579, 22
  %v826 = vpop.permute.xlu0 %825
  %827 = vrot.lane.b32.xlu0 %v581, 22
  %v828 = vpop.permute.xlu0 %827
  %829 = vrot.lane.b32.xlu0 %v583, 22
  %v830 = vpop.permute.xlu0 %829
  %vm836 = vcmask 97368
  %837 = vst.msk [vmem:[#allocation3] sm:$0xff] %vm836, %v822
  %838 = vst.msk [vmem:[#allocation3 + $0x8] sm:$0xff] %vm836, %v824
  %839 = vst.msk [vmem:[#allocation3 + $0x10] sm:$0xff] %vm836, %v826
  %840 = vst.msk [vmem:[#allocation3 + $0x18] sm:$0xff] %vm836, %v828
  %841 = vst.msk [vmem:[#allocation3 + $0x20] sm:$0xff] %vm836, %v830
  %842 = vrot.lane.b32.xlu0 %v575, 13
  %v843 = vpop.permute.xlu0 %842
  %844 = vrot.lane.b32.xlu0 %v577, 13
  %v845 = vpop.permute.xlu0 %844
  %846 = vrot.lane.b32.xlu0 %v579, 13
  %v847 = vpop.permute.xlu0 %846
  %848 = vrot.lane.b32.xlu0 %v581, 13
  %v849 = vpop.permute.xlu0 %848
  %850 = vrot.lane.b32.xlu0 %v583, 13
  %v851 = vpop.permute.xlu0 %850
  %vm857 = vcmask 105568
  %858 = vst.msk [vmem:[#allocation3] sm:$0xff] %vm857, %v843
  %859 = vst.msk [vmem:[#allocation3 + $0x8] sm:$0xff] %vm857, %v845
  %860 = vst.msk [vmem:[#allocation3 + $0x10] sm:$0xff] %vm857, %v847
  %861 = vst.msk [vmem:[#allocation3 + $0x18] sm:$0xff] %vm857, %v849
  %862 = vst.msk [vmem:[#allocation3 + $0x20] sm:$0xff] %vm857, %v851
  %868 = vrot.lane.b32.xlu0 %v576, 4
  %v869 = vpop.permute.xlu0 %868
  %870 = vrot.lane.b32.xlu0 %v578, 4
  %v871 = vpop.permute.xlu0 %870
  %872 = vrot.lane.b32.xlu0 %v580, 4
  %v873 = vpop.permute.xlu0 %872
  %874 = vrot.lane.b32.xlu0 %v582, 4
  %v875 = vpop.permute.xlu0 %874
  %876 = vrot.lane.b32.xlu0 %v584, 4
  %v877 = vpop.permute.xlu0 %876
  %vm883 = vcmask 113768
  %884 = vst.msk [vmem:[#allocation3] sm:$0xff] %vm883, %v869
  %885 = vst.msk [vmem:[#allocation3 + $0x8] sm:$0xff] %vm883, %v871
  %886 = vst.msk [vmem:[#allocation3 + $0x10] sm:$0xff] %vm883, %v873
  %887 = vst.msk [vmem:[#allocation3 + $0x18] sm:$0xff] %vm883, %v875
  %888 = vst.msk [vmem:[#allocation3 + $0x20] sm:$0xff] %vm883, %v877
  %889 = vrot.lane.b32.xlu0 %v576, 123
  %v890 = vpop.permute.xlu0 %889
  %891 = vrot.lane.b32.xlu0 %v578, 123
  %v892 = vpop.permute.xlu0 %891
  %893 = vrot.lane.b32.xlu0 %v580, 123
  %v894 = vpop.permute.xlu0 %893
  %895 = vrot.lane.b32.xlu0 %v582, 123
  %v896 = vpop.permute.xlu0 %895
  %897 = vrot.lane.b32.xlu0 %v584, 123
  %v898 = vpop.permute.xlu0 %897
  %vm904 = vcmask 121968
  %905 = vst.msk [vmem:[#allocation3] sm:$0xff] %vm904, %v890
  %906 = vst.msk [vmem:[#allocation3 + $0x8] sm:$0xff] %vm904, %v892
  %907 = vst.msk [vmem:[#allocation3 + $0x10] sm:$0xff] %vm904, %v894
  %908 = vst.msk [vmem:[#allocation3 + $0x18] sm:$0xff] %vm904, %v896
  %909 = vst.msk [vmem:[#allocation3 + $0x20] sm:$0xff] %vm904, %v898
  %910 = vrot.lane.b32.xlu0 %v576, 114
  %v911 = vpop.permute.xlu0 %910
  %912 = vrot.lane.b32.xlu0 %v578, 114
  %v913 = vpop.permute.xlu0 %912
  %914 = vrot.lane.b32.xlu0 %v580, 114
  %v915 = vpop.permute.xlu0 %914
  %916 = vrot.lane.b32.xlu0 %v582, 114
  %v917 = vpop.permute.xlu0 %916
  %918 = vrot.lane.b32.xlu0 %v584, 114
  %v919 = vpop.permute.xlu0 %918
  %vm925 = vcmask 130168
  %926 = vst.msk [vmem:[#allocation3] sm:$0xff] %vm925, %v911
  %927 = vst.msk [vmem:[#allocation3 + $0x8] sm:$0xff] %vm925, %v913
  %928 = vst.msk [vmem:[#allocation3 + $0x10] sm:$0xff] %vm925, %v915
  %929 = vst.msk [vmem:[#allocation3 + $0x18] sm:$0xff] %vm925, %v917
  %930 = vst.msk [vmem:[#allocation3 + $0x20] sm:$0xff] %vm925, %v919
  %s931 = scalar_lea.vmem %s1, 360
  %v932 = vld [vmem:[%s931] sm:$0xff]
  %v933 = vld [vmem:[%s931 + $0x8] sm:$0xff]
  %v934 = vld [vmem:[%s931 + $0x10] sm:$0xff]
  %v935 = vld [vmem:[%s931 + $0x18] sm:$0xff]
  %v936 = vld [vmem:[%s931 + $0x20] sm:$0xff]
  %938 = vset.pattern.permute.xlu0 0
  %939 = vperm.xlu0 %938, %v932
  %v940 = vpop.permute.xlu0 %939
  %943 = vset.pattern.permute.xlu0 0
  %944 = vperm.xlu0 %943, %v933
  %v945 = vpop.permute.xlu0 %944
  %948 = vset.pattern.permute.xlu0 0
  %949 = vperm.xlu0 %948, %v934
  %v950 = vpop.permute.xlu0 %949
  %953 = vset.pattern.permute.xlu0 0
  %954 = vperm.xlu0 %953, %v935
  %v955 = vpop.permute.xlu0 %954
  %958 = vset.pattern.permute.xlu0 0
  %959 = vperm.xlu0 %958, %v936
  %v960 = vpop.permute.xlu0 %959
  %v962 = vmul.f32 %v940, %v79
  %v963 = vmul.f32 %v940, %v80
  %v964 = vmul.f32 %v945, %v81
  %v965 = vmul.f32 %v945, %v82
  %v966 = vmul.f32 %v950, %v83
  %v967 = vmul.f32 %v950, %v84
  %v968 = vmul.f32 %v955, %v85
  %v969 = vmul.f32 %v955, %v86
  %v970 = vmul.f32 %v960, %v87
  %v971 = vmul.f32 %v960, %v88
  %s972 = scalar_lea.vmem %s1, 400
  %v973 = vld [vmem:[%s972] sm:$0xff]
  %v974 = vld [vmem:[%s972 + $0x8] sm:$0xff]
  %v975 = vld [vmem:[%s972 + $0x10] sm:$0xff]
  %v976 = vld [vmem:[%s972 + $0x18] sm:$0xff]
  %v977 = vld [vmem:[%s972 + $0x20] sm:$0xff]
  %979 = vset.pattern.permute.xlu0 0
  %980 = vperm.xlu0 %979, %v973
  %v981 = vpop.permute.xlu0 %980
  %984 = vset.pattern.permute.xlu0 0
  %985 = vperm.xlu0 %984, %v974
  %v986 = vpop.permute.xlu0 %985
  %989 = vset.pattern.permute.xlu0 0
  %990 = vperm.xlu0 %989, %v975
  %v991 = vpop.permute.xlu0 %990
  %994 = vset.pattern.permute.xlu0 0
  %995 = vperm.xlu0 %994, %v976
  %v996 = vpop.permute.xlu0 %995
  %999 = vset.pattern.permute.xlu0 0
  %1000 = vperm.xlu0 %999, %v977
  %v1001 = vpop.permute.xlu0 %1000
  %v1003 = vmul.f32 %v981, %v79
  %v1004 = vmul.f32 %v981, %v80
  %v1005 = vmul.f32 %v986, %v81
  %v1006 = vmul.f32 %v986, %v82
  %v1007 = vmul.f32 %v991, %v83
  %v1008 = vmul.f32 %v991, %v84
  %v1009 = vmul.f32 %v996, %v85
  %v1010 = vmul.f32 %v996, %v86
  %v1011 = vmul.f32 %v1001, %v87
  %v1012 = vmul.f32 %v1001, %v88
  %1023 = vrot.lane.b32.xlu0 %v1003, 127
  %v1024 = vpop.permute.xlu0 %1023
  %1025 = vrot.lane.b32.xlu0 %v1004, 127
  %v1026 = vpop.permute.xlu0 %1025
  %1027 = vrot.lane.b32.xlu0 %v1005, 127
  %v1028 = vpop.permute.xlu0 %1027
  %1029 = vrot.lane.b32.xlu0 %v1006, 127
  %v1030 = vpop.permute.xlu0 %1029
  %1031 = vrot.lane.b32.xlu0 %v1007, 127
  %v1032 = vpop.permute.xlu0 %1031
  %1033 = vrot.lane.b32.xlu0 %v1008, 127
  %v1034 = vpop.permute.xlu0 %1033
  %1035 = vrot.lane.b32.xlu0 %v1009, 127
  %v1036 = vpop.permute.xlu0 %1035
  %1037 = vrot.lane.b32.xlu0 %v1010, 127
  %v1038 = vpop.permute.xlu0 %1037
  %1039 = vrot.lane.b32.xlu0 %v1011, 127
  %v1040 = vpop.permute.xlu0 %1039
  %1041 = vrot.lane.b32.xlu0 %v1012, 127
  %v1042 = vpop.permute.xlu0 %1041
  %v1043 = vsel %vm200, %v1024, %v1026
  %v1044 = vsel %vm200, %v1028, %v1030
  %v1045 = vsel %vm200, %v1032, %v1034
  %v1046 = vsel %vm200, %v1036, %v1038
  %v1047 = vsel %vm200, %v1040, %v1042
  %v1058 = vadd.f32 %v962, %v1043
  %v1059 = vadd.f32 %v963, %v1026
  %v1060 = vadd.f32 %v964, %v1044
  %v1061 = vadd.f32 %v965, %v1030
  %v1062 = vadd.f32 %v966, %v1045
  %v1063 = vadd.f32 %v967, %v1034
  %v1064 = vadd.f32 %v968, %v1046
  %v1065 = vadd.f32 %v969, %v1038
  %v1066 = vadd.f32 %v970, %v1047
  %v1067 = vadd.f32 %v971, %v1042
  %s1068 = scalar_lea.vmem %s1, 440
  %v1069 = vld [vmem:[%s1068] sm:$0xff]
  %v1070 = vld [vmem:[%s1068 + $0x8] sm:$0xff]
  %v1071 = vld [vmem:[%s1068 + $0x10] sm:$0xff]
  %v1072 = vld [vmem:[%s1068 + $0x18] sm:$0xff]
  %v1073 = vld [vmem:[%s1068 + $0x20] sm:$0xff]
  %1075 = vset.pattern.permute.xlu0 0
  %1076 = vperm.xlu0 %1075, %v1069
  %v1077 = vpop.permute.xlu0 %1076
  %1080 = vset.pattern.permute.xlu0 0
  %1081 = vperm.xlu0 %1080, %v1070
  %v1082 = vpop.permute.xlu0 %1081
  %1085 = vset.pattern.permute.xlu0 0
  %1086 = vperm.xlu0 %1085, %v1071
  %v1087 = vpop.permute.xlu0 %1086
  %1090 = vset.pattern.permute.xlu0 0
  %1091 = vperm.xlu0 %1090, %v1072
  %v1092 = vpop.permute.xlu0 %1091
  %1095 = vset.pattern.permute.xlu0 0
  %1096 = vperm.xlu0 %1095, %v1073
  %v1097 = vpop.permute.xlu0 %1096
  %v1099 = vmul.f32 %v1077, %v79
  %v1100 = vmul.f32 %v1077, %v80
  %v1101 = vmul.f32 %v1082, %v81
  %v1102 = vmul.f32 %v1082, %v82
  %v1103 = vmul.f32 %v1087, %v83
  %v1104 = vmul.f32 %v1087, %v84
  %v1105 = vmul.f32 %v1092, %v85
  %v1106 = vmul.f32 %v1092, %v86
  %v1107 = vmul.f32 %v1097, %v87
  %v1108 = vmul.f32 %v1097, %v88
  %1119 = vrot.lane.b32.xlu0 %v1099, 126
  %v1120 = vpop.permute.xlu0 %1119
  %1121 = vrot.lane.b32.xlu0 %v1100, 126
  %v1122 = vpop.permute.xlu0 %1121
  %1123 = vrot.lane.b32.xlu0 %v1101, 126
  %v1124 = vpop.permute.xlu0 %1123
  %1125 = vrot.lane.b32.xlu0 %v1102, 126
  %v1126 = vpop.permute.xlu0 %1125
  %1127 = vrot.lane.b32.xlu0 %v1103, 126
  %v1128 = vpop.permute.xlu0 %1127
  %1129 = vrot.lane.b32.xlu0 %v1104, 126
  %v1130 = vpop.permute.xlu0 %1129
  %1131 = vrot.lane.b32.xlu0 %v1105, 126
  %v1132 = vpop.permute.xlu0 %1131
  %1133 = vrot.lane.b32.xlu0 %v1106, 126
  %v1134 = vpop.permute.xlu0 %1133
  %1135 = vrot.lane.b32.xlu0 %v1107, 126
  %v1136 = vpop.permute.xlu0 %1135
  %1137 = vrot.lane.b32.xlu0 %v1108, 126
  %v1138 = vpop.permute.xlu0 %1137
  %v1139 = vsel %vm297, %v1120, %v1122
  %v1140 = vsel %vm297, %v1124, %v1126
  %v1141 = vsel %vm297, %v1128, %v1130
  %v1142 = vsel %vm297, %v1132, %v1134
  %v1143 = vsel %vm297, %v1136, %v1138
  %v1154 = vadd.f32 %v1058, %v1139
  %v1155 = vadd.f32 %v1059, %v1122
  %v1156 = vadd.f32 %v1060, %v1140
  %v1157 = vadd.f32 %v1061, %v1126
  %v1158 = vadd.f32 %v1062, %v1141
  %v1159 = vadd.f32 %v1063, %v1130
  %v1160 = vadd.f32 %v1064, %v1142
  %v1161 = vadd.f32 %v1065, %v1134
  %v1162 = vadd.f32 %v1066, %v1143
  %v1163 = vadd.f32 %v1067, %v1138
  %s1164 = scalar_lea.vmem %s1, 480
  %v1165 = vld [vmem:[%s1164] sm:$0xff]
  %v1166 = vld [vmem:[%s1164 + $0x8] sm:$0xff]
  %v1167 = vld [vmem:[%s1164 + $0x10] sm:$0xff]
  %v1168 = vld [vmem:[%s1164 + $0x18] sm:$0xff]
  %v1169 = vld [vmem:[%s1164 + $0x20] sm:$0xff]
  %1171 = vset.pattern.permute.xlu0 0
  %1172 = vperm.xlu0 %1171, %v1165
  %v1173 = vpop.permute.xlu0 %1172
  %1176 = vset.pattern.permute.xlu0 0
  %1177 = vperm.xlu0 %1176, %v1166
  %v1178 = vpop.permute.xlu0 %1177
  %1181 = vset.pattern.permute.xlu0 0
  %1182 = vperm.xlu0 %1181, %v1167
  %v1183 = vpop.permute.xlu0 %1182
  %1186 = vset.pattern.permute.xlu0 0
  %1187 = vperm.xlu0 %1186, %v1168
  %v1188 = vpop.permute.xlu0 %1187
  %1191 = vset.pattern.permute.xlu0 0
  %1192 = vperm.xlu0 %1191, %v1169
  %v1193 = vpop.permute.xlu0 %1192
  %v1195 = vmul.f32 %v1173, %v79
  %v1196 = vmul.f32 %v1173, %v80
  %v1197 = vmul.f32 %v1178, %v81
  %v1198 = vmul.f32 %v1178, %v82
  %v1199 = vmul.f32 %v1183, %v83
  %v1200 = vmul.f32 %v1183, %v84
  %v1201 = vmul.f32 %v1188, %v85
  %v1202 = vmul.f32 %v1188, %v86
  %v1203 = vmul.f32 %v1193, %v87
  %v1204 = vmul.f32 %v1193, %v88
  %1215 = vrot.lane.b32.xlu0 %v1195, 125
  %v1216 = vpop.permute.xlu0 %1215
  %1217 = vrot.lane.b32.xlu0 %v1196, 125
  %v1218 = vpop.permute.xlu0 %1217
  %1219 = vrot.lane.b32.xlu0 %v1197, 125
  %v1220 = vpop.permute.xlu0 %1219
  %1221 = vrot.lane.b32.xlu0 %v1198, 125
  %v1222 = vpop.permute.xlu0 %1221
  %1223 = vrot.lane.b32.xlu0 %v1199, 125
  %v1224 = vpop.permute.xlu0 %1223
  %1225 = vrot.lane.b32.xlu0 %v1200, 125
  %v1226 = vpop.permute.xlu0 %1225
  %1227 = vrot.lane.b32.xlu0 %v1201, 125
  %v1228 = vpop.permute.xlu0 %1227
  %1229 = vrot.lane.b32.xlu0 %v1202, 125
  %v1230 = vpop.permute.xlu0 %1229
  %1231 = vrot.lane.b32.xlu0 %v1203, 125
  %v1232 = vpop.permute.xlu0 %1231
  %1233 = vrot.lane.b32.xlu0 %v1204, 125
  %v1234 = vpop.permute.xlu0 %1233
  %vm1235 = vcmask 1022976
  %v1236 = vsel %vm1235, %v1216, %v1218
  %v1237 = vsel %vm1235, %v1220, %v1222
  %v1238 = vsel %vm1235, %v1224, %v1226
  %v1239 = vsel %vm1235, %v1228, %v1230
  %v1240 = vsel %vm1235, %v1232, %v1234
  %v1251 = vadd.f32 %v1154, %v1236
  %v1252 = vadd.f32 %v1155, %v1218
  %v1253 = vadd.f32 %v1156, %v1237
  %v1254 = vadd.f32 %v1157, %v1222
  %v1255 = vadd.f32 %v1158, %v1238
  %v1256 = vadd.f32 %v1159, %v1226
  %v1257 = vadd.f32 %v1160, %v1239
  %v1258 = vadd.f32 %v1161, %v1230
  %v1259 = vadd.f32 %v1162, %v1240
  %v1260 = vadd.f32 %v1163, %v1234
  %s1261 = scalar_lea.vmem %s1, 520
  %v1262 = vld [vmem:[%s1261] sm:$0xff]
  %v1263 = vld [vmem:[%s1261 + $0x8] sm:$0xff]
  %v1264 = vld [vmem:[%s1261 + $0x10] sm:$0xff]
  %v1265 = vld [vmem:[%s1261 + $0x18] sm:$0xff]
  %v1266 = vld [vmem:[%s1261 + $0x20] sm:$0xff]
  %1268 = vset.pattern.permute.xlu0 0
  %1269 = vperm.xlu0 %1268, %v1262
  %v1270 = vpop.permute.xlu0 %1269
  %1273 = vset.pattern.permute.xlu0 0
  %1274 = vperm.xlu0 %1273, %v1263
  %v1275 = vpop.permute.xlu0 %1274
  %1278 = vset.pattern.permute.xlu0 0
  %1279 = vperm.xlu0 %1278, %v1264
  %v1280 = vpop.permute.xlu0 %1279
  %1283 = vset.pattern.permute.xlu0 0
  %1284 = vperm.xlu0 %1283, %v1265
  %v1285 = vpop.permute.xlu0 %1284
  %1288 = vset.pattern.permute.xlu0 0
  %1289 = vperm.xlu0 %1288, %v1266
  %v1290 = vpop.permute.xlu0 %1289
  %v1292 = vmul.f32 %v1270, %v79
  %v1293 = vmul.f32 %v1270, %v80
  %v1294 = vmul.f32 %v1275, %v81
  %v1295 = vmul.f32 %v1275, %v82
  %v1296 = vmul.f32 %v1280, %v83
  %v1297 = vmul.f32 %v1280, %v84
  %v1298 = vmul.f32 %v1285, %v85
  %v1299 = vmul.f32 %v1285, %v86
  %v1300 = vmul.f32 %v1290, %v87
  %v1301 = vmul.f32 %v1290, %v88
  %1312 = vrot.lane.b32.xlu0 %v1292, 124
  %v1313 = vpop.permute.xlu0 %1312
  %1314 = vrot.lane.b32.xlu0 %v1293, 124
  %v1315 = vpop.permute.xlu0 %1314
  %1316 = vrot.lane.b32.xlu0 %v1294, 124
  %v1317 = vpop.permute.xlu0 %1316
  %1318 = vrot.lane.b32.xlu0 %v1295, 124
  %v1319 = vpop.permute.xlu0 %1318
  %1320 = vrot.lane.b32.xlu0 %v1296, 124
  %v1321 = vpop.permute.xlu0 %1320
  %1322 = vrot.lane.b32.xlu0 %v1297, 124
  %v1323 = vpop.permute.xlu0 %1322
  %1324 = vrot.lane.b32.xlu0 %v1298, 124
  %v1325 = vpop.permute.xlu0 %1324
  %1326 = vrot.lane.b32.xlu0 %v1299, 124
  %v1327 = vpop.permute.xlu0 %1326
  %1328 = vrot.lane.b32.xlu0 %v1300, 124
  %v1329 = vpop.permute.xlu0 %1328
  %1330 = vrot.lane.b32.xlu0 %v1301, 124
  %v1331 = vpop.permute.xlu0 %1330
  %v1332 = vsel %vm513, %v1313, %v1315
  %v1333 = vsel %vm513, %v1317, %v1319
  %v1334 = vsel %vm513, %v1321, %v1323
  %v1335 = vsel %vm513, %v1325, %v1327
  %v1336 = vsel %vm513, %v1329, %v1331
  %v1347 = vadd.f32 %v1251, %v1332
  %v1348 = vadd.f32 %v1252, %v1315
  %v1349 = vadd.f32 %v1253, %v1333
  %v1350 = vadd.f32 %v1254, %v1319
  %v1351 = vadd.f32 %v1255, %v1334
  %v1352 = vadd.f32 %v1256, %v1323
  %v1353 = vadd.f32 %v1257, %v1335
  %v1354 = vadd.f32 %v1258, %v1327
  %v1355 = vadd.f32 %v1259, %v1336
  %v1356 = vadd.f32 %v1260, %v1331
  %s1357 = scalar_lea.vmem %s1, 560
  %v1358 = vld [vmem:[%s1357] sm:$0xff]
  %v1359 = vld [vmem:[%s1357 + $0x8] sm:$0xff]
  %v1360 = vld [vmem:[%s1357 + $0x10] sm:$0xff]
  %v1361 = vld [vmem:[%s1357 + $0x18] sm:$0xff]
  %v1362 = vld [vmem:[%s1357 + $0x20] sm:$0xff]
  %1364 = vset.pattern.permute.xlu0 0
  %1365 = vperm.xlu0 %1364, %v1358
  %v1366 = vpop.permute.xlu0 %1365
  %1369 = vset.pattern.permute.xlu0 0
  %1370 = vperm.xlu0 %1369, %v1359
  %v1371 = vpop.permute.xlu0 %1370
  %1374 = vset.pattern.permute.xlu0 0
  %1375 = vperm.xlu0 %1374, %v1360
  %v1376 = vpop.permute.xlu0 %1375
  %1379 = vset.pattern.permute.xlu0 0
  %1380 = vperm.xlu0 %1379, %v1361
  %v1381 = vpop.permute.xlu0 %1380
  %1384 = vset.pattern.permute.xlu0 0
  %1385 = vperm.xlu0 %1384, %v1362
  %v1386 = vpop.permute.xlu0 %1385
  %v1388 = vmul.f32 %v1366, %v79
  %v1389 = vmul.f32 %v1366, %v80
  %v1390 = vmul.f32 %v1371, %v81
  %v1391 = vmul.f32 %v1371, %v82
  %v1392 = vmul.f32 %v1376, %v83
  %v1393 = vmul.f32 %v1376, %v84
  %v1394 = vmul.f32 %v1381, %v85
  %v1395 = vmul.f32 %v1381, %v86
  %v1396 = vmul.f32 %v1386, %v87
  %v1397 = vmul.f32 %v1386, %v88
  %1408 = vrot.lane.b32.xlu0 %v1388, 123
  %v1409 = vpop.permute.xlu0 %1408
  %1410 = vrot.lane.b32.xlu0 %v1389, 123
  %v1411 = vpop.permute.xlu0 %1410
  %1412 = vrot.lane.b32.xlu0 %v1390, 123
  %v1413 = vpop.permute.xlu0 %1412
  %1414 = vrot.lane.b32.xlu0 %v1391, 123
  %v1415 = vpop.permute.xlu0 %1414
  %1416 = vrot.lane.b32.xlu0 %v1392, 123
  %v1417 = vpop.permute.xlu0 %1416
  %1418 = vrot.lane.b32.xlu0 %v1393, 123
  %v1419 = vpop.permute.xlu0 %1418
  %1420 = vrot.lane.b32.xlu0 %v1394, 123
  %v1421 = vpop.permute.xlu0 %1420
  %1422 = vrot.lane.b32.xlu0 %v1395, 123
  %v1423 = vpop.permute.xlu0 %1422
  %1424 = vrot.lane.b32.xlu0 %v1396, 123
  %v1425 = vpop.permute.xlu0 %1424
  %1426 = vrot.lane.b32.xlu0 %v1397, 123
  %v1427 = vpop.permute.xlu0 %1426
  %vm1428 = vcmask 1006592
  %v1429 = vsel %vm1428, %v1409, %v1411
  %v1430 = vsel %vm1428, %v1413, %v1415
  %v1431 = vsel %vm1428, %v1417, %v1419
  %v1432 = vsel %vm1428, %v1421, %v1423
  %v1433 = vsel %vm1428, %v1425, %v1427
  %v1444 = vadd.f32 %v1347, %v1429
  %v1445 = vadd.f32 %v1348, %v1411
  %v1446 = vadd.f32 %v1349, %v1430
  %v1447 = vadd.f32 %v1350, %v1415
  %v1448 = vadd.f32 %v1351, %v1431
  %v1449 = vadd.f32 %v1352, %v1419
  %v1450 = vadd.f32 %v1353, %v1432
  %v1451 = vadd.f32 %v1354, %v1423
  %v1452 = vadd.f32 %v1355, %v1433
  %v1453 = vadd.f32 %v1356, %v1427
  %s1454 = scalar_lea.vmem %s2, 40
  %v1455 = vld [vmem:[%s1454] sm:$0xff]
  %v1456 = vld [vmem:[%s1454 + $0x8] sm:$0xff]
  %v1457 = vld [vmem:[%s1454 + $0x10] sm:$0xff]
  %v1458 = vld [vmem:[%s1454 + $0x18] sm:$0xff]
  %v1459 = vld [vmem:[%s1454 + $0x20] sm:$0xff]
  %1461 = vset.pattern.permute.xlu0 0
  %1462 = vperm.xlu0 %1461, %v1455
  %v1463 = vpop.permute.xlu0 %1462
  %1466 = vset.pattern.permute.xlu0 0
  %1467 = vperm.xlu0 %1466, %v1456
  %v1468 = vpop.permute.xlu0 %1467
  %1471 = vset.pattern.permute.xlu0 0
  %1472 = vperm.xlu0 %1471, %v1457
  %v1473 = vpop.permute.xlu0 %1472
  %1476 = vset.pattern.permute.xlu0 0
  %1477 = vperm.xlu0 %1476, %v1458
  %v1478 = vpop.permute.xlu0 %1477
  %1481 = vset.pattern.permute.xlu0 0
  %1482 = vperm.xlu0 %1481, %v1459
  %v1483 = vpop.permute.xlu0 %1482
  %v1485 = vadd.f32 %v1444, %v1463
  %v1486 = vadd.f32 %v1445, %v1463
  %v1487 = vadd.f32 %v1446, %v1468
  %v1488 = vadd.f32 %v1447, %v1468
  %v1489 = vadd.f32 %v1448, %v1473
  %v1490 = vadd.f32 %v1449, %v1473
  %v1491 = vadd.f32 %v1450, %v1478
  %v1492 = vadd.f32 %v1451, %v1478
  %v1493 = vadd.f32 %v1452, %v1483
  %v1494 = vadd.f32 %v1453, %v1483
  %v1495 = vmax.f32 %v1485, 0.0
  %v1496 = vmax.f32 %v1486, 0.0
  %v1497 = vmax.f32 %v1487, 0.0
  %v1498 = vmax.f32 %v1488, 0.0
  %v1499 = vmax.f32 %v1489, 0.0
  %v1500 = vmax.f32 %v1490, 0.0
  %v1501 = vmax.f32 %v1491, 0.0
  %v1502 = vmax.f32 %v1492, 0.0
  %v1503 = vmax.f32 %v1493, 0.0
  %v1504 = vmax.f32 %v1494, 0.0
  %1515 = vrot.lane.b32.xlu0 %v1495, 127
  %v1516 = vpop.permute.xlu0 %1515
  %1517 = vrot.lane.b32.xlu0 %v1496, 127
  %v1518 = vpop.permute.xlu0 %1517
  %1519 = vrot.lane.b32.xlu0 %v1497, 127
  %v1520 = vpop.permute.xlu0 %1519
  %1521 = vrot.lane.b32.xlu0 %v1498, 127
  %v1522 = vpop.permute.xlu0 %1521
  %1523 = vrot.lane.b32.xlu0 %v1499, 127
  %v1524 = vpop.permute.xlu0 %1523
  %1525 = vrot.lane.b32.xlu0 %v1500, 127
  %v1526 = vpop.permute.xlu0 %1525
  %1527 = vrot.lane.b32.xlu0 %v1501, 127
  %v1528 = vpop.permute.xlu0 %1527
  %1529 = vrot.lane.b32.xlu0 %v1502, 127
  %v1530 = vpop.permute.xlu0 %1529
  %1531 = vrot.lane.b32.xlu0 %v1503, 127
  %v1532 = vpop.permute.xlu0 %1531
  %1533 = vrot.lane.b32.xlu0 %v1504, 127
  %v1534 = vpop.permute.xlu0 %1533
  %v1535 = vsel %vm200, %v1516, %v1518
  %v1536 = vsel %vm200, %v1520, %v1522
  %v1537 = vsel %vm200, %v1524, %v1526
  %v1538 = vsel %vm200, %v1528, %v1530
  %v1539 = vsel %vm200, %v1532, %v1534
  %v1550 = vmax.f32 %v1495, %v1535
  %v1551 = vmax.f32 %v1496, %v1518
  %v1552 = vmax.f32 %v1497, %v1536
  %v1553 = vmax.f32 %v1498, %v1522
  %v1554 = vmax.f32 %v1499, %v1537
  %v1555 = vmax.f32 %v1500, %v1526
  %v1556 = vmax.f32 %v1501, %v1538
  %v1557 = vmax.f32 %v1502, %v1530
  %v1558 = vmax.f32 %v1503, %v1539
  %v1559 = vmax.f32 %v1504, %v1534
  %1570 = vrot.lane.b32.xlu0 %v1550, 126
  %v1571 = vpop.permute.xlu0 %1570
  %1572 = vrot.lane.b32.xlu0 %v1551, 126
  %v1573 = vpop.permute.xlu0 %1572
  %1574 = vrot.lane.b32.xlu0 %v1552, 126
  %v1575 = vpop.permute.xlu0 %1574
  %1576 = vrot.lane.b32.xlu0 %v1553, 126
  %v1577 = vpop.permute.xlu0 %1576
  %1578 = vrot.lane.b32.xlu0 %v1554, 126
  %v1579 = vpop.permute.xlu0 %1578
  %1580 = vrot.lane.b32.xlu0 %v1555, 126
  %v1581 = vpop.permute.xlu0 %1580
  %1582 = vrot.lane.b32.xlu0 %v1556, 126
  %v1583 = vpop.permute.xlu0 %1582
  %1584 = vrot.lane.b32.xlu0 %v1557, 126
  %v1585 = vpop.permute.xlu0 %1584
  %1586 = vrot.lane.b32.xlu0 %v1558, 126
  %v1587 = vpop.permute.xlu0 %1586
  %1588 = vrot.lane.b32.xlu0 %v1559, 126
  %v1589 = vpop.permute.xlu0 %1588
  %v1590 = vsel %vm297, %v1571, %v1573
  %v1591 = vsel %vm297, %v1575, %v1577
  %v1592 = vsel %vm297, %v1579, %v1581
  %v1593 = vsel %vm297, %v1583, %v1585
  %v1594 = vsel %vm297, %v1587, %v1589
  %v1605 = vmax.f32 %v1550, %v1590
  %v1606 = vmax.f32 %v1551, %v1573
  %v1607 = vmax.f32 %v1552, %v1591
  %v1608 = vmax.f32 %v1553, %v1577
  %v1609 = vmax.f32 %v1554, %v1592
  %v1610 = vmax.f32 %v1555, %v1581
  %v1611 = vmax.f32 %v1556, %v1593
  %v1612 = vmax.f32 %v1557, %v1585
  %v1613 = vmax.f32 %v1558, %v1594
  %v1614 = vmax.f32 %v1559, %v1589
  %1625 = vrot.lane.b32.xlu0 %v1605, 124
  %v1626 = vpop.permute.xlu0 %1625
  %1627 = vrot.lane.b32.xlu0 %v1606, 124
  %v1628 = vpop.permute.xlu0 %1627
  %1629 = vrot.lane.b32.xlu0 %v1607, 124
  %v1630 = vpop.permute.xlu0 %1629
  %1631 = vrot.lane.b32.xlu0 %v1608, 124
  %v1632 = vpop.permute.xlu0 %1631
  %1633 = vrot.lane.b32.xlu0 %v1609, 124
  %v1634 = vpop.permute.xlu0 %1633
  %1635 = vrot.lane.b32.xlu0 %v1610, 124
  %v1636 = vpop.permute.xlu0 %1635
  %1637 = vrot.lane.b32.xlu0 %v1611, 124
  %v1638 = vpop.permute.xlu0 %1637
  %1639 = vrot.lane.b32.xlu0 %v1612, 124
  %v1640 = vpop.permute.xlu0 %1639
  %1641 = vrot.lane.b32.xlu0 %v1613, 124
  %v1642 = vpop.permute.xlu0 %1641
  %1643 = vrot.lane.b32.xlu0 %v1614, 124
  %v1644 = vpop.permute.xlu0 %1643
  %v1645 = vsel %vm513, %v1626, %v1628
  %v1646 = vsel %vm513, %v1630, %v1632
  %v1647 = vsel %vm513, %v1634, %v1636
  %v1648 = vsel %vm513, %v1638, %v1640
  %v1649 = vsel %vm513, %v1642, %v1644
  %v1660 = vmax.f32 %v1605, %v1645
  %v1661 = vmax.f32 %v1606, %v1628
  %v1662 = vmax.f32 %v1607, %v1646
  %v1663 = vmax.f32 %v1608, %v1632
  %v1664 = vmax.f32 %v1609, %v1647
  %v1665 = vmax.f32 %v1610, %v1636
  %v1666 = vmax.f32 %v1611, %v1648
  %v1667 = vmax.f32 %v1612, %v1640
  %v1668 = vmax.f32 %v1613, %v1649
  %v1669 = vmax.f32 %v1614, %v1644
  %1670 = vrot.lane.b32.xlu0 %v1550, 120
  %v1671 = vpop.permute.xlu0 %1670
  %1672 = vrot.lane.b32.xlu0 %v1551, 120
  %v1673 = vpop.permute.xlu0 %1672
  %1674 = vrot.lane.b32.xlu0 %v1552, 120
  %v1675 = vpop.permute.xlu0 %1674
  %1676 = vrot.lane.b32.xlu0 %v1553, 120
  %v1677 = vpop.permute.xlu0 %1676
  %1678 = vrot.lane.b32.xlu0 %v1554, 120
  %v1679 = vpop.permute.xlu0 %1678
  %1680 = vrot.lane.b32.xlu0 %v1555, 120
  %v1681 = vpop.permute.xlu0 %1680
  %1682 = vrot.lane.b32.xlu0 %v1556, 120
  %v1683 = vpop.permute.xlu0 %1682
  %1684 = vrot.lane.b32.xlu0 %v1557, 120
  %v1685 = vpop.permute.xlu0 %1684
  %1686 = vrot.lane.b32.xlu0 %v1558, 120
  %v1687 = vpop.permute.xlu0 %1686
  %1688 = vrot.lane.b32.xlu0 %v1559, 120
  %v1689 = vpop.permute.xlu0 %1688
  %v1690 = vsel %vm559, %v1671, %v1673
  %v1691 = vsel %vm559, %v1675, %v1677
  %v1692 = vsel %vm559, %v1679, %v1681
  %v1693 = vsel %vm559, %v1683, %v1685
  %v1694 = vsel %vm559, %v1687, %v1689
  %v1705 = vmax.f32 %v1660, %v1690
  %v1706 = vmax.f32 %v1661, %v1673
  %v1707 = vmax.f32 %v1662, %v1691
  %v1708 = vmax.f32 %v1663, %v1677
  %v1709 = vmax.f32 %v1664, %v1692
  %v1710 = vmax.f32 %v1665, %v1681
  %v1711 = vmax.f32 %v1666, %v1693
  %v1712 = vmax.f32 %v1667, %v1685
  %v1713 = vmax.f32 %v1668, %v1694
  %v1714 = vmax.f32 %v1669, %v1689
  %1720 = vrot.lane.b32.xlu0 %v1705, 11
  %v1721 = vpop.permute.xlu0 %1720
  %1722 = vrot.lane.b32.xlu0 %v1707, 11
  %v1723 = vpop.permute.xlu0 %1722
  %1724 = vrot.lane.b32.xlu0 %v1709, 11
  %v1725 = vpop.permute.xlu0 %1724
  %1726 = vrot.lane.b32.xlu0 %v1711, 11
  %v1727 = vpop.permute.xlu0 %1726
  %1728 = vrot.lane.b32.xlu0 %v1713, 11
  %v1729 = vpop.permute.xlu0 %1728
  %vm1735 = vcmask 138368
  %1736 = vst.msk [vmem:[#allocation3] sm:$0xff] %vm1735, %v1721
  %1737 = vst.msk [vmem:[#allocation3 + $0x8] sm:$0xff] %vm1735, %v1723
  %1738 = vst.msk [vmem:[#allocation3 + $0x10] sm:$0xff] %vm1735, %v1725
  %1739 = vst.msk [vmem:[#allocation3 + $0x18] sm:$0xff] %vm1735, %v1727
  %1740 = vst.msk [vmem:[#allocation3 + $0x20] sm:$0xff] %vm1735, %v1729
  %1741 = vrot.lane.b32.xlu0 %v1705, 2
  %v1742 = vpop.permute.xlu0 %1741
  %1743 = vrot.lane.b32.xlu0 %v1707, 2
  %v1744 = vpop.permute.xlu0 %1743
  %1745 = vrot.lane.b32.xlu0 %v1709, 2
  %v1746 = vpop.permute.xlu0 %1745
  %1747 = vrot.lane.b32.xlu0 %v1711, 2
  %v1748 = vpop.permute.xlu0 %1747
  %1749 = vrot.lane.b32.xlu0 %v1713, 2
  %v1750 = vpop.permute.xlu0 %1749
  %vm1756 = vcmask 146568
  %1757 = vst.msk [vmem:[#allocation3] sm:$0xff] %vm1756, %v1742
  %1758 = vst.msk [vmem:[#allocation3 + $0x8] sm:$0xff] %vm1756, %v1744
  %1759 = vst.msk [vmem:[#allocation3 + $0x10] sm:$0xff] %vm1756, %v1746
  %1760 = vst.msk [vmem:[#allocation3 + $0x18] sm:$0xff] %vm1756, %v1748
  %1761 = vst.msk [vmem:[#allocation3 + $0x20] sm:$0xff] %vm1756, %v1750
  %1762 = vrot.lane.b32.xlu0 %v1705, 121
  %v1763 = vpop.permute.xlu0 %1762
  %1764 = vrot.lane.b32.xlu0 %v1707, 121
  %v1765 = vpop.permute.xlu0 %1764
  %1766 = vrot.lane.b32.xlu0 %v1709, 121
  %v1767 = vpop.permute.xlu0 %1766
  %1768 = vrot.lane.b32.xlu0 %v1711, 121
  %v1769 = vpop.permute.xlu0 %1768
  %1770 = vrot.lane.b32.xlu0 %v1713, 121
  %v1771 = vpop.permute.xlu0 %1770
  %vm1777 = vcmask 154768
  %1778 = vst.msk [vmem:[#allocation3] sm:$0xff] %vm1777, %v1763
  %1779 = vst.msk [vmem:[#allocation3 + $0x8] sm:$0xff] %vm1777, %v1765
  %1780 = vst.msk [vmem:[#allocation3 + $0x10] sm:$0xff] %vm1777, %v1767
  %1781 = vst.msk [vmem:[#allocation3 + $0x18] sm:$0xff] %vm1777, %v1769
  %1782 = vst.msk [vmem:[#allocation3 + $0x20] sm:$0xff] %vm1777, %v1771
  %1783 = vrot.lane.b32.xlu0 %v1705, 112
  %v1784 = vpop.permute.xlu0 %1783
  %1785 = vrot.lane.b32.xlu0 %v1707, 112
  %v1786 = vpop.permute.xlu0 %1785
  %1787 = vrot.lane.b32.xlu0 %v1709, 112
  %v1788 = vpop.permute.xlu0 %1787
  %1789 = vrot.lane.b32.xlu0 %v1711, 112
  %v1790 = vpop.permute.xlu0 %1789
  %1791 = vrot.lane.b32.xlu0 %v1713, 112
  %v1792 = vpop.permute.xlu0 %1791
  %vm1798 = vcmask 162968
  %1799 = vst.msk [vmem:[#allocation3] sm:$0xff] %vm1798, %v1784
  %1800 = vst.msk [vmem:[#allocation3 + $0x8] sm:$0xff] %vm1798, %v1786
  %1801 = vst.msk [vmem:[#allocation3 + $0x10] sm:$0xff] %vm1798, %v1788
  %1802 = vst.msk [vmem:[#allocation3 + $0x18] sm:$0xff] %vm1798, %v1790
  %1803 = vst.msk [vmem:[#allocation3 + $0x20] sm:$0xff] %vm1798, %v1792
  %1804 = vrot.lane.b32.xlu0 %v1705, 103
  %v1805 = vpop.permute.xlu0 %1804
  %1806 = vrot.lane.b32.xlu0 %v1707, 103
  %v1807 = vpop.permute.xlu0 %1806
  %1808 = vrot.lane.b32.xlu0 %v1709, 103
  %v1809 = vpop.permute.xlu0 %1808
  %1810 = vrot.lane.b32.xlu0 %v1711, 103
  %v1811 = vpop.permute.xlu0 %1810
  %1812 = vrot.lane.b32.xlu0 %v1713, 103
  %v1813 = vpop.permute.xlu0 %1812
  %vm1819 = vcmask 171168
  %1820 = vst.msk [vmem:[#allocation3] sm:$0xff] %vm1819, %v1805
  %1821 = vst.msk [vmem:[#allocation3 + $0x8] sm:$0xff] %vm1819, %v1807
  %1822 = vst.msk [vmem:[#allocation3 + $0x10] sm:$0xff] %vm1819, %v1809
  %1823 = vst.msk [vmem:[#allocation3 + $0x18] sm:$0xff] %vm1819, %v1811
  %1824 = vst.msk [vmem:[#allocation3 + $0x20] sm:$0xff] %vm1819, %v1813
  %1825 = vrot.lane.b32.xlu0 %v1705, 94
  %v1826 = vpop.permute.xlu0 %1825
  %1827 = vrot.lane.b32.xlu0 %v1707, 94
  %v1828 = vpop.permute.xlu0 %1827
  %1829 = vrot.lane.b32.xlu0 %v1709, 94
  %v1830 = vpop.permute.xlu0 %1829
  %1831 = vrot.lane.b32.xlu0 %v1711, 94
  %v1832 = vpop.permute.xlu0 %1831
  %1833 = vrot.lane.b32.xlu0 %v1713, 94
  %v1834 = vpop.permute.xlu0 %1833
  %vm1840 = vcmask 179368
  %1841 = vst.msk [vmem:[#allocation3] sm:$0xff] %vm1840, %v1826
  %1842 = vst.msk [vmem:[#allocation3 + $0x8] sm:$0xff] %vm1840, %v1828
  %1843 = vst.msk [vmem:[#allocation3 + $0x10] sm:$0xff] %vm1840, %v1830
  %1844 = vst.msk [vmem:[#allocation3 + $0x18] sm:$0xff] %vm1840, %v1832
  %1845 = vst.msk [vmem:[#allocation3 + $0x20] sm:$0xff] %vm1840, %v1834
  %1846 = vrot.lane.b32.xlu0 %v1705, 85
  %v1847 = vpop.permute.xlu0 %1846
  %1848 = vrot.lane.b32.xlu0 %v1707, 85
  %v1849 = vpop.permute.xlu0 %1848
  %1850 = vrot.lane.b32.xlu0 %v1709, 85
  %v1851 = vpop.permute.xlu0 %1850
  %1852 = vrot.lane.b32.xlu0 %v1711, 85
  %v1853 = vpop.permute.xlu0 %1852
  %1854 = vrot.lane.b32.xlu0 %v1713, 85
  %v1855 = vpop.permute.xlu0 %1854
  %vm1861 = vcmask 187568
  %1862 = vst.msk [vmem:[#allocation3] sm:$0xff] %vm1861, %v1847
  %1863 = vst.msk [vmem:[#allocation3 + $0x8] sm:$0xff] %vm1861, %v1849
  %1864 = vst.msk [vmem:[#allocation3 + $0x10] sm:$0xff] %vm1861, %v1851
  %1865 = vst.msk [vmem:[#allocation3 + $0x18] sm:$0xff] %vm1861, %v1853
  %1866 = vst.msk [vmem:[#allocation3 + $0x20] sm:$0xff] %vm1861, %v1855
  %1867 = vrot.lane.b32.xlu0 %v1705, 76
  %v1868 = vpop.permute.xlu0 %1867
  %1869 = vrot.lane.b32.xlu0 %v1707, 76
  %v1870 = vpop.permute.xlu0 %1869
  %1871 = vrot.lane.b32.xlu0 %v1709, 76
  %v1872 = vpop.permute.xlu0 %1871
  %1873 = vrot.lane.b32.xlu0 %v1711, 76
  %v1874 = vpop.permute.xlu0 %1873
  %1875 = vrot.lane.b32.xlu0 %v1713, 76
  %v1876 = vpop.permute.xlu0 %1875
  %vm1882 = vcmask 195768
  %1883 = vst.msk [vmem:[#allocation3] sm:$0xff] %vm1882, %v1868
  %1884 = vst.msk [vmem:[#allocation3 + $0x8] sm:$0xff] %vm1882, %v1870
  %1885 = vst.msk [vmem:[#allocation3 + $0x10] sm:$0xff] %vm1882, %v1872
  %1886 = vst.msk [vmem:[#allocation3 + $0x18] sm:$0xff] %vm1882, %v1874
  %1887 = vst.msk [vmem:[#allocation3 + $0x20] sm:$0xff] %vm1882, %v1876
  %1888 = vrot.lane.b32.xlu0 %v1705, 67
  %v1889 = vpop.permute.xlu0 %1888
  %1890 = vrot.lane.b32.xlu0 %v1707, 67
  %v1891 = vpop.permute.xlu0 %1890
  %1892 = vrot.lane.b32.xlu0 %v1709, 67
  %v1893 = vpop.permute.xlu0 %1892
  %1894 = vrot.lane.b32.xlu0 %v1711, 67
  %v1895 = vpop.permute.xlu0 %1894
  %1896 = vrot.lane.b32.xlu0 %v1713, 67
  %v1897 = vpop.permute.xlu0 %1896
  %vm1903 = vcmask 203968
  %1904 = vst.msk [vmem:[#allocation3] sm:$0xff] %vm1903, %v1889
  %1905 = vst.msk [vmem:[#allocation3 + $0x8] sm:$0xff] %vm1903, %v1891
  %1906 = vst.msk [vmem:[#allocation3 + $0x10] sm:$0xff] %vm1903, %v1893
  %1907 = vst.msk [vmem:[#allocation3 + $0x18] sm:$0xff] %vm1903, %v1895
  %1908 = vst.msk [vmem:[#allocation3 + $0x20] sm:$0xff] %vm1903, %v1897
  %1909 = vrot.lane.b32.xlu0 %v1705, 58
  %v1910 = vpop.permute.xlu0 %1909
  %1911 = vrot.lane.b32.xlu0 %v1707, 58
  %v1912 = vpop.permute.xlu0 %1911
  %1913 = vrot.lane.b32.xlu0 %v1709, 58
  %v1914 = vpop.permute.xlu0 %1913
  %1915 = vrot.lane.b32.xlu0 %v1711, 58
  %v1916 = vpop.permute.xlu0 %1915
  %1917 = vrot.lane.b32.xlu0 %v1713, 58
  %v1918 = vpop.permute.xlu0 %1917
  %vm1924 = vcmask 212168
  %1925 = vst.msk [vmem:[#allocation3] sm:$0xff] %vm1924, %v1910
  %1926 = vst.msk [vmem:[#allocation3 + $0x8] sm:$0xff] %vm1924, %v1912
  %1927 = vst.msk [vmem:[#allocation3 + $0x10] sm:$0xff] %vm1924, %v1914
  %1928 = vst.msk [vmem:[#allocation3 + $0x18] sm:$0xff] %vm1924, %v1916
  %1929 = vst.msk [vmem:[#allocation3 + $0x20] sm:$0xff] %vm1924, %v1918
  %1930 = vrot.lane.b32.xlu0 %v1705, 49
  %v1931 = vpop.permute.xlu0 %1930
  %1932 = vrot.lane.b32.xlu0 %v1707, 49
  %v1933 = vpop.permute.xlu0 %1932
  %1934 = vrot.lane.b32.xlu0 %v1709, 49
  %v1935 = vpop.permute.xlu0 %1934
  %1936 = vrot.lane.b32.xlu0 %v1711, 49
  %v1937 = vpop.permute.xlu0 %1936
  %1938 = vrot.lane.b32.xlu0 %v1713, 49
  %v1939 = vpop.permute.xlu0 %1938
  %vm1945 = vcmask 220368
  %1946 = vst.msk [vmem:[#allocation3] sm:$0xff] %vm1945, %v1931
  %1947 = vst.msk [vmem:[#allocation3 + $0x8] sm:$0xff] %vm1945, %v1933
  %1948 = vst.msk [vmem:[#allocation3 + $0x10] sm:$0xff] %vm1945, %v1935
  %1949 = vst.msk [vmem:[#allocation3 + $0x18] sm:$0xff] %vm1945, %v1937
  %1950 = vst.msk [vmem:[#allocation3 + $0x20] sm:$0xff] %vm1945, %v1939
  %1951 = vrot.lane.b32.xlu0 %v1705, 40
  %v1952 = vpop.permute.xlu0 %1951
  %1953 = vrot.lane.b32.xlu0 %v1707, 40
  %v1954 = vpop.permute.xlu0 %1953
  %1955 = vrot.lane.b32.xlu0 %v1709, 40
  %v1956 = vpop.permute.xlu0 %1955
  %1957 = vrot.lane.b32.xlu0 %v1711, 40
  %v1958 = vpop.permute.xlu0 %1957
  %1959 = vrot.lane.b32.xlu0 %v1713, 40
  %v1960 = vpop.permute.xlu0 %1959
  %vm1966 = vcmask 228568
  %1967 = vst.msk [vmem:[#allocation3] sm:$0xff] %vm1966, %v1952
  %1968 = vst.msk [vmem:[#allocation3 + $0x8] sm:$0xff] %vm1966, %v1954
  %1969 = vst.msk [vmem:[#allocation3 + $0x10] sm:$0xff] %vm1966, %v1956
  %1970 = vst.msk [vmem:[#allocation3 + $0x18] sm:$0xff] %vm1966, %v1958
  %1971 = vst.msk [vmem:[#allocation3 + $0x20] sm:$0xff] %vm1966, %v1960
  %1972 = vrot.lane.b32.xlu0 %v1705, 31
  %v1973 = vpop.permute.xlu0 %1972
  %1974 = vrot.lane.b32.xlu0 %v1707, 31
  %v1975 = vpop.permute.xlu0 %1974
  %1976 = vrot.lane.b32.xlu0 %v1709, 31
  %v1977 = vpop.permute.xlu0 %1976
  %1978 = vrot.lane.b32.xlu0 %v1711, 31
  %v1979 = vpop.permute.xlu0 %1978
  %1980 = vrot.lane.b32.xlu0 %v1713, 31
  %v1981 = vpop.permute.xlu0 %1980
  %vm1987 = vcmask 236768
  %1988 = vst.msk [vmem:[#allocation3] sm:$0xff] %vm1987, %v1973
  %1989 = vst.msk [vmem:[#allocation3 + $0x8] sm:$0xff] %vm1987, %v1975
  %1990 = vst.msk [vmem:[#allocation3 + $0x10] sm:$0xff] %vm1987, %v1977
  %1991 = vst.msk [vmem:[#allocation3 + $0x18] sm:$0xff] %vm1987, %v1979
  %1992 = vst.msk [vmem:[#allocation3 + $0x20] sm:$0xff] %vm1987, %v1981
  %1998 = vrot.lane.b32.xlu0 %v1706, 22
  %v1999 = vpop.permute.xlu0 %1998
  %2000 = vrot.lane.b32.xlu0 %v1708, 22
  %v2001 = vpop.permute.xlu0 %2000
  %2002 = vrot.lane.b32.xlu0 %v1710, 22
  %v2003 = vpop.permute.xlu0 %2002
  %2004 = vrot.lane.b32.xlu0 %v1712, 22
  %v2005 = vpop.permute.xlu0 %2004
  %2006 = vrot.lane.b32.xlu0 %v1714, 22
  %v2007 = vpop.permute.xlu0 %2006
  %vm2013 = vcmask 244968
  %2014 = vst.msk [vmem:[#allocation3] sm:$0xff] %vm2013, %v1999
  %2015 = vst.msk [vmem:[#allocation3 + $0x8] sm:$0xff] %vm2013, %v2001
  %2016 = vst.msk [vmem:[#allocation3 + $0x10] sm:$0xff] %vm2013, %v2003
  %2017 = vst.msk [vmem:[#allocation3 + $0x18] sm:$0xff] %vm2013, %v2005
  %2018 = vst.msk [vmem:[#allocation3 + $0x20] sm:$0xff] %vm2013, %v2007
  %2019 = vrot.lane.b32.xlu0 %v1706, 13
  %v2020 = vpop.permute.xlu0 %2019
  %2021 = vrot.lane.b32.xlu0 %v1708, 13
  %v2022 = vpop.permute.xlu0 %2021
  %2023 = vrot.lane.b32.xlu0 %v1710, 13
  %v2024 = vpop.permute.xlu0 %2023
  %2025 = vrot.lane.b32.xlu0 %v1712, 13
  %v2026 = vpop.permute.xlu0 %2025
  %2027 = vrot.lane.b32.xlu0 %v1714, 13
  %v2028 = vpop.permute.xlu0 %2027
  %vm2034 = vcmask 253168
  %2035 = vst.msk [vmem:[#allocation3] sm:$0xff] %vm2034, %v2020
  %2036 = vst.msk [vmem:[#allocation3 + $0x8] sm:$0xff] %vm2034, %v2022
  %2037 = vst.msk [vmem:[#allocation3 + $0x10] sm:$0xff] %vm2034, %v2024
  %2038 = vst.msk [vmem:[#allocation3 + $0x18] sm:$0xff] %vm2034, %v2026
  %2039 = vst.msk [vmem:[#allocation3 + $0x20] sm:$0xff] %vm2034, %v2028
  %2040 = vrot.lane.b32.xlu0 %v1706, 4
  %v2041 = vpop.permute.xlu0 %2040
  %2042 = vrot.lane.b32.xlu0 %v1708, 4
  %v2043 = vpop.permute.xlu0 %2042
  %2044 = vrot.lane.b32.xlu0 %v1710, 4
  %v2045 = vpop.permute.xlu0 %2044
  %2046 = vrot.lane.b32.xlu0 %v1712, 4
  %v2047 = vpop.permute.xlu0 %2046
  %2048 = vrot.lane.b32.xlu0 %v1714, 4
  %v2049 = vpop.permute.xlu0 %2048
  %vm2055 = vcmask 261368
  %2056 = vst.msk [vmem:[#allocation3] sm:$0xff] %vm2055, %v2041
  %2057 = vst.msk [vmem:[#allocation3 + $0x8] sm:$0xff] %vm2055, %v2043
  %2058 = vst.msk [vmem:[#allocation3 + $0x10] sm:$0xff] %vm2055, %v2045
  %2059 = vst.msk [vmem:[#allocation3 + $0x18] sm:$0xff] %vm2055, %v2047
  %2060 = vst.msk [vmem:[#allocation3 + $0x20] sm:$0xff] %vm2055, %v2049
  %s2061 = scalar_lea.vmem %s1, 720
  %v2062 = vld [vmem:[%s2061] sm:$0xff]
  %v2063 = vld [vmem:[%s2061 + $0x8] sm:$0xff]
  %v2064 = vld [vmem:[%s2061 + $0x10] sm:$0xff]
  %v2065 = vld [vmem:[%s2061 + $0x18] sm:$0xff]
  %v2066 = vld [vmem:[%s2061 + $0x20] sm:$0xff]
  %2068 = vset.pattern.permute.xlu0 0
  %2069 = vperm.xlu0 %2068, %v2062
  %v2070 = vpop.permute.xlu0 %2069
  %2073 = vset.pattern.permute.xlu0 0
  %2074 = vperm.xlu0 %2073, %v2063
  %v2075 = vpop.permute.xlu0 %2074
  %2078 = vset.pattern.permute.xlu0 0
  %2079 = vperm.xlu0 %2078, %v2064
  %v2080 = vpop.permute.xlu0 %2079
  %2083 = vset.pattern.permute.xlu0 0
  %2084 = vperm.xlu0 %2083, %v2065
  %v2085 = vpop.permute.xlu0 %2084
  %2088 = vset.pattern.permute.xlu0 0
  %2089 = vperm.xlu0 %2088, %v2066
  %v2090 = vpop.permute.xlu0 %2089
  %v2092 = vmul.f32 %v2070, %v79
  %v2093 = vmul.f32 %v2070, %v80
  %v2094 = vmul.f32 %v2075, %v81
  %v2095 = vmul.f32 %v2075, %v82
  %v2096 = vmul.f32 %v2080, %v83
  %v2097 = vmul.f32 %v2080, %v84
  %v2098 = vmul.f32 %v2085, %v85
  %v2099 = vmul.f32 %v2085, %v86
  %v2100 = vmul.f32 %v2090, %v87
  %v2101 = vmul.f32 %v2090, %v88
  %s2102 = scalar_lea.vmem %s1, 760
  %v2103 = vld [vmem:[%s2102] sm:$0xff]
  %v2104 = vld [vmem:[%s2102 + $0x8] sm:$0xff]
  %v2105 = vld [vmem:[%s2102 + $0x10] sm:$0xff]
  %v2106 = vld [vmem:[%s2102 + $0x18] sm:$0xff]
  %v2107 = vld [vmem:[%s2102 + $0x20] sm:$0xff]
  %2109 = vset.pattern.permute.xlu0 0
  %2110 = vperm.xlu0 %2109, %v2103
  %v2111 = vpop.permute.xlu0 %2110
  %2114 = vset.pattern.permute.xlu0 0
  %2115 = vperm.xlu0 %2114, %v2104
  %v2116 = vpop.permute.xlu0 %2115
  %2119 = vset.pattern.permute.xlu0 0
  %2120 = vperm.xlu0 %2119, %v2105
  %v2121 = vpop.permute.xlu0 %2120
  %2124 = vset.pattern.permute.xlu0 0
  %2125 = vperm.xlu0 %2124, %v2106
  %v2126 = vpop.permute.xlu0 %2125
  %2129 = vset.pattern.permute.xlu0 0
  %2130 = vperm.xlu0 %2129, %v2107
  %v2131 = vpop.permute.xlu0 %2130
  %v2133 = vmul.f32 %v2111, %v79
  %v2134 = vmul.f32 %v2111, %v80
  %v2135 = vmul.f32 %v2116, %v81
  %v2136 = vmul.f32 %v2116, %v82
  %v2137 = vmul.f32 %v2121, %v83
  %v2138 = vmul.f32 %v2121, %v84
  %v2139 = vmul.f32 %v2126, %v85
  %v2140 = vmul.f32 %v2126, %v86
  %v2141 = vmul.f32 %v2131, %v87
  %v2142 = vmul.f32 %v2131, %v88
  %2153 = vrot.lane.b32.xlu0 %v2133, 127
  %v2154 = vpop.permute.xlu0 %2153
  %2155 = vrot.lane.b32.xlu0 %v2134, 127
  %v2156 = vpop.permute.xlu0 %2155
  %2157 = vrot.lane.b32.xlu0 %v2135, 127
  %v2158 = vpop.permute.xlu0 %2157
  %2159 = vrot.lane.b32.xlu0 %v2136, 127
  %v2160 = vpop.permute.xlu0 %2159
  %2161 = vrot.lane.b32.xlu0 %v2137, 127
  %v2162 = vpop.permute.xlu0 %2161
  %2163 = vrot.lane.b32.xlu0 %v2138, 127
  %v2164 = vpop.permute.xlu0 %2163
  %2165 = vrot.lane.b32.xlu0 %v2139, 127
  %v2166 = vpop.permute.xlu0 %2165
  %2167 = vrot.lane.b32.xlu0 %v2140, 127
  %v2168 = vpop.permute.xlu0 %2167
  %2169 = vrot.lane.b32.xlu0 %v2141, 127
  %v2170 = vpop.permute.xlu0 %2169
  %2171 = vrot.lane.b32.xlu0 %v2142, 127
  %v2172 = vpop.permute.xlu0 %2171
  %v2173 = vsel %vm200, %v2154, %v2156
  %v2174 = vsel %vm200, %v2158, %v2160
  %v2175 = vsel %vm200, %v2162, %v2164
  %v2176 = vsel %vm200, %v2166, %v2168
  %v2177 = vsel %vm200, %v2170, %v2172
  %v2188 = vadd.f32 %v2092, %v2173
  %v2189 = vadd.f32 %v2093, %v2156
  %v2190 = vadd.f32 %v2094, %v2174
  %v2191 = vadd.f32 %v2095, %v2160
  %v2192 = vadd.f32 %v2096, %v2175
  %v2193 = vadd.f32 %v2097, %v2164
  %v2194 = vadd.f32 %v2098, %v2176
  %v2195 = vadd.f32 %v2099, %v2168
  %v2196 = vadd.f32 %v2100, %v2177
  %v2197 = vadd.f32 %v2101, %v2172
  %s2198 = scalar_lea.vmem %s1, 800
  %v2199 = vld [vmem:[%s2198] sm:$0xff]
  %v2200 = vld [vmem:[%s2198 + $0x8] sm:$0xff]
  %v2201 = vld [vmem:[%s2198 + $0x10] sm:$0xff]
  %v2202 = vld [vmem:[%s2198 + $0x18] sm:$0xff]
  %v2203 = vld [vmem:[%s2198 + $0x20] sm:$0xff]
  %2205 = vset.pattern.permute.xlu0 0
  %2206 = vperm.xlu0 %2205, %v2199
  %v2207 = vpop.permute.xlu0 %2206
  %2210 = vset.pattern.permute.xlu0 0
  %2211 = vperm.xlu0 %2210, %v2200
  %v2212 = vpop.permute.xlu0 %2211
  %2215 = vset.pattern.permute.xlu0 0
  %2216 = vperm.xlu0 %2215, %v2201
  %v2217 = vpop.permute.xlu0 %2216
  %2220 = vset.pattern.permute.xlu0 0
  %2221 = vperm.xlu0 %2220, %v2202
  %v2222 = vpop.permute.xlu0 %2221
  %2225 = vset.pattern.permute.xlu0 0
  %2226 = vperm.xlu0 %2225, %v2203
  %v2227 = vpop.permute.xlu0 %2226
  %v2229 = vmul.f32 %v2207, %v79
  %v2230 = vmul.f32 %v2207, %v80
  %v2231 = vmul.f32 %v2212, %v81
  %v2232 = vmul.f32 %v2212, %v82
  %v2233 = vmul.f32 %v2217, %v83
  %v2234 = vmul.f32 %v2217, %v84
  %v2235 = vmul.f32 %v2222, %v85
  %v2236 = vmul.f32 %v2222, %v86
  %v2237 = vmul.f32 %v2227, %v87
  %v2238 = vmul.f32 %v2227, %v88
  %2249 = vrot.lane.b32.xlu0 %v2229, 126
  %v2250 = vpop.permute.xlu0 %2249
  %2251 = vrot.lane.b32.xlu0 %v2230, 126
  %v2252 = vpop.permute.xlu0 %2251
  %2253 = vrot.lane.b32.xlu0 %v2231, 126
  %v2254 = vpop.permute.xlu0 %2253
  %2255 = vrot.lane.b32.xlu0 %v2232, 126
  %v2256 = vpop.permute.xlu0 %2255
  %2257 = vrot.lane.b32.xlu0 %v2233, 126
  %v2258 = vpop.permute.xlu0 %2257
  %2259 = vrot.lane.b32.xlu0 %v2234, 126
  %v2260 = vpop.permute.xlu0 %2259
  %2261 = vrot.lane.b32.xlu0 %v2235, 126
  %v2262 = vpop.permute.xlu0 %2261
  %2263 = vrot.lane.b32.xlu0 %v2236, 126
  %v2264 = vpop.permute.xlu0 %2263
  %2265 = vrot.lane.b32.xlu0 %v2237, 126
  %v2266 = vpop.permute.xlu0 %2265
  %2267 = vrot.lane.b32.xlu0 %v2238, 126
  %v2268 = vpop.permute.xlu0 %2267
  %v2269 = vsel %vm297, %v2250, %v2252
  %v2270 = vsel %vm297, %v2254, %v2256
  %v2271 = vsel %vm297, %v2258, %v2260
  %v2272 = vsel %vm297, %v2262, %v2264
  %v2273 = vsel %vm297, %v2266, %v2268
  %v2284 = vadd.f32 %v2188, %v2269
  %v2285 = vadd.f32 %v2189, %v2252
  %v2286 = vadd.f32 %v2190, %v2270
  %v2287 = vadd.f32 %v2191, %v2256
  %v2288 = vadd.f32 %v2192, %v2271
  %v2289 = vadd.f32 %v2193, %v2260
  %v2290 = vadd.f32 %v2194, %v2272
  %v2291 = vadd.f32 %v2195, %v2264
  %v2292 = vadd.f32 %v2196, %v2273
  %v2293 = vadd.f32 %v2197, %v2268
  %s2294 = scalar_lea.vmem %s1, 840
  %v2295 = vld [vmem:[%s2294] sm:$0xff]
  %v2296 = vld [vmem:[%s2294 + $0x8] sm:$0xff]
  %v2297 = vld [vmem:[%s2294 + $0x10] sm:$0xff]
  %v2298 = vld [vmem:[%s2294 + $0x18] sm:$0xff]
  %v2299 = vld [vmem:[%s2294 + $0x20] sm:$0xff]
  %2301 = vset.pattern.permute.xlu0 0
  %2302 = vperm.xlu0 %2301, %v2295
  %v2303 = vpop.permute.xlu0 %2302
  %2306 = vset.pattern.permute.xlu0 0
  %2307 = vperm.xlu0 %2306, %v2296
  %v2308 = vpop.permute.xlu0 %2307
  %2311 = vset.pattern.permute.xlu0 0
  %2312 = vperm.xlu0 %2311, %v2297
  %v2313 = vpop.permute.xlu0 %2312
  %2316 = vset.pattern.permute.xlu0 0
  %2317 = vperm.xlu0 %2316, %v2298
  %v2318 = vpop.permute.xlu0 %2317
  %2321 = vset.pattern.permute.xlu0 0
  %2322 = vperm.xlu0 %2321, %v2299
  %v2323 = vpop.permute.xlu0 %2322
  %v2325 = vmul.f32 %v2303, %v79
  %v2326 = vmul.f32 %v2303, %v80
  %v2327 = vmul.f32 %v2308, %v81
  %v2328 = vmul.f32 %v2308, %v82
  %v2329 = vmul.f32 %v2313, %v83
  %v2330 = vmul.f32 %v2313, %v84
  %v2331 = vmul.f32 %v2318, %v85
  %v2332 = vmul.f32 %v2318, %v86
  %v2333 = vmul.f32 %v2323, %v87
  %v2334 = vmul.f32 %v2323, %v88
  %2345 = vrot.lane.b32.xlu0 %v2325, 125
  %v2346 = vpop.permute.xlu0 %2345
  %2347 = vrot.lane.b32.xlu0 %v2326, 125
  %v2348 = vpop.permute.xlu0 %2347
  %2349 = vrot.lane.b32.xlu0 %v2327, 125
  %v2350 = vpop.permute.xlu0 %2349
  %2351 = vrot.lane.b32.xlu0 %v2328, 125
  %v2352 = vpop.permute.xlu0 %2351
  %2353 = vrot.lane.b32.xlu0 %v2329, 125
  %v2354 = vpop.permute.xlu0 %2353
  %2355 = vrot.lane.b32.xlu0 %v2330, 125
  %v2356 = vpop.permute.xlu0 %2355
  %2357 = vrot.lane.b32.xlu0 %v2331, 125
  %v2358 = vpop.permute.xlu0 %2357
  %2359 = vrot.lane.b32.xlu0 %v2332, 125
  %v2360 = vpop.permute.xlu0 %2359
  %2361 = vrot.lane.b32.xlu0 %v2333, 125
  %v2362 = vpop.permute.xlu0 %2361
  %2363 = vrot.lane.b32.xlu0 %v2334, 125
  %v2364 = vpop.permute.xlu0 %2363
  %v2365 = vsel %vm1235, %v2346, %v2348
  %v2366 = vsel %vm1235, %v2350, %v2352
  %v2367 = vsel %vm1235, %v2354, %v2356
  %v2368 = vsel %vm1235, %v2358, %v2360
  %v2369 = vsel %vm1235, %v2362, %v2364
  %v2380 = vadd.f32 %v2284, %v2365
  %v2381 = vadd.f32 %v2285, %v2348
  %v2382 = vadd.f32 %v2286, %v2366
  %v2383 = vadd.f32 %v2287, %v2352
  %v2384 = vadd.f32 %v2288, %v2367
  %v2385 = vadd.f32 %v2289, %v2356
  %v2386 = vadd.f32 %v2290, %v2368
  %v2387 = vadd.f32 %v2291, %v2360
  %v2388 = vadd.f32 %v2292, %v2369
  %v2389 = vadd.f32 %v2293, %v2364
  %s2390 = scalar_lea.vmem %s1, 880
  %v2391 = vld [vmem:[%s2390] sm:$0xff]
  %v2392 = vld [vmem:[%s2390 + $0x8] sm:$0xff]
  %v2393 = vld [vmem:[%s2390 + $0x10] sm:$0xff]
  %v2394 = vld [vmem:[%s2390 + $0x18] sm:$0xff]
  %v2395 = vld [vmem:[%s2390 + $0x20] sm:$0xff]
  %2397 = vset.pattern.permute.xlu0 0
  %2398 = vperm.xlu0 %2397, %v2391
  %v2399 = vpop.permute.xlu0 %2398
  %2402 = vset.pattern.permute.xlu0 0
  %2403 = vperm.xlu0 %2402, %v2392
  %v2404 = vpop.permute.xlu0 %2403
  %2407 = vset.pattern.permute.xlu0 0
  %2408 = vperm.xlu0 %2407, %v2393
  %v2409 = vpop.permute.xlu0 %2408
  %2412 = vset.pattern.permute.xlu0 0
  %2413 = vperm.xlu0 %2412, %v2394
  %v2414 = vpop.permute.xlu0 %2413
  %2417 = vset.pattern.permute.xlu0 0
  %2418 = vperm.xlu0 %2417, %v2395
  %v2419 = vpop.permute.xlu0 %2418
  %v2421 = vmul.f32 %v2399, %v79
  %v2422 = vmul.f32 %v2399, %v80
  %v2423 = vmul.f32 %v2404, %v81
  %v2424 = vmul.f32 %v2404, %v82
  %v2425 = vmul.f32 %v2409, %v83
  %v2426 = vmul.f32 %v2409, %v84
  %v2427 = vmul.f32 %v2414, %v85
  %v2428 = vmul.f32 %v2414, %v86
  %v2429 = vmul.f32 %v2419, %v87
  %v2430 = vmul.f32 %v2419, %v88
  %2441 = vrot.lane.b32.xlu0 %v2421, 124
  %v2442 = vpop.permute.xlu0 %2441
  %2443 = vrot.lane.b32.xlu0 %v2422, 124
  %v2444 = vpop.permute.xlu0 %2443
  %2445 = vrot.lane.b32.xlu0 %v2423, 124
  %v2446 = vpop.permute.xlu0 %2445
  %2447 = vrot.lane.b32.xlu0 %v2424, 124
  %v2448 = vpop.permute.xlu0 %2447
  %2449 = vrot.lane.b32.xlu0 %v2425, 124
  %v2450 = vpop.permute.xlu0 %2449
  %2451 = vrot.lane.b32.xlu0 %v2426, 124
  %v2452 = vpop.permute.xlu0 %2451
  %2453 = vrot.lane.b32.xlu0 %v2427, 124
  %v2454 = vpop.permute.xlu0 %2453
  %2455 = vrot.lane.b32.xlu0 %v2428, 124
  %v2456 = vpop.permute.xlu0 %2455
  %2457 = vrot.lane.b32.xlu0 %v2429, 124
  %v2458 = vpop.permute.xlu0 %2457
  %2459 = vrot.lane.b32.xlu0 %v2430, 124
  %v2460 = vpop.permute.xlu0 %2459
  %v2461 = vsel %vm513, %v2442, %v2444
  %v2462 = vsel %vm513, %v2446, %v2448
  %v2463 = vsel %vm513, %v2450, %v2452
  %v2464 = vsel %vm513, %v2454, %v2456
  %v2465 = vsel %vm513, %v2458, %v2460
  %v2476 = vadd.f32 %v2380, %v2461
  %v2477 = vadd.f32 %v2381, %v2444
  %v2478 = vadd.f32 %v2382, %v2462
  %v2479 = vadd.f32 %v2383, %v2448
  %v2480 = vadd.f32 %v2384, %v2463
  %v2481 = vadd.f32 %v2385, %v2452
  %v2482 = vadd.f32 %v2386, %v2464
  %v2483 = vadd.f32 %v2387, %v2456
  %v2484 = vadd.f32 %v2388, %v2465
  %v2485 = vadd.f32 %v2389, %v2460
  %s2486 = scalar_lea.vmem %s1, 920
  %v2487 = vld [vmem:[%s2486] sm:$0xff]
  %v2488 = vld [vmem:[%s2486 + $0x8] sm:$0xff]
  %v2489 = vld [vmem:[%s2486 + $0x10] sm:$0xff]
  %v2490 = vld [vmem:[%s2486 + $0x18] sm:$0xff]
  %v2491 = vld [vmem:[%s2486 + $0x20] sm:$0xff]
  %2493 = vset.pattern.permute.xlu0 0
  %2494 = vperm.xlu0 %2493, %v2487
  %v2495 = vpop.permute.xlu0 %2494
  %2498 = vset.pattern.permute.xlu0 0
  %2499 = vperm.xlu0 %2498, %v2488
  %v2500 = vpop.permute.xlu0 %2499
  %2503 = vset.pattern.permute.xlu0 0
  %2504 = vperm.xlu0 %2503, %v2489
  %v2505 = vpop.permute.xlu0 %2504
  %2508 = vset.pattern.permute.xlu0 0
  %2509 = vperm.xlu0 %2508, %v2490
  %v2510 = vpop.permute.xlu0 %2509
  %2513 = vset.pattern.permute.xlu0 0
  %2514 = vperm.xlu0 %2513, %v2491
  %v2515 = vpop.permute.xlu0 %2514
  %v2517 = vmul.f32 %v2495, %v79
  %v2518 = vmul.f32 %v2495, %v80
  %v2519 = vmul.f32 %v2500, %v81
  %v2520 = vmul.f32 %v2500, %v82
  %v2521 = vmul.f32 %v2505, %v83
  %v2522 = vmul.f32 %v2505, %v84
  %v2523 = vmul.f32 %v2510, %v85
  %v2524 = vmul.f32 %v2510, %v86
  %v2525 = vmul.f32 %v2515, %v87
  %v2526 = vmul.f32 %v2515, %v88
  %2537 = vrot.lane.b32.xlu0 %v2517, 123
  %v2538 = vpop.permute.xlu0 %2537
  %2539 = vrot.lane.b32.xlu0 %v2518, 123
  %v2540 = vpop.permute.xlu0 %2539
  %2541 = vrot.lane.b32.xlu0 %v2519, 123
  %v2542 = vpop.permute.xlu0 %2541
  %2543 = vrot.lane.b32.xlu0 %v2520, 123
  %v2544 = vpop.permute.xlu0 %2543
  %2545 = vrot.lane.b32.xlu0 %v2521, 123
  %v2546 = vpop.permute.xlu0 %2545
  %2547 = vrot.lane.b32.xlu0 %v2522, 123
  %v2548 = vpop.permute.xlu0 %2547
  %2549 = vrot.lane.b32.xlu0 %v2523, 123
  %v2550 = vpop.permute.xlu0 %2549
  %2551 = vrot.lane.b32.xlu0 %v2524, 123
  %v2552 = vpop.permute.xlu0 %2551
  %2553 = vrot.lane.b32.xlu0 %v2525, 123
  %v2554 = vpop.permute.xlu0 %2553
  %2555 = vrot.lane.b32.xlu0 %v2526, 123
  %v2556 = vpop.permute.xlu0 %2555
  %v2557 = vsel %vm1428, %v2538, %v2540
  %v2558 = vsel %vm1428, %v2542, %v2544
  %v2559 = vsel %vm1428, %v2546, %v2548
  %v2560 = vsel %vm1428, %v2550, %v2552
  %v2561 = vsel %vm1428, %v2554, %v2556
  %v2572 = vadd.f32 %v2476, %v2557
  %v2573 = vadd.f32 %v2477, %v2540
  %v2574 = vadd.f32 %v2478, %v2558
  %v2575 = vadd.f32 %v2479, %v2544
  %v2576 = vadd.f32 %v2480, %v2559
  %v2577 = vadd.f32 %v2481, %v2548
  %v2578 = vadd.f32 %v2482, %v2560
  %v2579 = vadd.f32 %v2483, %v2552
  %v2580 = vadd.f32 %v2484, %v2561
  %v2581 = vadd.f32 %v2485, %v2556
  %s2582 = scalar_lea.vmem %s1, 960
  %v2583 = vld [vmem:[%s2582] sm:$0xff]
  %v2584 = vld [vmem:[%s2582 + $0x8] sm:$0xff]
  %v2585 = vld [vmem:[%s2582 + $0x10] sm:$0xff]
  %v2586 = vld [vmem:[%s2582 + $0x18] sm:$0xff]
  %v2587 = vld [vmem:[%s2582 + $0x20] sm:$0xff]
  %2589 = vset.pattern.permute.xlu0 0
  %2590 = vperm.xlu0 %2589, %v2583
  %v2591 = vpop.permute.xlu0 %2590
  %2594 = vset.pattern.permute.xlu0 0
  %2595 = vperm.xlu0 %2594, %v2584
  %v2596 = vpop.permute.xlu0 %2595
  %2599 = vset.pattern.permute.xlu0 0
  %2600 = vperm.xlu0 %2599, %v2585
  %v2601 = vpop.permute.xlu0 %2600
  %2604 = vset.pattern.permute.xlu0 0
  %2605 = vperm.xlu0 %2604, %v2586
  %v2606 = vpop.permute.xlu0 %2605
  %2609 = vset.pattern.permute.xlu0 0
  %2610 = vperm.xlu0 %2609, %v2587
  %v2611 = vpop.permute.xlu0 %2610
  %v2613 = vmul.f32 %v2591, %v79
  %v2614 = vmul.f32 %v2591, %v80
  %v2615 = vmul.f32 %v2596, %v81
  %v2616 = vmul.f32 %v2596, %v82
  %v2617 = vmul.f32 %v2601, %v83
  %v2618 = vmul.f32 %v2601, %v84
  %v2619 = vmul.f32 %v2606, %v85
  %v2620 = vmul.f32 %v2606, %v86
  %v2621 = vmul.f32 %v2611, %v87
  %v2622 = vmul.f32 %v2611, %v88
  %2633 = vrot.lane.b32.xlu0 %v2613, 122
  %v2634 = vpop.permute.xlu0 %2633
  %2635 = vrot.lane.b32.xlu0 %v2614, 122
  %v2636 = vpop.permute.xlu0 %2635
  %2637 = vrot.lane.b32.xlu0 %v2615, 122
  %v2638 = vpop.permute.xlu0 %2637
  %2639 = vrot.lane.b32.xlu0 %v2616, 122
  %v2640 = vpop.permute.xlu0 %2639
  %2641 = vrot.lane.b32.xlu0 %v2617, 122
  %v2642 = vpop.permute.xlu0 %2641
  %2643 = vrot.lane.b32.xlu0 %v2618, 122
  %v2644 = vpop.permute.xlu0 %2643
  %2645 = vrot.lane.b32.xlu0 %v2619, 122
  %v2646 = vpop.permute.xlu0 %2645
  %2647 = vrot.lane.b32.xlu0 %v2620, 122
  %v2648 = vpop.permute.xlu0 %2647
  %2649 = vrot.lane.b32.xlu0 %v2621, 122
  %v2650 = vpop.permute.xlu0 %2649
  %2651 = vrot.lane.b32.xlu0 %v2622, 122
  %v2652 = vpop.permute.xlu0 %2651
  %vm2653 = vcmask 998400
  %v2654 = vsel %vm2653, %v2634, %v2636
  %v2655 = vsel %vm2653, %v2638, %v2640
  %v2656 = vsel %vm2653, %v2642, %v2644
  %v2657 = vsel %vm2653, %v2646, %v2648
  %v2658 = vsel %vm2653, %v2650, %v2652
  %v2669 = vadd.f32 %v2572, %v2654
  %v2670 = vadd.f32 %v2573, %v2636
  %v2671 = vadd.f32 %v2574, %v2655
  %v2672 = vadd.f32 %v2575, %v2640
  %v2673 = vadd.f32 %v2576, %v2656
  %v2674 = vadd.f32 %v2577, %v2644
  %v2675 = vadd.f32 %v2578, %v2657
  %v2676 = vadd.f32 %v2579, %v2648
  %v2677 = vadd.f32 %v2580, %v2658
  %v2678 = vadd.f32 %v2581, %v2652
  %s2679 = scalar_lea.vmem %s1, 1000
  %v2680 = vld [vmem:[%s2679] sm:$0xff]
  %v2681 = vld [vmem:[%s2679 + $0x8] sm:$0xff]
  %v2682 = vld [vmem:[%s2679 + $0x10] sm:$0xff]
  %v2683 = vld [vmem:[%s2679 + $0x18] sm:$0xff]
  %v2684 = vld [vmem:[%s2679 + $0x20] sm:$0xff]
  %2686 = vset.pattern.permute.xlu0 0
  %2687 = vperm.xlu0 %2686, %v2680
  %v2688 = vpop.permute.xlu0 %2687
  %2691 = vset.pattern.permute.xlu0 0
  %2692 = vperm.xlu0 %2691, %v2681
  %v2693 = vpop.permute.xlu0 %2692
  %2696 = vset.pattern.permute.xlu0 0
  %2697 = vperm.xlu0 %2696, %v2682
  %v2698 = vpop.permute.xlu0 %2697
  %2701 = vset.pattern.permute.xlu0 0
  %2702 = vperm.xlu0 %2701, %v2683
  %v2703 = vpop.permute.xlu0 %2702
  %2706 = vset.pattern.permute.xlu0 0
  %2707 = vperm.xlu0 %2706, %v2684
  %v2708 = vpop.permute.xlu0 %2707
  %v2710 = vmul.f32 %v2688, %v79
  %v2711 = vmul.f32 %v2688, %v80
  %v2712 = vmul.f32 %v2693, %v81
  %v2713 = vmul.f32 %v2693, %v82
  %v2714 = vmul.f32 %v2698, %v83
  %v2715 = vmul.f32 %v2698, %v84
  %v2716 = vmul.f32 %v2703, %v85
  %v2717 = vmul.f32 %v2703, %v86
  %v2718 = vmul.f32 %v2708, %v87
  %v2719 = vmul.f32 %v2708, %v88
  %2730 = vrot.lane.b32.xlu0 %v2710, 121
  %v2731 = vpop.permute.xlu0 %2730
  %2732 = vrot.lane.b32.xlu0 %v2711, 121
  %v2733 = vpop.permute.xlu0 %2732
  %2734 = vrot.lane.b32.xlu0 %v2712, 121
  %v2735 = vpop.permute.xlu0 %2734
  %2736 = vrot.lane.b32.xlu0 %v2713, 121
  %v2737 = vpop.permute.xlu0 %2736
  %2738 = vrot.lane.b32.xlu0 %v2714, 121
  %v2739 = vpop.permute.xlu0 %2738
  %2740 = vrot.lane.b32.xlu0 %v2715, 121
  %v2741 = vpop.permute.xlu0 %2740
  %2742 = vrot.lane.b32.xlu0 %v2716, 121
  %v2743 = vpop.permute.xlu0 %2742
  %2744 = vrot.lane.b32.xlu0 %v2717, 121
  %v2745 = vpop.permute.xlu0 %2744
  %2746 = vrot.lane.b32.xlu0 %v2718, 121
  %v2747 = vpop.permute.xlu0 %2746
  %2748 = vrot.lane.b32.xlu0 %v2719, 121
  %v2749 = vpop.permute.xlu0 %2748
  %vm2750 = vcmask 990208
  %v2751 = vsel %vm2750, %v2731, %v2733
  %v2752 = vsel %vm2750, %v2735, %v2737
  %v2753 = vsel %vm2750, %v2739, %v2741
  %v2754 = vsel %vm2750, %v2743, %v2745
  %v2755 = vsel %vm2750, %v2747, %v2749
  %v2766 = vadd.f32 %v2669, %v2751
  %v2767 = vadd.f32 %v2670, %v2733
  %v2768 = vadd.f32 %v2671, %v2752
  %v2769 = vadd.f32 %v2672, %v2737
  %v2770 = vadd.f32 %v2673, %v2753
  %v2771 = vadd.f32 %v2674, %v2741
  %v2772 = vadd.f32 %v2675, %v2754
  %v2773 = vadd.f32 %v2676, %v2745
  %v2774 = vadd.f32 %v2677, %v2755
  %v2775 = vadd.f32 %v2678, %v2749
  %s2776 = scalar_lea.vmem %s1, 1040
  %v2777 = vld [vmem:[%s2776] sm:$0xff]
  %v2778 = vld [vmem:[%s2776 + $0x8] sm:$0xff]
  %v2779 = vld [vmem:[%s2776 + $0x10] sm:$0xff]
  %v2780 = vld [vmem:[%s2776 + $0x18] sm:$0xff]
  %v2781 = vld [vmem:[%s2776 + $0x20] sm:$0xff]
  %2783 = vset.pattern.permute.xlu0 0
  %2784 = vperm.xlu0 %2783, %v2777
  %v2785 = vpop.permute.xlu0 %2784
  %2788 = vset.pattern.permute.xlu0 0
  %2789 = vperm.xlu0 %2788, %v2778
  %v2790 = vpop.permute.xlu0 %2789
  %2793 = vset.pattern.permute.xlu0 0
  %2794 = vperm.xlu0 %2793, %v2779
  %v2795 = vpop.permute.xlu0 %2794
  %2798 = vset.pattern.permute.xlu0 0
  %2799 = vperm.xlu0 %2798, %v2780
  %v2800 = vpop.permute.xlu0 %2799
  %2803 = vset.pattern.permute.xlu0 0
  %2804 = vperm.xlu0 %2803, %v2781
  %v2805 = vpop.permute.xlu0 %2804
  %v2807 = vmul.f32 %v2785, %v79
  %v2808 = vmul.f32 %v2785, %v80
  %v2809 = vmul.f32 %v2790, %v81
  %v2810 = vmul.f32 %v2790, %v82
  %v2811 = vmul.f32 %v2795, %v83
  %v2812 = vmul.f32 %v2795, %v84
  %v2813 = vmul.f32 %v2800, %v85
  %v2814 = vmul.f32 %v2800, %v86
  %v2815 = vmul.f32 %v2805, %v87
  %v2816 = vmul.f32 %v2805, %v88
  %2827 = vrot.lane.b32.xlu0 %v2807, 120
  %v2828 = vpop.permute.xlu0 %2827
  %2829 = vrot.lane.b32.xlu0 %v2808, 120
  %v2830 = vpop.permute.xlu0 %2829
  %2831 = vrot.lane.b32.xlu0 %v2809, 120
  %v2832 = vpop.permute.xlu0 %2831
  %2833 = vrot.lane.b32.xlu0 %v2810, 120
  %v2834 = vpop.permute.xlu0 %2833
  %2835 = vrot.lane.b32.xlu0 %v2811, 120
  %v2836 = vpop.permute.xlu0 %2835
  %2837 = vrot.lane.b32.xlu0 %v2812, 120
  %v2838 = vpop.permute.xlu0 %2837
  %2839 = vrot.lane.b32.xlu0 %v2813, 120
  %v2840 = vpop.permute.xlu0 %2839
  %2841 = vrot.lane.b32.xlu0 %v2814, 120
  %v2842 = vpop.permute.xlu0 %2841
  %2843 = vrot.lane.b32.xlu0 %v2815, 120
  %v2844 = vpop.permute.xlu0 %2843
  %2845 = vrot.lane.b32.xlu0 %v2816, 120
  %v2846 = vpop.permute.xlu0 %2845
  %v2847 = vsel %vm559, %v2828, %v2830
  %v2848 = vsel %vm559, %v2832, %v2834
  %v2849 = vsel %vm559, %v2836, %v2838
  %v2850 = vsel %vm559, %v2840, %v2842
  %v2851 = vsel %vm559, %v2844, %v2846
  %v2862 = vadd.f32 %v2766, %v2847
  %v2863 = vadd.f32 %v2767, %v2830
  %v2864 = vadd.f32 %v2768, %v2848
  %v2865 = vadd.f32 %v2769, %v2834
  %v2866 = vadd.f32 %v2770, %v2849
  %v2867 = vadd.f32 %v2771, %v2838
  %v2868 = vadd.f32 %v2772, %v2850
  %v2869 = vadd.f32 %v2773, %v2842
  %v2870 = vadd.f32 %v2774, %v2851
  %v2871 = vadd.f32 %v2775, %v2846
  %s2872 = scalar_lea.vmem %s2, 80
  %v2873 = vld [vmem:[%s2872] sm:$0xff]
  %v2874 = vld [vmem:[%s2872 + $0x8] sm:$0xff]
  %v2875 = vld [vmem:[%s2872 + $0x10] sm:$0xff]
  %v2876 = vld [vmem:[%s2872 + $0x18] sm:$0xff]
  %v2877 = vld [vmem:[%s2872 + $0x20] sm:$0xff]
  %2879 = vset.pattern.permute.xlu0 0
  %2880 = vperm.xlu0 %2879, %v2873
  %v2881 = vpop.permute.xlu0 %2880
  %2884 = vset.pattern.permute.xlu0 0
  %2885 = vperm.xlu0 %2884, %v2874
  %v2886 = vpop.permute.xlu0 %2885
  %2889 = vset.pattern.permute.xlu0 0
  %2890 = vperm.xlu0 %2889, %v2875
  %v2891 = vpop.permute.xlu0 %2890
  %2894 = vset.pattern.permute.xlu0 0
  %2895 = vperm.xlu0 %2894, %v2876
  %v2896 = vpop.permute.xlu0 %2895
  %2899 = vset.pattern.permute.xlu0 0
  %2900 = vperm.xlu0 %2899, %v2877
  %v2901 = vpop.permute.xlu0 %2900
  %v2903 = vadd.f32 %v2862, %v2881
  %v2904 = vadd.f32 %v2863, %v2881
  %v2905 = vadd.f32 %v2864, %v2886
  %v2906 = vadd.f32 %v2865, %v2886
  %v2907 = vadd.f32 %v2866, %v2891
  %v2908 = vadd.f32 %v2867, %v2891
  %v2909 = vadd.f32 %v2868, %v2896
  %v2910 = vadd.f32 %v2869, %v2896
  %v2911 = vadd.f32 %v2870, %v2901
  %v2912 = vadd.f32 %v2871, %v2901
  %v2913 = vmax.f32 %v2903, 0.0
  %v2914 = vmax.f32 %v2904, 0.0
  %v2915 = vmax.f32 %v2905, 0.0
  %v2916 = vmax.f32 %v2906, 0.0
  %v2917 = vmax.f32 %v2907, 0.0
  %v2918 = vmax.f32 %v2908, 0.0
  %v2919 = vmax.f32 %v2909, 0.0
  %v2920 = vmax.f32 %v2910, 0.0
  %v2921 = vmax.f32 %v2911, 0.0
  %v2922 = vmax.f32 %v2912, 0.0
  %2933 = vrot.lane.b32.xlu0 %v2913, 127
  %v2934 = vpop.permute.xlu0 %2933
  %2935 = vrot.lane.b32.xlu0 %v2914, 127
  %v2936 = vpop.permute.xlu0 %2935
  %2937 = vrot.lane.b32.xlu0 %v2915, 127
  %v2938 = vpop.permute.xlu0 %2937
  %2939 = vrot.lane.b32.xlu0 %v2916, 127
  %v2940 = vpop.permute.xlu0 %2939
  %2941 = vrot.lane.b32.xlu0 %v2917, 127
  %v2942 = vpop.permute.xlu0 %2941
  %2943 = vrot.lane.b32.xlu0 %v2918, 127
  %v2944 = vpop.permute.xlu0 %2943
  %2945 = vrot.lane.b32.xlu0 %v2919, 127
  %v2946 = vpop.permute.xlu0 %2945
  %2947 = vrot.lane.b32.xlu0 %v2920, 127
  %v2948 = vpop.permute.xlu0 %2947
  %2949 = vrot.lane.b32.xlu0 %v2921, 127
  %v2950 = vpop.permute.xlu0 %2949
  %2951 = vrot.lane.b32.xlu0 %v2922, 127
  %v2952 = vpop.permute.xlu0 %2951
  %v2953 = vsel %vm200, %v2934, %v2936
  %v2954 = vsel %vm200, %v2938, %v2940
  %v2955 = vsel %vm200, %v2942, %v2944
  %v2956 = vsel %vm200, %v2946, %v2948
  %v2957 = vsel %vm200, %v2950, %v2952
  %v2968 = vmax.f32 %v2913, %v2953
  %v2969 = vmax.f32 %v2914, %v2936
  %v2970 = vmax.f32 %v2915, %v2954
  %v2971 = vmax.f32 %v2916, %v2940
  %v2972 = vmax.f32 %v2917, %v2955
  %v2973 = vmax.f32 %v2918, %v2944
  %v2974 = vmax.f32 %v2919, %v2956
  %v2975 = vmax.f32 %v2920, %v2948
  %v2976 = vmax.f32 %v2921, %v2957
  %v2977 = vmax.f32 %v2922, %v2952
  %2988 = vrot.lane.b32.xlu0 %v2968, 126
  %v2989 = vpop.permute.xlu0 %2988
  %2990 = vrot.lane.b32.xlu0 %v2969, 126
  %v2991 = vpop.permute.xlu0 %2990
  %2992 = vrot.lane.b32.xlu0 %v2970, 126
  %v2993 = vpop.permute.xlu0 %2992
  %2994 = vrot.lane.b32.xlu0 %v2971, 126
  %v2995 = vpop.permute.xlu0 %2994
  %2996 = vrot.lane.b32.xlu0 %v2972, 126
  %v2997 = vpop.permute.xlu0 %2996
  %2998 = vrot.lane.b32.xlu0 %v2973, 126
  %v2999 = vpop.permute.xlu0 %2998
  %3000 = vrot.lane.b32.xlu0 %v2974, 126
  %v3001 = vpop.permute.xlu0 %3000
  %3002 = vrot.lane.b32.xlu0 %v2975, 126
  %v3003 = vpop.permute.xlu0 %3002
  %3004 = vrot.lane.b32.xlu0 %v2976, 126
  %v3005 = vpop.permute.xlu0 %3004
  %3006 = vrot.lane.b32.xlu0 %v2977, 126
  %v3007 = vpop.permute.xlu0 %3006
  %v3008 = vsel %vm297, %v2989, %v2991
  %v3009 = vsel %vm297, %v2993, %v2995
  %v3010 = vsel %vm297, %v2997, %v2999
  %v3011 = vsel %vm297, %v3001, %v3003
  %v3012 = vsel %vm297, %v3005, %v3007
  %v3023 = vmax.f32 %v2968, %v3008
  %v3024 = vmax.f32 %v2969, %v2991
  %v3025 = vmax.f32 %v2970, %v3009
  %v3026 = vmax.f32 %v2971, %v2995
  %v3027 = vmax.f32 %v2972, %v3010
  %v3028 = vmax.f32 %v2973, %v2999
  %v3029 = vmax.f32 %v2974, %v3011
  %v3030 = vmax.f32 %v2975, %v3003
  %v3031 = vmax.f32 %v2976, %v3012
  %v3032 = vmax.f32 %v2977, %v3007
  %3043 = vrot.lane.b32.xlu0 %v3023, 124
  %v3044 = vpop.permute.xlu0 %3043
  %3045 = vrot.lane.b32.xlu0 %v3024, 124
  %v3046 = vpop.permute.xlu0 %3045
  %3047 = vrot.lane.b32.xlu0 %v3025, 124
  %v3048 = vpop.permute.xlu0 %3047
  %3049 = vrot.lane.b32.xlu0 %v3026, 124
  %v3050 = vpop.permute.xlu0 %3049
  %3051 = vrot.lane.b32.xlu0 %v3027, 124
  %v3052 = vpop.permute.xlu0 %3051
  %3053 = vrot.lane.b32.xlu0 %v3028, 124
  %v3054 = vpop.permute.xlu0 %3053
  %3055 = vrot.lane.b32.xlu0 %v3029, 124
  %v3056 = vpop.permute.xlu0 %3055
  %3057 = vrot.lane.b32.xlu0 %v3030, 124
  %v3058 = vpop.permute.xlu0 %3057
  %3059 = vrot.lane.b32.xlu0 %v3031, 124
  %v3060 = vpop.permute.xlu0 %3059
  %3061 = vrot.lane.b32.xlu0 %v3032, 124
  %v3062 = vpop.permute.xlu0 %3061
  %v3063 = vsel %vm513, %v3044, %v3046
  %v3064 = vsel %vm513, %v3048, %v3050
  %v3065 = vsel %vm513, %v3052, %v3054
  %v3066 = vsel %vm513, %v3056, %v3058
  %v3067 = vsel %vm513, %v3060, %v3062
  %v3078 = vmax.f32 %v3023, %v3063
  %v3079 = vmax.f32 %v3024, %v3046
  %v3080 = vmax.f32 %v3025, %v3064
  %v3081 = vmax.f32 %v3026, %v3050
  %v3082 = vmax.f32 %v3027, %v3065
  %v3083 = vmax.f32 %v3028, %v3054
  %v3084 = vmax.f32 %v3029, %v3066
  %v3085 = vmax.f32 %v3030, %v3058
  %v3086 = vmax.f32 %v3031, %v3067
  %v3087 = vmax.f32 %v3032, %v3062
  %3088 = vrot.lane.b32.xlu0 %v2968, 120
  %v3089 = vpop.permute.xlu0 %3088
  %3090 = vrot.lane.b32.xlu0 %v2969, 120
  %v3091 = vpop.permute.xlu0 %3090
  %3092 = vrot.lane.b32.xlu0 %v2970, 120
  %v3093 = vpop.permute.xlu0 %3092
  %3094 = vrot.lane.b32.xlu0 %v2971, 120
  %v3095 = vpop.permute.xlu0 %3094
  %3096 = vrot.lane.b32.xlu0 %v2972, 120
  %v3097 = vpop.permute.xlu0 %3096
  %3098 = vrot.lane.b32.xlu0 %v2973, 120
  %v3099 = vpop.permute.xlu0 %3098
  %3100 = vrot.lane.b32.xlu0 %v2974, 120
  %v3101 = vpop.permute.xlu0 %3100
  %3102 = vrot.lane.b32.xlu0 %v2975, 120
  %v3103 = vpop.permute.xlu0 %3102
  %3104 = vrot.lane.b32.xlu0 %v2976, 120
  %v3105 = vpop.permute.xlu0 %3104
  %3106 = vrot.lane.b32.xlu0 %v2977, 120
  %v3107 = vpop.permute.xlu0 %3106
  %v3108 = vsel %vm559, %v3089, %v3091
  %v3109 = vsel %vm559, %v3093, %v3095
  %v3110 = vsel %vm559, %v3097, %v3099
  %v3111 = vsel %vm559, %v3101, %v3103
  %v3112 = vsel %vm559, %v3105, %v3107
  %v3123 = vmax.f32 %v3078, %v3108
  %v3124 = vmax.f32 %v3079, %v3091
  %v3125 = vmax.f32 %v3080, %v3109
  %v3126 = vmax.f32 %v3081, %v3095
  %v3127 = vmax.f32 %v3082, %v3110
  %v3128 = vmax.f32 %v3083, %v3099
  %v3129 = vmax.f32 %v3084, %v3111
  %v3130 = vmax.f32 %v3085, %v3103
  %v3131 = vmax.f32 %v3086, %v3112
  %v3132 = vmax.f32 %v3087, %v3107
  %3138 = vrot.lane.b32.xlu0 %v3123, 28
  %v3139 = vpop.permute.xlu0 %3138
  %3140 = vrot.lane.b32.xlu0 %v3125, 28
  %v3141 = vpop.permute.xlu0 %3140
  %3142 = vrot.lane.b32.xlu0 %v3127, 28
  %v3143 = vpop.permute.xlu0 %3142
  %3144 = vrot.lane.b32.xlu0 %v3129, 28
  %v3145 = vpop.permute.xlu0 %3144
  %3146 = vrot.lane.b32.xlu0 %v3131, 28
  %v3147 = vpop.permute.xlu0 %3146
  %vm3153 = vcmask 269568
  %3154 = vst.msk [vmem:[#allocation3] sm:$0xff] %vm3153, %v3139
  %3155 = vst.msk [vmem:[#allocation3 + $0x8] sm:$0xff] %vm3153, %v3141
  %3156 = vst.msk [vmem:[#allocation3 + $0x10] sm:$0xff] %vm3153, %v3143
  %3157 = vst.msk [vmem:[#allocation3 + $0x18] sm:$0xff] %vm3153, %v3145
  %3158 = vst.msk [vmem:[#allocation3 + $0x20] sm:$0xff] %vm3153, %v3147
  %3159 = vrot.lane.b32.xlu0 %v3123, 19
  %v3160 = vpop.permute.xlu0 %3159
  %3161 = vrot.lane.b32.xlu0 %v3125, 19
  %v3162 = vpop.permute.xlu0 %3161
  %3163 = vrot.lane.b32.xlu0 %v3127, 19
  %v3164 = vpop.permute.xlu0 %3163
  %3165 = vrot.lane.b32.xlu0 %v3129, 19
  %v3166 = vpop.permute.xlu0 %3165
  %3167 = vrot.lane.b32.xlu0 %v3131, 19
  %v3168 = vpop.permute.xlu0 %3167
  %vm3174 = vcmask 277768
  %3175 = vst.msk [vmem:[#allocation3] sm:$0xff] %vm3174, %v3160
  %3176 = vst.msk [vmem:[#allocation3 + $0x8] sm:$0xff] %vm3174, %v3162
  %3177 = vst.msk [vmem:[#allocation3 + $0x10] sm:$0xff] %vm3174, %v3164
  %3178 = vst.msk [vmem:[#allocation3 + $0x18] sm:$0xff] %vm3174, %v3166
  %3179 = vst.msk [vmem:[#allocation3 + $0x20] sm:$0xff] %vm3174, %v3168
  %3180 = vrot.lane.b32.xlu0 %v3123, 10
  %v3181 = vpop.permute.xlu0 %3180
  %3182 = vrot.lane.b32.xlu0 %v3125, 10
  %v3183 = vpop.permute.xlu0 %3182
  %3184 = vrot.lane.b32.xlu0 %v3127, 10
  %v3185 = vpop.permute.xlu0 %3184
  %3186 = vrot.lane.b32.xlu0 %v3129, 10
  %v3187 = vpop.permute.xlu0 %3186
  %3188 = vrot.lane.b32.xlu0 %v3131, 10
  %v3189 = vpop.permute.xlu0 %3188
  %vm3195 = vcmask 285968
  %3196 = vst.msk [vmem:[#allocation3] sm:$0xff] %vm3195, %v3181
  %3197 = vst.msk [vmem:[#allocation3 + $0x8] sm:$0xff] %vm3195, %v3183
  %3198 = vst.msk [vmem:[#allocation3 + $0x10] sm:$0xff] %vm3195, %v3185
  %3199 = vst.msk [vmem:[#allocation3 + $0x18] sm:$0xff] %vm3195, %v3187
  %3200 = vst.msk [vmem:[#allocation3 + $0x20] sm:$0xff] %vm3195, %v3189
  %3201 = vrot.lane.b32.xlu0 %v3123, 1
  %v3202 = vpop.permute.xlu0 %3201
  %3203 = vrot.lane.b32.xlu0 %v3125, 1
  %v3204 = vpop.permute.xlu0 %3203
  %3205 = vrot.lane.b32.xlu0 %v3127, 1
  %v3206 = vpop.permute.xlu0 %3205
  %3207 = vrot.lane.b32.xlu0 %v3129, 1
  %v3208 = vpop.permute.xlu0 %3207
  %3209 = vrot.lane.b32.xlu0 %v3131, 1
  %v3210 = vpop.permute.xlu0 %3209
  %vm3216 = vcmask 294168
  %3217 = vst.msk [vmem:[#allocation3] sm:$0xff] %vm3216, %v3202
  %3218 = vst.msk [vmem:[#allocation3 + $0x8] sm:$0xff] %vm3216, %v3204
  %3219 = vst.msk [vmem:[#allocation3 + $0x10] sm:$0xff] %vm3216, %v3206
  %3220 = vst.msk [vmem:[#allocation3 + $0x18] sm:$0xff] %vm3216, %v3208
  %3221 = vst.msk [vmem:[#allocation3 + $0x20] sm:$0xff] %vm3216, %v3210
  %3222 = vrot.lane.b32.xlu0 %v3123, 120
  %v3223 = vpop.permute.xlu0 %3222
  %3224 = vrot.lane.b32.xlu0 %v3125, 120
  %v3225 = vpop.permute.xlu0 %3224
  %3226 = vrot.lane.b32.xlu0 %v3127, 120
  %v3227 = vpop.permute.xlu0 %3226
  %3228 = vrot.lane.b32.xlu0 %v3129, 120
  %v3229 = vpop.permute.xlu0 %3228
  %3230 = vrot.lane.b32.xlu0 %v3131, 120
  %v3231 = vpop.permute.xlu0 %3230
  %vm3237 = vcmask 302368
  %3238 = vst.msk [vmem:[#allocation3] sm:$0xff] %vm3237, %v3223
  %3239 = vst.msk [vmem:[#allocation3 + $0x8] sm:$0xff] %vm3237, %v3225
  %3240 = vst.msk [vmem:[#allocation3 + $0x10] sm:$0xff] %vm3237, %v3227
  %3241 = vst.msk [vmem:[#allocation3 + $0x18] sm:$0xff] %vm3237, %v3229
  %3242 = vst.msk [vmem:[#allocation3 + $0x20] sm:$0xff] %vm3237, %v3231
  %3243 = vrot.lane.b32.xlu0 %v3123, 111
  %v3244 = vpop.permute.xlu0 %3243
  %3245 = vrot.lane.b32.xlu0 %v3125, 111
  %v3246 = vpop.permute.xlu0 %3245
  %3247 = vrot.lane.b32.xlu0 %v3127, 111
  %v3248 = vpop.permute.xlu0 %3247
  %3249 = vrot.lane.b32.xlu0 %v3129, 111
  %v3250 = vpop.permute.xlu0 %3249
  %3251 = vrot.lane.b32.xlu0 %v3131, 111
  %v3252 = vpop.permute.xlu0 %3251
  %vm3258 = vcmask 310568
  %3259 = vst.msk [vmem:[#allocation3] sm:$0xff] %vm3258, %v3244
  %3260 = vst.msk [vmem:[#allocation3 + $0x8] sm:$0xff] %vm3258, %v3246
  %3261 = vst.msk [vmem:[#allocation3 + $0x10] sm:$0xff] %vm3258, %v3248
  %3262 = vst.msk [vmem:[#allocation3 + $0x18] sm:$0xff] %vm3258, %v3250
  %3263 = vst.msk [vmem:[#allocation3 + $0x20] sm:$0xff] %vm3258, %v3252
  %3264 = vrot.lane.b32.xlu0 %v3123, 102
  %v3265 = vpop.permute.xlu0 %3264
  %3266 = vrot.lane.b32.xlu0 %v3125, 102
  %v3267 = vpop.permute.xlu0 %3266
  %3268 = vrot.lane.b32.xlu0 %v3127, 102
  %v3269 = vpop.permute.xlu0 %3268
  %3270 = vrot.lane.b32.xlu0 %v3129, 102
  %v3271 = vpop.permute.xlu0 %3270
  %3272 = vrot.lane.b32.xlu0 %v3131, 102
  %v3273 = vpop.permute.xlu0 %3272
  %vm3279 = vcmask 318768
  %3280 = vst.msk [vmem:[#allocation3] sm:$0xff] %vm3279, %v3265
  %3281 = vst.msk [vmem:[#allocation3 + $0x8] sm:$0xff] %vm3279, %v3267
  %3282 = vst.msk [vmem:[#allocation3 + $0x10] sm:$0xff] %vm3279, %v3269
  %3283 = vst.msk [vmem:[#allocation3 + $0x18] sm:$0xff] %vm3279, %v3271
  %3284 = vst.msk [vmem:[#allocation3 + $0x20] sm:$0xff] %vm3279, %v3273
  %3285 = vrot.lane.b32.xlu0 %v3123, 93
  %v3286 = vpop.permute.xlu0 %3285
  %3287 = vrot.lane.b32.xlu0 %v3125, 93
  %v3288 = vpop.permute.xlu0 %3287
  %3289 = vrot.lane.b32.xlu0 %v3127, 93
  %v3290 = vpop.permute.xlu0 %3289
  %3291 = vrot.lane.b32.xlu0 %v3129, 93
  %v3292 = vpop.permute.xlu0 %3291
  %3293 = vrot.lane.b32.xlu0 %v3131, 93
  %v3294 = vpop.permute.xlu0 %3293
  %vm3300 = vcmask 326968
  %3301 = vst.msk [vmem:[#allocation3] sm:$0xff] %vm3300, %v3286
  %3302 = vst.msk [vmem:[#allocation3 + $0x8] sm:$0xff] %vm3300, %v3288
  %3303 = vst.msk [vmem:[#allocation3 + $0x10] sm:$0xff] %vm3300, %v3290
  %3304 = vst.msk [vmem:[#allocation3 + $0x18] sm:$0xff] %vm3300, %v3292
  %3305 = vst.msk [vmem:[#allocation3 + $0x20] sm:$0xff] %vm3300, %v3294
  %3306 = vrot.lane.b32.xlu0 %v3123, 84
  %v3307 = vpop.permute.xlu0 %3306
  %3308 = vrot.lane.b32.xlu0 %v3125, 84
  %v3309 = vpop.permute.xlu0 %3308
  %3310 = vrot.lane.b32.xlu0 %v3127, 84
  %v3311 = vpop.permute.xlu0 %3310
  %3312 = vrot.lane.b32.xlu0 %v3129, 84
  %v3313 = vpop.permute.xlu0 %3312
  %3314 = vrot.lane.b32.xlu0 %v3131, 84
  %v3315 = vpop.permute.xlu0 %3314
  %vm3321 = vcmask 335168
  %3322 = vst.msk [vmem:[#allocation3] sm:$0xff] %vm3321, %v3307
  %3323 = vst.msk [vmem:[#allocation3 + $0x8] sm:$0xff] %vm3321, %v3309
  %3324 = vst.msk [vmem:[#allocation3 + $0x10] sm:$0xff] %vm3321, %v3311
  %3325 = vst.msk [vmem:[#allocation3 + $0x18] sm:$0xff] %vm3321, %v3313
  %3326 = vst.msk [vmem:[#allocation3 + $0x20] sm:$0xff] %vm3321, %v3315
  %3327 = vrot.lane.b32.xlu0 %v3123, 75
  %v3328 = vpop.permute.xlu0 %3327
  %3329 = vrot.lane.b32.xlu0 %v3125, 75
  %v3330 = vpop.permute.xlu0 %3329
  %3331 = vrot.lane.b32.xlu0 %v3127, 75
  %v3332 = vpop.permute.xlu0 %3331
  %3333 = vrot.lane.b32.xlu0 %v3129, 75
  %v3334 = vpop.permute.xlu0 %3333
  %3335 = vrot.lane.b32.xlu0 %v3131, 75
  %v3336 = vpop.permute.xlu0 %3335
  %vm3342 = vcmask 343368
  %3343 = vst.msk [vmem:[#allocation3] sm:$0xff] %vm3342, %v3328
  %3344 = vst.msk [vmem:[#allocation3 + $0x8] sm:$0xff] %vm3342, %v3330
  %3345 = vst.msk [vmem:[#allocation3 + $0x10] sm:$0xff] %vm3342, %v3332
  %3346 = vst.msk [vmem:[#allocation3 + $0x18] sm:$0xff] %vm3342, %v3334
  %3347 = vst.msk [vmem:[#allocation3 + $0x20] sm:$0xff] %vm3342, %v3336
  %3348 = vrot.lane.b32.xlu0 %v3123, 66
  %v3349 = vpop.permute.xlu0 %3348
  %3350 = vrot.lane.b32.xlu0 %v3125, 66
  %v3351 = vpop.permute.xlu0 %3350
  %3352 = vrot.lane.b32.xlu0 %v3127, 66
  %v3353 = vpop.permute.xlu0 %3352
  %3354 = vrot.lane.b32.xlu0 %v3129, 66
  %v3355 = vpop.permute.xlu0 %3354
  %3356 = vrot.lane.b32.xlu0 %v3131, 66
  %v3357 = vpop.permute.xlu0 %3356
  %vm3363 = vcmask 351568
  %3364 = vst.msk [vmem:[#allocation3] sm:$0xff] %vm3363, %v3349
  %3365 = vst.msk [vmem:[#allocation3 + $0x8] sm:$0xff] %vm3363, %v3351
  %3366 = vst.msk [vmem:[#allocation3 + $0x10] sm:$0xff] %vm3363, %v3353
  %3367 = vst.msk [vmem:[#allocation3 + $0x18] sm:$0xff] %vm3363, %v3355
  %3368 = vst.msk [vmem:[#allocation3 + $0x20] sm:$0xff] %vm3363, %v3357
  %3369 = vrot.lane.b32.xlu0 %v3123, 57
  %v3370 = vpop.permute.xlu0 %3369
  %3371 = vrot.lane.b32.xlu0 %v3125, 57
  %v3372 = vpop.permute.xlu0 %3371
  %3373 = vrot.lane.b32.xlu0 %v3127, 57
  %v3374 = vpop.permute.xlu0 %3373
  %3375 = vrot.lane.b32.xlu0 %v3129, 57
  %v3376 = vpop.permute.xlu0 %3375
  %3377 = vrot.lane.b32.xlu0 %v3131, 57
  %v3378 = vpop.permute.xlu0 %3377
  %vm3384 = vcmask 359768
  %3385 = vst.msk [vmem:[#allocation3] sm:$0xff] %vm3384, %v3370
  %3386 = vst.msk [vmem:[#allocation3 + $0x8] sm:$0xff] %vm3384, %v3372
  %3387 = vst.msk [vmem:[#allocation3 + $0x10] sm:$0xff] %vm3384, %v3374
  %3388 = vst.msk [vmem:[#allocation3 + $0x18] sm:$0xff] %vm3384, %v3376
  %3389 = vst.msk [vmem:[#allocation3 + $0x20] sm:$0xff] %vm3384, %v3378
  %3390 = vrot.lane.b32.xlu0 %v3123, 48
  %v3391 = vpop.permute.xlu0 %3390
  %3392 = vrot.lane.b32.xlu0 %v3125, 48
  %v3393 = vpop.permute.xlu0 %3392
  %3394 = vrot.lane.b32.xlu0 %v3127, 48
  %v3395 = vpop.permute.xlu0 %3394
  %3396 = vrot.lane.b32.xlu0 %v3129, 48
  %v3397 = vpop.permute.xlu0 %3396
  %3398 = vrot.lane.b32.xlu0 %v3131, 48
  %v3399 = vpop.permute.xlu0 %3398
  %vm3405 = vcmask 367968
  %3406 = vst.msk [vmem:[#allocation3] sm:$0xff] %vm3405, %v3391
  %3407 = vst.msk [vmem:[#allocation3 + $0x8] sm:$0xff] %vm3405, %v3393
  %3408 = vst.msk [vmem:[#allocation3 + $0x10] sm:$0xff] %vm3405, %v3395
  %3409 = vst.msk [vmem:[#allocation3 + $0x18] sm:$0xff] %vm3405, %v3397
  %3410 = vst.msk [vmem:[#allocation3 + $0x20] sm:$0xff] %vm3405, %v3399
  %3416 = vrot.lane.b32.xlu0 %v3124, 39
  %v3417 = vpop.permute.xlu0 %3416
  %3418 = vrot.lane.b32.xlu0 %v3126, 39
  %v3419 = vpop.permute.xlu0 %3418
  %3420 = vrot.lane.b32.xlu0 %v3128, 39
  %v3421 = vpop.permute.xlu0 %3420
  %3422 = vrot.lane.b32.xlu0 %v3130, 39
  %v3423 = vpop.permute.xlu0 %3422
  %3424 = vrot.lane.b32.xlu0 %v3132, 39
  %v3425 = vpop.permute.xlu0 %3424
  %vm3431 = vcmask 376168
  %3432 = vst.msk [vmem:[#allocation3] sm:$0xff] %vm3431, %v3417
  %3433 = vst.msk [vmem:[#allocation3 + $0x8] sm:$0xff] %vm3431, %v3419
  %3434 = vst.msk [vmem:[#allocation3 + $0x10] sm:$0xff] %vm3431, %v3421
  %3435 = vst.msk [vmem:[#allocation3 + $0x18] sm:$0xff] %vm3431, %v3423
  %3436 = vst.msk [vmem:[#allocation3 + $0x20] sm:$0xff] %vm3431, %v3425
  %3437 = vrot.lane.b32.xlu0 %v3124, 30
  %v3438 = vpop.permute.xlu0 %3437
  %3439 = vrot.lane.b32.xlu0 %v3126, 30
  %v3440 = vpop.permute.xlu0 %3439
  %3441 = vrot.lane.b32.xlu0 %v3128, 30
  %v3442 = vpop.permute.xlu0 %3441
  %3443 = vrot.lane.b32.xlu0 %v3130, 30
  %v3444 = vpop.permute.xlu0 %3443
  %3445 = vrot.lane.b32.xlu0 %v3132, 30
  %v3446 = vpop.permute.xlu0 %3445
  %vm3452 = vcmask 384368
  %3453 = vst.msk [vmem:[#allocation3] sm:$0xff] %vm3452, %v3438
  %3454 = vst.msk [vmem:[#allocation3 + $0x8] sm:$0xff] %vm3452, %v3440
  %3455 = vst.msk [vmem:[#allocation3 + $0x10] sm:$0xff] %vm3452, %v3442
  %3456 = vst.msk [vmem:[#allocation3 + $0x18] sm:$0xff] %vm3452, %v3444
  %3457 = vst.msk [vmem:[#allocation3 + $0x20] sm:$0xff] %vm3452, %v3446
  %3458 = vrot.lane.b32.xlu0 %v3124, 21
  %v3459 = vpop.permute.xlu0 %3458
  %3460 = vrot.lane.b32.xlu0 %v3126, 21
  %v3461 = vpop.permute.xlu0 %3460
  %3462 = vrot.lane.b32.xlu0 %v3128, 21
  %v3463 = vpop.permute.xlu0 %3462
  %3464 = vrot.lane.b32.xlu0 %v3130, 21
  %v3465 = vpop.permute.xlu0 %3464
  %3466 = vrot.lane.b32.xlu0 %v3132, 21
  %v3467 = vpop.permute.xlu0 %3466
  %vm3473 = vcmask 392568
  %3474 = vst.msk [vmem:[#allocation3] sm:$0xff] %vm3473, %v3459
  %3475 = vst.msk [vmem:[#allocation3 + $0x8] sm:$0xff] %vm3473, %v3461
  %3476 = vst.msk [vmem:[#allocation3 + $0x10] sm:$0xff] %vm3473, %v3463
  %3477 = vst.msk [vmem:[#allocation3 + $0x18] sm:$0xff] %vm3473, %v3465
  %3478 = vst.msk [vmem:[#allocation3 + $0x20] sm:$0xff] %vm3473, %v3467
  %v3479 = vld [vmem:[#allocation3] sm:$0xf]
  %vm3480 = vcmask 388096
  %3481 = vst.msk [vmem:[#allocation4] sm:$0xf] %vm3480, %v3479
  %v3482 = vld [vmem:[#allocation3 + $0x4] sm:$0xf]
  %3484 = vrot.lane.b32.xlu0 %v3482, 48
  %v3485 = vpop.permute.xlu0 %3484
  %vm3487 = vcmask 781696
  %3488 = vst.msk [vmem:[#allocation4] sm:$0xf] %vm3487, %v3485
  %v3489 = vld [vmem:[#allocation3 + $0x8] sm:$0xf]
  %3491 = vrot.lane.b32.xlu0 %v3489, 96
  %v3492 = vpop.permute.xlu0 %3491
  %v3493 = vrot.slane %v3492, 4
  %vm3494 = vcmask 785408
  %v3495 = vsel %vm3494, %v3493, %v3492
  %vm3497 = vcmask 1044224
  %vm3498 = vcmask 130052
  %vm3499 = vmor %vm3498, %vm3497
  %3500 = vst.msk [vmem:[#allocation4] sm:$0xff] %vm3499, %v3495
  %v3501 = vld [vmem:[#allocation3 + $0xc] sm:$0xf]
  %3503 = vrot.lane.b32.xlu0 %v3501, 16
  %v3504 = vpop.permute.xlu0 %3503
  %vm3506 = vcmask 519296
  %3507 = vst.msk [vmem:[#allocation4 + $0x4] sm:$0xf] %vm3506, %v3504
  %v3508 = vld [vmem:[#allocation3 + $0x10] sm:$0xf]
  %3510 = vrot.lane.b32.xlu0 %v3508, 64
  %v3511 = vpop.permute.xlu0 %3510
  %vm3513 = vcmask 912896
  %3514 = vst.msk [vmem:[#allocation4 + $0x4] sm:$0xf] %vm3513, %v3511
  %v3515 = vld [vmem:[#allocation3 + $0x14] sm:$0xf]
  %3517 = vrot.lane.b32.xlu0 %v3515, 112
  %v3518 = vpop.permute.xlu0 %3517
  %v3519 = vrot.slane %v3518, 4
  %vm3520 = vcmask 916480
  %v3521 = vsel %vm3520, %v3519, %v3518
  %vm3523 = vcmask 1044352
  %vm3524 = vcmask 261124
  %vm3525 = vmor %vm3524, %vm3523
  %3526 = vst.msk [vmem:[#allocation4 + $0x4] sm:$0xff] %vm3525, %v3521
  %v3527 = vld [vmem:[#allocation3 + $0x18] sm:$0xf]
  %3529 = vrot.lane.b32.xlu0 %v3527, 32
  %v3530 = vpop.permute.xlu0 %3529
  %vm3532 = vcmask 650496
  %3533 = vst.msk [vmem:[#allocation4 + $0x8] sm:$0xf] %vm3532, %v3530
  %v3534 = vld [vmem:[#allocation3 + $0x1c] sm:$0xf]
  %3536 = vrot.lane.b32.xlu0 %v3534, 80
  %v3537 = vpop.permute.xlu0 %3536
  %vm3539 = vcmask 1044096
  %3540 = vst.msk [vmem:[#allocation4 + $0x8] sm:$0xf] %vm3539, %v3537
  %v3541 = vld [vmem:[#allocation3 + $0x20] sm:$0xf]
  %3542 = vst.msk [vmem:[#allocation4 + $0xc] sm:$0xf] %vm3480, %v3541
  %v3543 = vld [vmem:[#allocation3 + $0x24] sm:$0xf]
  %3545 = vrot.lane.b32.xlu0 %v3543, 48
  %v3546 = vpop.permute.xlu0 %3545
  %3548 = vst.msk [vmem:[#allocation4 + $0xc] sm:$0xf] %vm3487, %v3546
  %v3549 = vld [vmem:[#allocation4] sm:$0xff]
  %v3550 = vld [vmem:[#allocation4 + $0x8] sm:$0xff]
  %v3553 = vcombine.high %v3549, %v3549
  %v3554 = vcombine.high %v3550, %v3550
  %v3557 = vpack.c.bf16 %v3549, %v3549
  %v3558 = vpack.c.bf16 %v3553, %v3553
  %v3559 = vpack.c.bf16 %v3550, %v3550
  %v3560 = vpack.c.bf16 %v3554, %v3554
  %v3561 = vld [vmem:[%s3] sm:$0xf]
  %v3562 = vld [vmem:[%s3 + $0x4] sm:$0xf]
  %v3563 = vld [vmem:[%s3 + $0x8] sm:$0xf]
  %v3564 = vld [vmem:[%s3 + $0xc] sm:$0xf]
  %v3565 = vld [vmem:[%s3 + $0x10] sm:$0xf]
  %v3566 = vld [vmem:[%s3 + $0x14] sm:$0xf]
  %v3567 = vld [vmem:[%s3 + $0x18] sm:$0xf]
  %v3568 = vld [vmem:[%s3 + $0x1c] sm:$0xf]
  %v3569 = vld [vmem:[%s3 + $0x20] sm:$0xf]
  %v3570 = vld [vmem:[%s3 + $0x24] sm:$0xf]
  %v3571 = vld [vmem:[%s3 + $0x28] sm:$0xf]
  %v3572 = vld [vmem:[%s3 + $0x2c] sm:$0xf]
  %v3573 = vld [vmem:[%s3 + $0x30] sm:$0xf]
  %v3574 = vld [vmem:[%s3 + $0x34] sm:$0xf]
  %v3575 = vld [vmem:[%s3 + $0x38] sm:$0xf]
  %v3576 = vld [vmem:[%s3 + $0x3c] sm:$0xf]
  %v3577 = vld [vmem:[%s3 + $0x40] sm:$0xf]
  %v3578 = vld [vmem:[%s3 + $0x44] sm:$0xf]
  %v3579 = vld [vmem:[%s3 + $0x48] sm:$0xf]
  %v3580 = vld [vmem:[%s3 + $0x4c] sm:$0xf]
  %v3581 = vld [vmem:[%s3 + $0x50] sm:$0xf]
  %v3582 = vld [vmem:[%s3 + $0x54] sm:$0xf]
  %v3583 = vld [vmem:[%s3 + $0x58] sm:$0xf]
  %v3584 = vld [vmem:[%s3 + $0x5c] sm:$0xf]
  %v3585 = vld [vmem:[%s3 + $0x60] sm:$0xf]
  %v3586 = vld [vmem:[%s3 + $0x64] sm:$0xf]
  %v3587 = vld [vmem:[%s3 + $0x68] sm:$0xf]
  %v3588 = vld [vmem:[%s3 + $0x6c] sm:$0xf]
  %v3589 = vld [vmem:[%s3 + $0x70] sm:$0xf]
  %v3590 = vld [vmem:[%s3 + $0x74] sm:$0xf]
  %v3591 = vld [vmem:[%s3 + $0x78] sm:$0xf]
  %v3592 = vld [vmem:[%s3 + $0x7c] sm:$0xf]
  %v3593 = vld [vmem:[%s3 + $0x80] sm:$0xf]
  %v3594 = vld [vmem:[%s3 + $0x84] sm:$0xf]
  %v3595 = vld [vmem:[%s3 + $0x88] sm:$0xf]
  %v3596 = vld [vmem:[%s3 + $0x8c] sm:$0xf]
  %v3597 = vld [vmem:[%s3 + $0x90] sm:$0xf]
  %v3598 = vld [vmem:[%s3 + $0x94] sm:$0xf]
  %v3599 = vld [vmem:[%s3 + $0x98] sm:$0xf]
  %v3600 = vld [vmem:[%s3 + $0x9c] sm:$0xf]
  %v3601 = vld [vmem:[%s3 + $0xa0] sm:$0xf]
  %v3602 = vld [vmem:[%s3 + $0xa4] sm:$0xf]
  %v3603 = vld [vmem:[%s3 + $0xa8] sm:$0xf]
  %v3604 = vld [vmem:[%s3 + $0xac] sm:$0xf]
  %v3605 = vld [vmem:[%s3 + $0xb0] sm:$0xf]
  %v3606 = vld [vmem:[%s3 + $0xb4] sm:$0xf]
  %v3607 = vld [vmem:[%s3 + $0xb8] sm:$0xf]
  %v3608 = vld [vmem:[%s3 + $0xbc] sm:$0xf]
  %v3609 = vld [vmem:[%s3 + $0xc0] sm:$0xf]
  %v3610 = vld [vmem:[%s3 + $0xc4] sm:$0xf]
  %v3611 = vld [vmem:[%s3 + $0xc8] sm:$0xf]
  %v3612 = vld [vmem:[%s3 + $0xcc] sm:$0xf]
  %v3613 = vld [vmem:[%s3 + $0xd0] sm:$0xf]
  %v3614 = vld [vmem:[%s3 + $0xd4] sm:$0xf]
  %v3615 = vld [vmem:[%s3 + $0xd8] sm:$0xf]
  %v3616 = vld [vmem:[%s3 + $0xdc] sm:$0xf]
  %v3617 = vld [vmem:[%s3 + $0xe0] sm:$0xf]
  %v3618 = vld [vmem:[%s3 + $0xe4] sm:$0xf]
  %v3619 = vld [vmem:[%s3 + $0xe8] sm:$0xf]
  %v3620 = vld [vmem:[%s3 + $0xec] sm:$0xf]
  %v3621 = vld [vmem:[%s4] sm:$0x1]
  %v3623 = vlaneseq
  %v3624 = vshrl.u32 %v3623, 7
  %v3625 = vsub.s32 0, %v3624
  %v3626 = vrot.slane %v3621, %v3625
  %v3688 = vunpack.c.l.b16 %v3561
  %v3689 = vunpack.c.l.b16 %v3562
  %v3690 = vunpack.c.l.b16 %v3563
  %v3691 = vunpack.c.l.b16 %v3564
  %v3692 = vunpack.c.l.b16 %v3565
  %v3693 = vunpack.c.l.b16 %v3566
  %v3694 = vunpack.c.l.b16 %v3567
  %v3695 = vunpack.c.l.b16 %v3568
  %v3696 = vunpack.c.l.b16 %v3569
  %v3697 = vunpack.c.l.b16 %v3570
  %v3698 = vunpack.c.l.b16 %v3571
  %v3699 = vunpack.c.l.b16 %v3572
  %v3700 = vunpack.c.l.b16 %v3573
  %v3701 = vunpack.c.l.b16 %v3574
  %v3702 = vunpack.c.l.b16 %v3575
  %v3703 = vunpack.c.l.b16 %v3576
  %v3704 = vunpack.c.l.b16 %v3577
  %v3705 = vunpack.c.l.b16 %v3578
  %v3706 = vunpack.c.l.b16 %v3579
  %v3707 = vunpack.c.l.b16 %v3580
  %v3708 = vunpack.c.l.b16 %v3581
  %v3709 = vunpack.c.l.b16 %v3582
  %v3710 = vunpack.c.l.b16 %v3583
  %v3711 = vunpack.c.l.b16 %v3584
  %v3712 = vunpack.c.l.b16 %v3585
  %v3713 = vunpack.c.l.b16 %v3586
  %v3714 = vunpack.c.l.b16 %v3587
  %v3715 = vunpack.c.l.b16 %v3588
  %v3716 = vunpack.c.l.b16 %v3589
  %v3717 = vunpack.c.l.b16 %v3590
  %v3718 = vunpack.c.l.b16 %v3591
  %v3719 = vunpack.c.l.b16 %v3592
  %v3720 = vunpack.c.l.b16 %v3593
  %v3721 = vunpack.c.l.b16 %v3594
  %v3722 = vunpack.c.l.b16 %v3595
  %v3723 = vunpack.c.l.b16 %v3596
  %v3724 = vunpack.c.l.b16 %v3597
  %v3725 = vunpack.c.l.b16 %v3598
  %v3726 = vunpack.c.l.b16 %v3599
  %v3727 = vunpack.c.l.b16 %v3600
  %v3728 = vunpack.c.l.b16 %v3601
  %v3729 = vunpack.c.l.b16 %v3602
  %v3730 = vunpack.c.l.b16 %v3603
  %v3731 = vunpack.c.l.b16 %v3604
  %v3732 = vunpack.c.l.b16 %v3605
  %v3733 = vunpack.c.l.b16 %v3606
  %v3734 = vunpack.c.l.b16 %v3607
  %v3735 = vunpack.c.l.b16 %v3608
  %v3736 = vunpack.c.l.b16 %v3609
  %v3737 = vunpack.c.l.b16 %v3610
  %v3738 = vunpack.c.l.b16 %v3611
  %v3739 = vunpack.c.l.b16 %v3612
  %v3740 = vunpack.c.l.b16 %v3613
  %v3741 = vunpack.c.l.b16 %v3614
  %v3742 = vunpack.c.l.b16 %v3615
  %v3743 = vunpack.c.l.b16 %v3616
  %v3744 = vunpack.c.l.b16 %v3617
  %v3745 = vunpack.c.l.b16 %v3618
  %v3746 = vunpack.c.l.b16 %v3619
  %v3747 = vunpack.c.l.b16 %v3620
  %v3748 = vpack.c.b16 %v3689, %v3688
  %v3749 = vpack.c.b16 %v3691, %v3690
  %v3750 = vpack.c.b16 %v3693, %v3692
  %v3751 = vpack.c.b16 %v3695, %v3694
  %v3752 = vpack.c.b16 %v3697, %v3696
  %v3753 = vpack.c.b16 %v3699, %v3698
  %v3754 = vpack.c.b16 %v3701, %v3700
  %v3755 = vpack.c.b16 %v3703, %v3702
  %v3756 = vpack.c.b16 %v3705, %v3704
  %v3757 = vpack.c.b16 %v3707, %v3706
  %v3758 = vpack.c.b16 %v3709, %v3708
  %v3759 = vpack.c.b16 %v3711, %v3710
  %v3760 = vpack.c.b16 %v3713, %v3712
  %v3761 = vpack.c.b16 %v3715, %v3714
  %v3762 = vpack.c.b16 %v3717, %v3716
  %v3763 = vpack.c.b16 %v3719, %v3718
  %v3764 = vpack.c.b16 %v3721, %v3720
  %v3765 = vpack.c.b16 %v3723, %v3722
  %v3766 = vpack.c.b16 %v3725, %v3724
  %v3767 = vpack.c.b16 %v3727, %v3726
  %v3768 = vpack.c.b16 %v3729, %v3728
  %v3769 = vpack.c.b16 %v3731, %v3730
  %v3770 = vpack.c.b16 %v3733, %v3732
  %v3771 = vpack.c.b16 %v3735, %v3734
  %v3772 = vpack.c.b16 %v3737, %v3736
  %v3773 = vpack.c.b16 %v3739, %v3738
  %v3774 = vpack.c.b16 %v3741, %v3740
  %v3775 = vpack.c.b16 %v3743, %v3742
  %v3776 = vpack.c.b16 %v3745, %v3744
  %v3777 = vpack.c.b16 %v3747, %v3746
  %v3809 = vsel %vm3494, %v3560, 0
  %3811 = vmatprep.subr.bf16.mxu0 0
  %3812 = vmatpush1.bf16.msra.mxu0 %v3748
  %3813 = vmatprep.subr.bf16.mxu0 0
  %3814 = vmatpush1.bf16.msra.mxu0 %v3749
  %3815 = vmatprep.subr.bf16.mxu0 0
  %3816 = vmatpush1.bf16.msra.mxu0 %v3750
  %3817 = vmatprep.subr.bf16.mxu0 0
  %3818 = vmatpush1.bf16.msra.mxu0 %v3751
  %3819 = vmatprep.subr.bf16.mxu0 0
  %3820 = vmatpush1.bf16.msra.mxu0 %v3752
  %3821 = vmatprep.subr.bf16.mxu0 0
  %3822 = vmatpush1.bf16.msra.mxu0 %v3753
  %3823 = vmatprep.subr.bf16.mxu0 0
  %3824 = vmatpush1.bf16.msra.mxu0 %v3754
  %3825 = vmatprep.subr.bf16.mxu0 0
  %3826 = vmatpush1.bf16.msra.mxu0 %v3755
  %3827 = vmatprep.subr.bf16.mxu0 0
  %3828 = vmatpush1.bf16.msra.mxu0 %v3756
  %3829 = vmatprep.subr.bf16.mxu0 0
  %3830 = vmatpush1.bf16.msra.mxu0 %v3757
  %3831 = vmatprep.subr.bf16.mxu0 0
  %3832 = vmatpush1.bf16.msra.mxu0 %v3758
  %3833 = vmatprep.subr.bf16.mxu0 0
  %3834 = vmatpush1.bf16.msra.mxu0 %v3759
  %3835 = vmatprep.subr.bf16.mxu0 0
  %3836 = vmatpush1.bf16.msra.mxu0 %v3760
  %3837 = vmatprep.subr.bf16.mxu0 0
  %3838 = vmatpush1.bf16.msra.mxu0 %v3761
  %3839 = vmatprep.subr.bf16.mxu0 0
  %3840 = vmatpush1.bf16.msra.mxu0 %v3762
  %3841 = vmatprep.subr.bf16.mxu0 0
  %3842 = vmatpush1.bf16.msra.mxu0 %v3763
  %3843 = vmatprep.mubr.bf16.mxu0 %v3558
  %3844 = vmatmul.mubr.bf16.gmra.mrb[0].mxu0 %v3557
  %v3845 = vpop.f32.mrb[0].mxu0
  %v3846 = vadd.f32 %v3626, %v3845
  %v3847 = vpop.f32.mrb[0].mxu0
  %v3848 = vpop.f32.mrb[0].mxu0
  %v3849 = vpop.f32.mrb[0].mxu0
  %3850 = vdwg.mxu0
  %3851 = vmatprep.subr.bf16.mxu0 0
  %3852 = vmatpush1.bf16.msra.mxu0 %v3764
  %3853 = vmatprep.subr.bf16.mxu0 0
  %3854 = vmatpush1.bf16.msra.mxu0 %v3765
  %3855 = vmatprep.subr.bf16.mxu0 0
  %3856 = vmatpush1.bf16.msra.mxu0 %v3766
  %3857 = vmatprep.subr.bf16.mxu0 0
  %3858 = vmatpush1.bf16.msra.mxu0 %v3767
  %3859 = vmatprep.subr.bf16.mxu0 0
  %3860 = vmatpush1.bf16.msra.mxu0 %v3768
  %3861 = vmatprep.subr.bf16.mxu0 0
  %3862 = vmatpush1.bf16.msra.mxu0 %v3769
  %3863 = vmatprep.subr.bf16.mxu0 0
  %3864 = vmatpush1.bf16.msra.mxu0 %v3770
  %3865 = vmatprep.subr.bf16.mxu0 0
  %3866 = vmatpush1.bf16.msra.mxu0 %v3771
  %3867 = vmatprep.subr.bf16.mxu0 0
  %3868 = vmatpush1.bf16.msra.mxu0 %v3772
  %3869 = vmatprep.subr.bf16.mxu0 0
  %3870 = vmatpush1.bf16.msra.mxu0 %v3773
  %3871 = vmatprep.subr.bf16.mxu0 0
  %3872 = vmatpush1.bf16.msra.mxu0 %v3774
  %3873 = vmatprep.subr.bf16.mxu0 0
  %3874 = vmatpush1.bf16.msra.mxu0 %v3775
  %3875 = vmatprep.subr.bf16.mxu0 0
  %3876 = vmatpush1.bf16.msra.mxu0 %v3776
  %3877 = vmatprep.subr.bf16.mxu0 0
  %3878 = vmatpush1.bf16.msra.mxu0 %v3777
  %3879 = vmatprep.subr.bf16.mxu0 0
  %3880 = vmatpush1.bf16.msra.mxu0 0
  %3881 = vmatprep.subr.bf16.mxu0 0
  %3882 = vmatpush1.bf16.msra.mxu0 0
  %3883 = vmatprep.mubr.bf16.mxu0 %v3809
  %3884 = vmatmul.mubr.bf16.gmra.mrb[0].mxu0 %v3559
  %v3885 = vpop.f32.mrb[0].mxu0
  %v3886 = vadd.f32 %v3846, %v3885
  %v3887 = vpop.f32.mrb[0].mxu0
  %v3888 = vpop.f32.mrb[0].mxu0
  %v3889 = vpop.f32.mrb[0].mxu0
  %3890 = vdwg.mxu0
  %v3891 = vmax.f32 %v3886, 0.0
  %v3892 = vld [vmem:[%s5] sm:$0xff]
  %v3893 = vld [vmem:[%s5 + $0x8] sm:$0xff]
  %v3894 = vld [vmem:[%s5 + $0x10] sm:$0xff]
  %v3895 = vld [vmem:[%s5 + $0x18] sm:$0xff]
  %v3896 = vld [vmem:[%s5 + $0x20] sm:$0xff]
  %v3897 = vld [vmem:[%s5 + $0x28] sm:$0xff]
  %v3898 = vld [vmem:[%s5 + $0x30] sm:$0xff]
  %v3899 = vld [vmem:[%s5 + $0x38] sm:$0xff]
  %v3900 = vld [vmem:[%s6] sm:$0x1]
  %v3902 = vlaneseq
  %v3903 = vshrl.u32 %v3902, 7
  %v3904 = vsub.s32 0, %v3903
  %v3905 = vrot.slane %v3900, %v3904
  %vm3907 = vcmask 523264
  %v3909 = vsel %vm3907, %v3891, 0
  %3911 = vmatprep.subr.mxu0 0.0
  %3912 = vmatpush1.msra.mxu0 %v3892
  %3913 = vmatprep.subr.mxu0 0.0
  %3914 = vmatpush1.msra.mxu0 %v3893
  %3915 = vmatprep.subr.mxu0 0.0
  %3916 = vmatpush1.msra.mxu0 %v3894
  %3917 = vmatprep.subr.mxu0 0.0
  %3918 = vmatpush1.msra.mxu0 %v3895
  %3919 = vmatprep.subr.mxu0 0.0
  %3920 = vmatpush1.msra.mxu0 %v3896
  %3921 = vmatprep.subr.mxu0 0.0
  %3922 = vmatpush1.msra.mxu0 %v3897
  %3923 = vmatprep.subr.mxu0 0.0
  %3924 = vmatpush1.msra.mxu0 %v3898
  %3925 = vmatprep.subr.mxu0 0.0
  %3926 = vmatpush1.msra.mxu0 %v3899
  %3927 = vmatprep.subr.mxu0 0.0
  %3928 = vmatpush1.msra.mxu0 0.0
  %3929 = vmatprep.subr.mxu0 0.0
  %3930 = vmatpush1.msra.mxu0 0.0
  %3931 = vmatprep.subr.mxu0 0.0
  %3932 = vmatpush1.msra.mxu0 0.0
  %3933 = vmatprep.subr.mxu0 0.0
  %3934 = vmatpush1.msra.mxu0 0.0
  %3935 = vmatprep.subr.mxu0 0.0
  %3936 = vmatpush1.msra.mxu0 0.0
  %3937 = vmatprep.subr.mxu0 0.0
  %3938 = vmatpush1.msra.mxu0 0.0
  %3939 = vmatprep.subr.mxu0 0.0
  %3940 = vmatpush1.msra.mxu0 0.0
  %3941 = vmatprep.subr.mxu0 0.0
  %3942 = vmatpush1.msra.mxu0 0.0
  %3943 = vmatprep.subr.mxu0 0.0
  %3944 = vmatpush1.msra.mxu0 0.0
  %3945 = vmatprep.subr.mxu0 0.0
  %3946 = vmatpush1.msra.mxu0 0.0
  %3947 = vmatprep.subr.mxu0 0.0
  %3948 = vmatpush1.msra.mxu0 0.0
  %3949 = vmatprep.subr.mxu0 0.0
  %3950 = vmatpush1.msra.mxu0 0.0
  %3951 = vmatprep.subr.mxu0 0.0
  %3952 = vmatpush1.msra.mxu0 0.0
  %3953 = vmatprep.subr.mxu0 0.0
  %3954 = vmatpush1.msra.mxu0 0.0
  %3955 = vmatprep.subr.mxu0 0.0
  %3956 = vmatpush1.msra.mxu0 0.0
  %3957 = vmatprep.subr.mxu0 0.0
  %3958 = vmatpush1.msra.mxu0 0.0
  %3959 = vmatprep.subr.mxu0 0.0
  %3960 = vmatpush1.msra.mxu0 0.0
  %3961 = vmatprep.subr.mxu0 0.0
  %3962 = vmatpush1.msra.mxu0 0.0
  %3963 = vmatprep.subr.mxu0 0.0
  %3964 = vmatpush1.msra.mxu0 0.0
  %3965 = vmatprep.subr.mxu0 0.0
  %3966 = vmatpush1.msra.mxu0 0.0
  %3967 = vmatprep.subr.mxu0 0.0
  %3968 = vmatpush1.msra.mxu0 0.0
  %3969 = vmatprep.subr.mxu0 0.0
  %3970 = vmatpush1.msra.mxu0 0.0
  %3971 = vmatprep.subr.mxu0 0.0
  %3972 = vmatpush1.msra.mxu0 0.0
  %3973 = vmatprep.subr.mxu0 0.0
  %3974 = vmatpush1.msra.mxu0 0.0
  %3975 = vmatprep.mubr.f32.mxu0 0.0
  %3976 = vmatmul.mubr.f32.gmra.mrb[0].mxu0 %v3909
  %v3977 = vpop.f32.mrb[0].mxu0
  %v3978 = vadd.f32 %v3905, %v3977
  %v3979 = vpop.f32.mrb[0].mxu0
  %3980 = vdwg.mxu0
  %vm3981 = vcmask 11264
  %3982 = vst.msk [vmem:[%s7] sm:$0xf] %vm3981, %v3978
  // Predicated region
  $region30: #{tpu_custom_call.1} parent=0 // pred_check
    _
  $region31: #{tpu_custom_call.1} parent=0 // pred_check_branch
    %3984 = sbr.rel (0) target = $region33
  $region32: #{tpu_custom_call.1} parent=0 // pred_region
    _
  $region33: #{tpu_custom_call.1} parent=0 // pred_fallthru
    _
  // Predicated region
  $region34: #{tpu_custom_call.1} parent=0 // pred_check
    _
  $region35: #{tpu_custom_call.1} parent=0 // pred_check_branch
    %3986 = sbr.rel (0) target = $region37
  $region36: #{tpu_custom_call.1} parent=0 // pred_region
    _
  $region37: #{tpu_custom_call.1} parent=0 // pred_fallthru
    _

</llo_original>
